<compile_context>
chip_gen: v5e
topology: v5e:2x2
jax: 0.10.0
libtpu: 0.0.40
codegen_flags: <defaults>
</compile_context>

<pallas_src>
import math
from functools import partial

import jax
import jax.numpy as jnp
from jax import lax
from jax.experimental import pallas as pl
from jax.experimental.pallas import tpu as pltpu

F32 = jnp.float32
BF16 = jnp.bfloat16

# Scoped-VMEM ceiling: below v7x's 64 MiB/TC physical VMEM (headroom left) and
# above the 16/32 MiB defaults on v5e/v6e so 256/512-wide tiles double-buffer.
VMEM_LIMIT_BYTES = 48 * 1024 * 1024


def _compiler_params(dims):
    return pltpu.CompilerParams(dimension_semantics=dims,
                                vmem_limit_bytes=VMEM_LIMIT_BYTES)


def _block_size(n, preferred):
    """Largest preferred tile dividing n; whole axis if small / indivisible."""
    if n <= preferred[-1]:
        return n
    for c in preferred:
        if n % c == 0:
            return c
    return n


def _row_block(m):          # second-to-last (sublane) axis
    return _block_size(m, (256, 128))


def _col_block(n):          # last (lane) axis
    return _block_size(n, (512, 256, 128))


def _gelu(x):
    # exact GELU (matches torch nn.GELU default): 0.5*x*(1+erf(x/sqrt(2)))
    return 0.5 * x * (1.0 + lax.erf(x * (1.0 / math.sqrt(2.0))))


# --------------------- fused LayerNorm + Linear (+GELU) ---------------------

def _ln_linear_kernel(x_ref, g_ref, beta_ref, w_ref, b_ref, o_ref, *, activation):
    x = x_ref[...]                                           # (bm, D) f32
    mu = jnp.mean(x, axis=-1, keepdims=True)
    var = jnp.mean(jnp.square(x - mu), axis=-1, keepdims=True)
    xn = (x - mu) * lax.rsqrt(var + 1e-5) * g_ref[...] + beta_ref[...]
    y = jnp.dot(xn.astype(BF16), w_ref[...],
                preferred_element_type=F32) + b_ref[...]
    if activation == "gelu":
        y = _gelu(y)
    o_ref[...] = y


def ln_linear(x, g, beta, w_t, b, activation=None):
    """LayerNorm(x) @ w_t + b. x: (..., D); w_t: (D, N) bf16; b: (N,)."""
    lead = x.shape[:-1]
    D = x.shape[-1]
    N = w_t.shape[1]
    M = int(math.prod(lead)) if lead else 1
    bm, bn = _row_block(M), _col_block(N)
    out = pl.pallas_call(
        partial(_ln_linear_kernel, activation=activation),
        out_shape=jax.ShapeDtypeStruct((M, N), F32),
        grid=(M // bm, N // bn),
        in_specs=[pl.BlockSpec((bm, D), lambda i, j: (i, 0)),
                  pl.BlockSpec((1, D), lambda i, j: (0, 0)),
                  pl.BlockSpec((1, D), lambda i, j: (0, 0)),
                  pl.BlockSpec((D, bn), lambda i, j: (0, j)),
                  pl.BlockSpec((1, bn), lambda i, j: (0, j))],
        out_specs=pl.BlockSpec((bm, bn), lambda i, j: (i, j)),
        compiler_params=_compiler_params(("parallel", "parallel")),
    )(x.reshape(M, D), g.reshape(1, D), beta.reshape(1, D), w_t, b.reshape(1, N))
    return out.reshape(*lead, N)


# ----------------- tiled Linear (matmul + bias, K-accumulated) --------------

def _linear_kernel(x_ref, w_ref, b_ref, o_ref, acc_ref, *, activation):
    @pl.when(pl.program_id(2) == 0)
    def _():
        acc_ref[...] = jnp.zeros_like(acc_ref)

    acc_ref[...] += jnp.dot(x_ref[...].astype(BF16), w_ref[...],
                            preferred_element_type=F32)

    @pl.when(pl.program_id(2) == pl.num_programs(2) - 1)
    def _():
        y = acc_ref[...] + b_ref[...]
        if activation == "gelu":
            y = _gelu(y)
        o_ref[...] = y


def linear(x, w_t, b, activation=None):
    """x @ w_t + b. x: (..., K); w_t: (K, N) bf16; b: (N,)."""
    lead = x.shape[:-1]
    K = x.shape[-1]
    N = w_t.shape[1]
    M = int(math.prod(lead)) if lead else 1
    bm, bn, bk = _row_block(M), _col_block(N), _col_block(K)
    out = pl.pallas_call(
        partial(_linear_kernel, activation=activation),
        out_shape=jax.ShapeDtypeStruct((M, N), F32),
        grid=(M // bm, N // bn, K // bk),
        in_specs=[pl.BlockSpec((bm, bk), lambda i, j, k: (i, k)),
                  pl.BlockSpec((bk, bn), lambda i, j, k: (k, j)),
                  pl.BlockSpec((1, bn), lambda i, j, k: (0, j))],
        out_specs=pl.BlockSpec((bm, bn), lambda i, j, k: (i, j)),
        scratch_shapes=[pltpu.VMEM((bm, bn), F32)],
        compiler_params=_compiler_params(("parallel", "parallel", "arbitrary")),
    )(x.reshape(M, K), w_t, b.reshape(1, N))
    return out.reshape(*lead, N)


# ------------------------------ LayerNorm -----------------------------------

def _layernorm_kernel(x_ref, g_ref, b_ref, o_ref):
    x = x_ref[...]
    mu = jnp.mean(x, axis=-1, keepdims=True)
    var = jnp.mean(jnp.square(x - mu), axis=-1, keepdims=True)
    o_ref[...] = (x - mu) * lax.rsqrt(var + 1e-5) * g_ref[...] + b_ref[...]


def layernorm(x, g, b):
    lead = x.shape[:-1]
    D = x.shape[-1]
    M = int(math.prod(lead)) if lead else 1
    bm = _row_block(M)
    out = pl.pallas_call(
        _layernorm_kernel,
        out_shape=jax.ShapeDtypeStruct((M, D), F32),
        grid=(M // bm,),
        in_specs=[pl.BlockSpec((bm, D), lambda i: (i, 0)),
                  pl.BlockSpec((1, D), lambda i: (0, 0)),
                  pl.BlockSpec((1, D), lambda i: (0, 0))],
        out_specs=pl.BlockSpec((bm, D), lambda i: (i, 0)),
        compiler_params=_compiler_params(("parallel",)),
    )(x.reshape(M, D), g.reshape(1, D), b.reshape(1, D))
    return out.reshape(*lead, D)


# ------- fused multi-head attention core (all heads per batch row-block) ----

def _attn_kernel(*refs, heads, scale, has_bias, has_mask):
    q_ref, k_ref, v_ref = refs[0], refs[1], refs[2]
    idx = 3
    bias_ref = None
    mask_ref = None
    if has_bias:
        bias_ref = refs[idx]
        idx += 1
    if has_mask:
        mask_ref = refs[idx]
        idx += 1
    o_ref = refs[idx]

    q = q_ref[0]                                   # (bi, dim) f32
    k = k_ref[0]                                   # (J, dim)
    v = v_ref[0]                                   # (J, dim)
    dim = q.shape[-1]
    d = dim // heads
    neg = -jnp.finfo(F32).max
    valid = (mask_ref[0] > 0.5) if has_mask else None    # (bi, J), shared by heads

    outs = []
    for h in range(heads):                         # static unroll over heads
        sl = slice(h * d, (h + 1) * d)
        qh = q[:, sl].astype(BF16)
        kh = k[:, sl].astype(BF16)
        vh = v[:, sl].astype(BF16)
        dots = lax.dot_general(qh, kh, (((1,), (1,)), ((), ())),
                               preferred_element_type=F32) * scale      # (bi, J)
        if has_bias:
            dots = dots + bias_ref[h]
        if has_mask:                               # bias first, then mask (as in ref)
            dots = jnp.where(valid, dots, neg)
        dots = dots - jnp.max(dots, axis=-1, keepdims=True)
        e = jnp.exp(dots)
        inv = pl.reciprocal(jnp.sum(e, axis=-1, keepdims=True), approx=True)
        attn = (e * inv).astype(BF16)
        outs.append(jnp.dot(attn, vh, preferred_element_type=F32))
    # lane-dense (bi, heads*d) output store
    o_ref[0] = jnp.concatenate(outs, axis=-1)


def attention_core(q, k, v, *, heads, scale, pos_bias=None, mask=None):
    """q: (B, I, dim); k, v: (B, J, dim); pos_bias: (heads, I, J); mask: (B, I, J)."""
    B, I, dim = q.shape
    J = k.shape[1]
    bi = _row_block(I)
    in_specs = [pl.BlockSpec((1, bi, dim), lambda b, i: (b, i, 0)),
                pl.BlockSpec((1, J, dim), lambda b, i: (b, 0, 0)),
                pl.BlockSpec((1, J, dim), lambda b, i: (b, 0, 0))]
    args = [q, k, v]
    if pos_bias is not None:
        in_specs.append(pl.BlockSpec((heads, bi, J), lambda b, i: (0, i, 0)))
        args.append(pos_bias)
    if mask is not None:
        in_specs.append(pl.BlockSpec((1, bi, J), lambda b, i: (b, i, 0)))
        args.append(mask)
    return pl.pallas_call(
        partial(_attn_kernel, heads=heads, scale=scale,
                has_bias=pos_bias is not None, has_mask=mask is not None),
        out_shape=jax.ShapeDtypeStruct((B, I, dim), F32),
        grid=(B, I // bi),
        in_specs=in_specs,
        out_specs=pl.BlockSpec((1, bi, dim), lambda b, i: (b, i, 0)),
        compiler_params=_compiler_params(("parallel", "parallel")),
    )(*args)


# --------------------------- fused GRUCell update ---------------------------

def _gru_kernel(x_ref, h_ref, wih_ref, whh_ref, bih_ref, bhh_ref, o_ref):
    x = x_ref[...]
    h = h_ref[...]
    D = h.shape[-1]
    gi = jnp.dot(x.astype(BF16), wih_ref[...], preferred_element_type=F32) + bih_ref[...]
    gh = jnp.dot(h.astype(BF16), whh_ref[...], preferred_element_type=F32) + bhh_ref[...]
    r = jax.nn.sigmoid(gi[:, 0:D] + gh[:, 0:D])
    z = jax.nn.sigmoid(gi[:, D:2 * D] + gh[:, D:2 * D])
    n = jnp.tanh(gi[:, 2 * D:] + r * gh[:, 2 * D:])
    o_ref[...] = (1.0 - z) * n + z * h


def gru_cell(x, h, gp):
    """x, h: (M, D) f32; gp['wih_t'/'whh_t']: (D, 3D) bf16; biases (3D,)."""
    M, D = x.shape
    bm = _row_block(M)
    return pl.pallas_call(
        _gru_kernel,
        out_shape=jax.ShapeDtypeStruct((M, D), F32),
        grid=(M // bm,),
        in_specs=[pl.BlockSpec((bm, D), lambda i: (i, 0)),
                  pl.BlockSpec((bm, D), lambda i: (i, 0)),
                  pl.BlockSpec((D, 3 * D), lambda i: (0, 0)),
                  pl.BlockSpec((D, 3 * D), lambda i: (0, 0)),
                  pl.BlockSpec((1, 3 * D), lambda i: (0, 0)),
                  pl.BlockSpec((1, 3 * D), lambda i: (0, 0))],
        out_specs=pl.BlockSpec((bm, D), lambda i: (i, 0)),
        compiler_params=_compiler_params(("parallel",)),
    )(x, h, gp['wih_t'], gp['whh_t'],
      gp['bih'].reshape(1, 3 * D), gp['bhh'].reshape(1, 3 * D))


# ------------------------------ model glue --------------------------------

def relative_position_bias(emb_weight, qlen, klen, num_buckets=32, max_distance=128):
    """Relative position bias -> (heads, qlen, klen).

    Matches the source module's non-causal branch exactly:
    n = max(-rel_pos, 0) (no bucket halving / sign offset for causal=False)."""
    q_pos = jnp.arange(qlen)
    k_pos = jnp.arange(klen)
    rel_pos = k_pos[None, :] - q_pos[:, None]
    n = jnp.maximum(-rel_pos, 0)
    max_exact = num_buckets // 2
    is_small = n < max_exact
    safe_n = jnp.maximum(n, 1).astype(F32)
    val_if_large = max_exact + (
        jnp.log(safe_n / max_exact) / math.log(max_distance / max_exact)
        * (num_buckets - max_exact)
    ).astype(jnp.int32)
    val_if_large = jnp.minimum(val_if_large, num_buckets - 1)
    buckets = jnp.where(is_small, n, val_if_large)
    values = emb_weight[buckets]                 # (q, k, heads)
    return jnp.transpose(values, (2, 0, 1))      # (heads, q, k)


def memformer_forward(params, src, heads, num_mem_updates=1):
    """Encoder-only Memformer forward: returns (enc_out, mems)."""
    b, n = src.shape
    dim = params['token_emb'].shape[1]
    num_mem = params['memory_slots'].shape[0]
    scale = (dim // heads) ** -0.5

    mems = jnp.broadcast_to(params['memory_slots'][None], (b, num_mem, dim))

    # ----- encoder (TransformerWrapper + Encoder) -----
    x = params['token_emb'][src]                                      # (b, n, dim)
    pos_bias = relative_position_bias(params['rel_bias_emb'], n, n)   # (heads, n, n)

    for lp in params['enc_layers']:
        # self-attention: Residual(PreNorm(Attention(rel_pos))); LN fused with QKV proj
        sa = lp['sa']
        qkv = ln_linear(x, lp['sa_ln']['g'], lp['sa_ln']['b'], sa['wqkv_t'], sa['bqkv'])
        q, k, v = qkv[..., :dim], qkv[..., dim:2 * dim], qkv[..., 2 * dim:]
        o = attention_core(q, k, v, heads=heads, scale=scale, pos_bias=pos_bias)
        x = x + linear(o, sa['wo_t'], sa['bo'])

        # cross-attention to memory slots (PreNorm applies to x only)
        ca = lp['ca']
        q = ln_linear(x, lp['ca_ln']['g'], lp['ca_ln']['b'], ca['wq_t'], ca['bq'])
        kv = linear(mems, ca['wkv_t'], ca['bkv'])
        k, v = kv[..., :dim], kv[..., dim:]
        o = attention_core(q, k, v, heads=heads, scale=scale)
        x = x + linear(o, ca['wo_t'], ca['bo'])

        # feedforward: Residual(PreNorm(Linear->GELU->Linear)); LN+W1+GELU fused
        ff = lp['ff']
        hmid = ln_linear(x, lp['ff_ln']['g'], lp['ff_ln']['b'],
                         ff['w1_t'], ff['b1'], activation="gelu")
        x = x + linear(hmid, ff['w2_t'], ff['b2'])

    enc = layernorm(x, params['enc_norm']['g'], params['enc_norm']['b'])

    # ----- memory update -----
    eye = jnp.eye(num_mem, dtype=F32)
    mem_mask = jnp.concatenate(
        [jnp.broadcast_to(eye[None], (b, num_mem, num_mem)),
         jnp.ones((b, num_mem, n), F32)], axis=-1)                    # (b, m, m+n)

    mu = params['mem_updater']
    for _ in range(num_mem_updates):
        prev_mems = mems
        kv_input = jnp.concatenate([mems, enc], axis=1)               # attend_self=True
        q = linear(mems, mu['wq_t'], mu['bq'])
        kv = linear(kv_input, mu['wkv_t'], mu['bkv'])
        k, v = kv[..., :dim], kv[..., dim:]
        o = attention_core(q, k, v, heads=heads, scale=scale, mask=mem_mask)
        updated = linear(o, mu['wo_t'], mu['bo'])
        nxt = gru_cell(updated.reshape(b * num_mem, dim),
                       prev_mems.reshape(b * num_mem, dim), params['gru'])
        mems = nxt.reshape(b, num_mem, dim)
        hmid = ln_linear(mems, params['mem_ff_ln']['g'], params['mem_ff_ln']['b'],
                         params['mem_ff']['w1_t'], params['mem_ff']['b1'],
                         activation="gelu")
        mems = mems + linear(hmid, params['mem_ff']['w2_t'], params['mem_ff']['b2'])

    # TODO(synk): decoder branch (AutoregressiveWrapper) is not defined in the
    # source module; this implements the encoder_only=True configuration.
    return enc, mems


# ------------------------------ params init -------------------------------

def init_params(key, *, dim, heads, depth, num_tokens, num_mem, ff_mult=4,
                num_buckets=32):
    keys = iter(jax.random.split(key, 256))

    def nrm(shape, scale=0.02):
        return jax.random.normal(next(keys), shape, F32) * scale

    def attn_p():
        return dict(wq=nrm((dim, dim)), bq=jnp.zeros((dim,), F32),
                    wkv=nrm((2 * dim, dim)), bkv=jnp.zeros((2 * dim,), F32),
                    wo=nrm((dim, dim)), bo=jnp.zeros((dim,), F32))

    def ff_p():
        return dict(w1=nrm((dim * ff_mult, dim)), b1=jnp.zeros((dim * ff_mult,), F32),
                    w2=nrm((dim, dim * ff_mult)), b2=jnp.zeros((dim,), F32))

    def ln_p():
        return dict(g=jnp.ones((dim,), F32), b=jnp.zeros((dim,), F32))

    layers = [dict(sa_ln=ln_p(), sa=attn_p(),
                   ca_ln=ln_p(), ca=attn_p(),
                   ff_ln=ln_p(), ff=ff_p()) for _ in range(depth)]

    return dict(
        token_emb=nrm((num_tokens, dim), 1.0),
        rel_bias_emb=nrm((num_buckets, heads), 1.0),
        enc_layers=layers,
        enc_norm=ln_p(),
        memory_slots=nrm((num_mem, dim), 1.0),
        mem_updater=attn_p(),
        gru=dict(wih=nrm((3 * dim, dim)), whh=nrm((3 * dim, dim)),
                 bih=jnp.zeros((3 * dim,), F32), bhh=jnp.zeros((3 * dim,), F32)),
        mem_ff_ln=ln_p(),
        mem_ff=ff_p(),
    )


def pack_params(p):
    """One-time weight packing: transpose to (K, N), concat fused QKV, bf16 weights."""
    def attn_self(a):
        wqkv = jnp.concatenate([a['wq'], a['wkv']], axis=0)          # (3D, D)
        return dict(wqkv_t=wqkv.T.astype(BF16),
                    bqkv=jnp.concatenate([a['bq'], a['bkv']]).astype(F32),
                    wo_t=a['wo'].T.astype(BF16), bo=a['bo'].astype(F32))

    def attn_cross(a):
        return dict(wq_t=a['wq'].T.astype(BF16), bq=a['bq'].astype(F32),
                    wkv_t=a['wkv'].T.astype(BF16), bkv=a['bkv'].astype(F32),
                    wo_t=a['wo'].T.astype(BF16), bo=a['bo'].astype(F32))

    def ff(f):
        return dict(w1_t=f['w1'].T.astype(BF16), b1=f['b1'].astype(F32),
                    w2_t=f['w2'].T.astype(BF16), b2=f['b2'].astype(F32))

    layers = [dict(sa_ln=lp['sa_ln'], sa=attn_self(lp['sa']),
                   ca_ln=lp['ca_ln'], ca=attn_cross(lp['ca']),
                   ff_ln=lp['ff_ln'], ff=ff(lp['ff']))
              for lp in p['enc_layers']]

    g = p['gru']
    return dict(
        token_emb=p['token_emb'].astype(F32),
        rel_bias_emb=p['rel_bias_emb'].astype(F32),
        enc_layers=layers,
        enc_norm=p['enc_norm'],
        memory_slots=p['memory_slots'].astype(F32),
        mem_updater=attn_cross(p['mem_updater']),
        gru=dict(wih_t=g['wih'].T.astype(BF16), whh_t=g['whh'].T.astype(BF16),
                 bih=g['bih'].astype(F32), bhh=g['bhh'].astype(F32)),
        mem_ff_ln=p['mem_ff_ln'],
        mem_ff=ff(p['mem_ff']),
    )


# --------------------------------- main ------------------------------------

if __name__ == "__main__":
    dim = 32
    heads = 4
    depth = 2
    num_tokens = 64
    num_mem = 4
    batch = 2
    seq = 8

    key = jax.random.PRNGKey(0)
    pkey, skey = jax.random.split(key)
    raw_params = init_params(pkey, dim=dim, heads=heads, depth=depth,
                             num_tokens=num_tokens, num_mem=num_mem)
    params = pack_params(raw_params)   # one-time transpose / bf16 pack
    src = jax.random.randint(skey, (batch, seq), 0, num_tokens, dtype=jnp.int32)

    fwd = jax.jit(partial(memformer_forward, heads=heads, num_mem_updates=1))
    enc_out, mems = fwd(params, src)
    jax.block_until_ready(enc_out)
    jax.block_until_ready(mems)

    assert enc_out.shape == (batch, seq, dim)
    assert mems.shape == (batch, num_mem, dim)
    print("KERNEL_OK")
</pallas_src>

<mosaic_0001>
module attributes {stable_mosaic.version = 11 : i64} {
  func.func @_ln_linear_kernel(%arg0: i32, %arg1: i32, %arg2: memref<16x32xf32, #tpu.memory_space<vmem>>, %arg3: memref<1x32xf32, #tpu.memory_space<vmem>>, %arg4: memref<1x32xf32, #tpu.memory_space<vmem>>, %arg5: memref<32x96xbf16, #tpu.memory_space<vmem>>, %arg6: memref<1x96xf32, #tpu.memory_space<vmem>>, %arg7: memref<16x96xf32, #tpu.memory_space<vmem>>) attributes {dimension_semantics = [#tpu.dimension_semantics<parallel>, #tpu.dimension_semantics<parallel>], iteration_bounds = array<i64: 1, 1>, scalar_prefetch = 0 : i64, scratch_operands = 0 : i64, tpu.core_type = #tpu.core_type<tc>, window_params = [{transform_indices = @transform_0, window_bounds = array<i64: 16, 32>}, {pipeline_mode = #tpu.pipeline_mode<synchronous>, transform_indices = @transform_1, window_bounds = array<i64: 1, 32>}, {pipeline_mode = #tpu.pipeline_mode<synchronous>, transform_indices = @transform_2, window_bounds = array<i64: 1, 32>}, {transform_indices = @transform_3, window_bounds = array<i64: 32, 96>}, {transform_indices = @transform_4, window_bounds = array<i64: 1, 96>}, {transform_indices = @transform_5, window_bounds = array<i64: 16, 96>}]} {
    %c0 = arith.constant 0 : index
    %c0_0 = arith.constant 0 : index
    %0 = vector.load %arg2[%c0, %c0_0] : memref<16x32xf32, #tpu.memory_space<vmem>>, vector<16x32xf32>
    %cst = arith.constant dense<0.000000e+00> : vector<16xf32>
    %1 = vector.multi_reduction <add>, %0, %cst [1] : vector<16x32xf32> to vector<16xf32>
    %2 = vector.shape_cast %1 : vector<16xf32> to vector<16x1xf32>
    %cst_1 = arith.constant 3.200000e+01 : f32
    %3 = vector.broadcast %cst_1 : f32 to vector<16x1xf32>
    %4 = arith.divf %2, %3 : vector<16x1xf32>
    %5 = vector.broadcast %4 : vector<16x1xf32> to vector<16x32xf32>
    %6 = arith.subf %0, %5 : vector<16x32xf32>
    %7 = arith.mulf %6, %6 : vector<16x32xf32>
    %cst_2 = arith.constant dense<0.000000e+00> : vector<16xf32>
    %8 = vector.multi_reduction <add>, %7, %cst_2 [1] : vector<16x32xf32> to vector<16xf32>
    %9 = vector.shape_cast %8 : vector<16xf32> to vector<16x1xf32>
    %cst_3 = arith.constant 3.200000e+01 : f32
    %10 = vector.broadcast %cst_3 : f32 to vector<16x1xf32>
    %11 = arith.divf %9, %10 : vector<16x1xf32>
    %12 = vector.broadcast %4 : vector<16x1xf32> to vector<16x32xf32>
    %13 = arith.subf %0, %12 : vector<16x32xf32>
    %cst_4 = arith.constant 9.99999974E-6 : f32
    %14 = vector.broadcast %cst_4 : f32 to vector<16x1xf32>
    %15 = arith.addf %11, %14 : vector<16x1xf32>
    %16 = math.rsqrt %15 : vector<16x1xf32>
    %17 = vector.broadcast %16 : vector<16x1xf32> to vector<16x32xf32>
    %18 = arith.mulf %13, %17 : vector<16x32xf32>
    %c0_5 = arith.constant 0 : index
    %c0_6 = arith.constant 0 : index
    %19 = vector.load %arg3[%c0_5, %c0_6] : memref<1x32xf32, #tpu.memory_space<vmem>>, vector<1x32xf32>
    %20 = vector.broadcast %19 : vector<1x32xf32> to vector<16x32xf32>
    %21 = arith.mulf %18, %20 : vector<16x32xf32>
    %c0_7 = arith.constant 0 : index
    %c0_8 = arith.constant 0 : index
    %22 = vector.load %arg4[%c0_7, %c0_8] : memref<1x32xf32, #tpu.memory_space<vmem>>, vector<1x32xf32>
    %23 = vector.broadcast %22 : vector<1x32xf32> to vector<16x32xf32>
    %24 = arith.addf %21, %23 : vector<16x32xf32>
    %25 = arith.truncf %24 : vector<16x32xf32> to vector<16x32xbf16>
    %c0_9 = arith.constant 0 : index
    %c0_10 = arith.constant 0 : index
    %26 = vector.load %arg5[%c0_9, %c0_10] : memref<32x96xbf16, #tpu.memory_space<vmem>>, vector<32x96xbf16>
    %cst_11 = arith.constant dense<0.000000e+00> : vector<16x96xf32>
    %27 = tpu.matmul %25, %26, %cst_11 {dimension_numbers = #tpu.dot_dimension_numbers<[1], [0], [0], [1], [0, 0, 1, 1], [], []>} : vector<16x32xbf16>, vector<32x96xbf16>, vector<16x96xf32> -> vector<16x96xf32>
    %c0_12 = arith.constant 0 : index
    %c0_13 = arith.constant 0 : index
    %28 = vector.load %arg6[%c0_12, %c0_13] : memref<1x96xf32, #tpu.memory_space<vmem>>, vector<1x96xf32>
    %29 = vector.broadcast %28 : vector<1x96xf32> to vector<16x96xf32>
    %30 = arith.addf %27, %29 : vector<16x96xf32>
    %c0_14 = arith.constant 0 : index
    %c0_15 = arith.constant 0 : index
    %31 = vector.load %arg7[%c0_14, %c0_15] : memref<16x96xf32, #tpu.memory_space<vmem>>, vector<16x96xf32>
    tpu.vector_store %arg7[%c0_14, %c0_15], %30 {strides = array<i32>} : memref<16x96xf32, #tpu.memory_space<vmem>>, vector<16x96xf32>,
    return
  }
  func.func @transform_0(%arg0: i32, %arg1: i32) -> (i32, i32) {
    %c0_i32 = arith.constant 0 : i32
    %c0_i32_0 = arith.constant 0 : i32
    return %arg0, %c0_i32 : i32, i32
  }
  func.func @transform_1(%arg0: i32, %arg1: i32) -> (i32, i32) {
    %c0_i32 = arith.constant 0 : i32
    %c0_i32_0 = arith.constant 0 : i32
    %c0_i32_1 = arith.constant 0 : i32
    return %c0_i32, %c0_i32_0 : i32, i32
  }
  func.func @transform_2(%arg0: i32, %arg1: i32) -> (i32, i32) {
    %c0_i32 = arith.constant 0 : i32
    %c0_i32_0 = arith.constant 0 : i32
    %c0_i32_1 = arith.constant 0 : i32
    return %c0_i32, %c0_i32_0 : i32, i32
  }
  func.func @transform_3(%arg0: i32, %arg1: i32) -> (i32, i32) {
    %c0_i32 = arith.constant 0 : i32
    %c0_i32_0 = arith.constant 0 : i32
    return %c0_i32, %arg1 : i32, i32
  }
  func.func @transform_4(%arg0: i32, %arg1: i32) -> (i32, i32) {
    %c0_i32 = arith.constant 0 : i32
    %c0_i32_0 = arith.constant 0 : i32
    return %c0_i32, %arg1 : i32, i32
  }
  func.func @transform_5(%arg0: i32, %arg1: i32) -> (i32, i32) {
    %c0_i32 = arith.constant 0 : i32
    return %arg0, %arg1 : i32, i32
  }
}

module attributes {stable_mosaic.version = 11 : i64} {
  func.func @_attn_kernel(%arg0: i32, %arg1: i32, %arg2: memref<1x8x32xf32, #tpu.memory_space<vmem>>, %arg3: memref<1x8x32xf32, #tpu.memory_space<vmem>>, %arg4: memref<1x8x32xf32, #tpu.memory_space<vmem>>, %arg5: memref<4x8x8xf32, #tpu.memory_space<vmem>>, %arg6: memref<1x8x32xf32, #tpu.memory_space<vmem>>) attributes {dimension_semantics = [#tpu.dimension_semantics<parallel>, #tpu.dimension_semantics<parallel>], iteration_bounds = array<i64: 2, 1>, scalar_prefetch = 0 : i64, scratch_operands = 0 : i64, tpu.core_type = #tpu.core_type<tc>, window_params = [{transform_indices = @transform_0, window_bounds = array<i64: 1, 8, 32>}, {transform_indices = @transform_1, window_bounds = array<i64: 1, 8, 32>}, {transform_indices = @transform_2, window_bounds = array<i64: 1, 8, 32>}, {transform_indices = @transform_3, window_bounds = array<i64: 4, 8, 8>}, {transform_indices = @transform_4, window_bounds = array<i64: 1, 8, 32>}]} {
    %c0 = arith.constant 0 : index
    %c0_0 = arith.constant 0 : index
    %c0_1 = arith.constant 0 : index
    %0 = vector.load %arg2[%c0, %c0_0, %c0_1] : memref<1x8x32xf32, #tpu.memory_space<vmem>>, vector<1x8x32xf32>
    %1 = vector.shape_cast %0 : vector<1x8x32xf32> to vector<8x32xf32>
    %c0_2 = arith.constant 0 : index
    %c0_3 = arith.constant 0 : index
    %c0_4 = arith.constant 0 : index
    %2 = vector.load %arg3[%c0_2, %c0_3, %c0_4] : memref<1x8x32xf32, #tpu.memory_space<vmem>>, vector<1x8x32xf32>
    %3 = vector.shape_cast %2 : vector<1x8x32xf32> to vector<8x32xf32>
    %c0_5 = arith.constant 0 : index
    %c0_6 = arith.constant 0 : index
    %c0_7 = arith.constant 0 : index
    %4 = vector.load %arg4[%c0_5, %c0_6, %c0_7] : memref<1x8x32xf32, #tpu.memory_space<vmem>>, vector<1x8x32xf32>
    %5 = vector.shape_cast %4 : vector<1x8x32xf32> to vector<8x32xf32>
    %6 = vector.extract_strided_slice %1 {offsets = [0, 0], sizes = [8, 8], strides = [1, 1]} : vector<8x32xf32> to vector<8x8xf32>
    %7 = arith.truncf %6 : vector<8x8xf32> to vector<8x8xbf16>
    %8 = vector.extract_strided_slice %3 {offsets = [0, 0], sizes = [8, 8], strides = [1, 1]} : vector<8x32xf32> to vector<8x8xf32>
    %9 = arith.truncf %8 : vector<8x8xf32> to vector<8x8xbf16>
    %10 = vector.extract_strided_slice %5 {offsets = [0, 0], sizes = [8, 8], strides = [1, 1]} : vector<8x32xf32> to vector<8x8xf32>
    %11 = arith.truncf %10 : vector<8x8xf32> to vector<8x8xbf16>
    %cst = arith.constant dense<0.000000e+00> : vector<8x8xf32>
    %12 = tpu.matmul %7, %9, %cst {dimension_numbers = #tpu.dot_dimension_numbers<[1], [1], [0], [0], [0, 0, 1, 0], [], []>} : vector<8x8xbf16>, vector<8x8xbf16>, vector<8x8xf32> -> vector<8x8xf32>
    %cst_8 = arith.constant 0.353553385 : f32
    %13 = vector.broadcast %cst_8 : f32 to vector<8x8xf32>
    %14 = arith.mulf %12, %13 : vector<8x8xf32>
    %c0_9 = arith.constant 0 : index
    %c0_10 = arith.constant 0 : index
    %c0_11 = arith.constant 0 : index
    %15 = vector.load %arg5[%c0_9, %c0_10, %c0_11] : memref<4x8x8xf32, #tpu.memory_space<vmem>>, vector<1x8x8xf32>
    %16 = vector.shape_cast %15 : vector<1x8x8xf32> to vector<8x8xf32>
    %17 = arith.addf %14, %16 : vector<8x8xf32>
    %cst_12 = arith.constant dense<0xFF800000> : vector<8xf32>
    %18 = vector.multi_reduction <maximumf>, %17, %cst_12 [1] : vector<8x8xf32> to vector<8xf32>
    %19 = vector.shape_cast %18 : vector<8xf32> to vector<8x1xf32>
    %20 = vector.broadcast %19 : vector<8x1xf32> to vector<8x8xf32>
    %21 = arith.subf %17, %20 : vector<8x8xf32>
    %22 = math.exp %21 : vector<8x8xf32>
    %cst_13 = arith.constant dense<0.000000e+00> : vector<8xf32>
    %23 = vector.multi_reduction <add>, %22, %cst_13 [1] : vector<8x8xf32> to vector<8xf32>
    %24 = vector.shape_cast %23 : vector<8xf32> to vector<8x1xf32>
    %25 = tpu.reciprocal %24 {approx = true} : vector<8x1xf32> -> vector<8x1xf32>
    %26 = vector.broadcast %25 : vector<8x1xf32> to vector<8x8xf32>
    %27 = arith.mulf %22, %26 : vector<8x8xf32>
    %28 = arith.truncf %27 : vector<8x8xf32> to vector<8x8xbf16>
    %cst_14 = arith.constant dense<0.000000e+00> : vector<8x8xf32>
    %29 = tpu.matmul %28, %11, %cst_14 {dimension_numbers = #tpu.dot_dimension_numbers<[1], [0], [0], [1], [0, 0, 1, 1], [], []>} : vector<8x8xbf16>, vector<8x8xbf16>, vector<8x8xf32> -> vector<8x8xf32>
    %30 = vector.extract_strided_slice %1 {offsets = [0, 8], sizes = [8, 8], strides = [1, 1]} : vector<8x32xf32> to vector<8x8xf32>
    %31 = arith.truncf %30 : vector<8x8xf32> to vector<8x8xbf16>
    %32 = vector.extract_strided_slice %3 {offsets = [0, 8], sizes = [8, 8], strides = [1, 1]} : vector<8x32xf32> to vector<8x8xf32>
    %33 = arith.truncf %32 : vector<8x8xf32> to vector<8x8xbf16>
    %34 = vector.extract_strided_slice %5 {offsets = [0, 8], sizes = [8, 8], strides = [1, 1]} : vector<8x32xf32> to vector<8x8xf32>
    %35 = arith.truncf %34 : vector<8x8xf32> to vector<8x8xbf16>
    %cst_15 = arith.constant dense<0.000000e+00> : vector<8x8xf32>
    %36 = tpu.matmul %31, %33, %cst_15 {dimension_numbers = #tpu.dot_dimension_numbers<[1], [1], [0], [0], [0, 0, 1, 0], [], []>} : vector<8x8xbf16>, vector<8x8xbf16>, vector<8x8xf32> -> vector<8x8xf32>
    %cst_16 = arith.constant 0.353553385 : f32
    %37 = vector.broadcast %cst_16 : f32 to vector<8x8xf32>
    %38 = arith.mulf %36, %37 : vector<8x8xf32>
    %c1 = arith.constant 1 : index
    %c0_17 = arith.constant 0 : index
    %c0_18 = arith.constant 0 : index
    %39 = vector.load %arg5[%c1, %c0_17, %c0_18] : memref<4x8x8xf32, #tpu.memory_space<vmem>>, vector<1x8x8xf32>
    %40 = vector.shape_cast %39 : vector<1x8x8xf32> to vector<8x8xf32>
    %41 = arith.addf %38, %40 : vector<8x8xf32>
    %cst_19 = arith.constant dense<0xFF800000> : vector<8xf32>
    %42 = vector.multi_reduction <maximumf>, %41, %cst_19 [1] : vector<8x8xf32> to vector<8xf32>
    %43 = vector.shape_cast %42 : vector<8xf32> to vector<8x1xf32>
    %44 = vector.broadcast %43 : vector<8x1xf32> to vector<8x8xf32>
    %45 = arith.subf %41, %44 : vector<8x8xf32>
    %46 = math.exp %45 : vector<8x8xf32>
    %cst_20 = arith.constant dense<0.000000e+00> : vector<8xf32>
    %47 = vector.multi_reduction <add>, %46, %cst_20 [1] : vector<8x8xf32> to vector<8xf32>
    %48 = vector.shape_cast %47 : vector<8xf32> to vector<8x1xf32>
    %49 = tpu.reciprocal %48 {approx = true} : vector<8x1xf32> -> vector<8x1xf32>
    %50 = vector.broadcast %49 : vector<8x1xf32> to vector<8x8xf32>
    %51 = arith.mulf %46, %50 : vector<8x8xf32>
    %52 = arith.truncf %51 : vector<8x8xf32> to vector<8x8xbf16>
    %cst_21 = arith.constant dense<0.000000e+00> : vector<8x8xf32>
    %53 = tpu.matmul %52, %35, %cst_21 {dimension_numbers = #tpu.dot_dimension_numbers<[1], [0], [0], [1], [0, 0, 1, 1], [], []>} : vector<8x8xbf16>, vector<8x8xbf16>, vector<8x8xf32> -> vector<8x8xf32>
    %54 = vector.extract_strided_slice %1 {offsets = [0, 16], sizes = [8, 8], strides = [1, 1]} : vector<8x32xf32> to vector<8x8xf32>
    %55 = arith.truncf %54 : vector<8x8xf32> to vector<8x8xbf16>
    %56 = vector.extract_strided_slice %3 {offsets = [0, 16], sizes = [8, 8], strides = [1, 1]} : vector<8x32xf32> to vector<8x8xf32>
    %57 = arith.truncf %56 : vector<8x8xf32> to vector<8x8xbf16>
    %58 = vector.extract_strided_slice %5 {offsets = [0, 16], sizes = [8, 8], strides = [1, 1]} : vector<8x32xf32> to vector<8x8xf32>
    %59 = arith.truncf %58 : vector<8x8xf32> to vector<8x8xbf16>
    %cst_22 = arith.constant dense<0.000000e+00> : vector<8x8xf32>
    %60 = tpu.matmul %55, %57, %cst_22 {dimension_numbers = #tpu.dot_dimension_numbers<[1], [1], [0], [0], [0, 0, 1, 0], [], []>} : vector<8x8xbf16>, vector<8x8xbf16>, vector<8x8xf32> -> vector<8x8xf32>
    %cst_23 = arith.constant 0.353553385 : f32
    %61 = vector.broadcast %cst_23 : f32 to vector<8x8xf32>
    %62 = arith.mulf %60, %61 : vector<8x8xf32>
    %c2 = arith.constant 2 : index
    %c0_24 = arith.constant 0 : index
    %c0_25 = arith.constant 0 : index
    %63 = vector.load %arg5[%c2, %c0_24, %c0_25] : memref<4x8x8xf32, #tpu.memory_space<vmem>>, vector<1x8x8xf32>
    %64 = vector.shape_cast %63 : vector<1x8x8xf32> to vector<8x8xf32>
    %65 = arith.addf %62, %64 : vector<8x8xf32>
    %cst_26 = arith.constant dense<0xFF800000> : vector<8xf32>
    %66 = vector.multi_reduction <maximumf>, %65, %cst_26 [1] : vector<8x8xf32> to vector<8xf32>
    %67 = vector.shape_cast %66 : vector<8xf32> to vector<8x1xf32>
    %68 = vector.broadcast %67 : vector<8x1xf32> to vector<8x8xf32>
    %69 = arith.subf %65, %68 : vector<8x8xf32>
    %70 = math.exp %69 : vector<8x8xf32>
    %cst_27 = arith.constant dense<0.000000e+00> : vector<8xf32>
    %71 = vector.multi_reduction <add>, %70, %cst_27 [1] : vector<8x8xf32> to vector<8xf32>
    %72 = vector.shape_cast %71 : vector<8xf32> to vector<8x1xf32>
    %73 = tpu.reciprocal %72 {approx = true} : vector<8x1xf32> -> vector<8x1xf32>
    %74 = vector.broadcast %73 : vector<8x1xf32> to vector<8x8xf32>
    %75 = arith.mulf %70, %74 : vector<8x8xf32>
    %76 = arith.truncf %75 : vector<8x8xf32> to vector<8x8xbf16>
    %cst_28 = arith.constant dense<0.000000e+00> : vector<8x8xf32>
    %77 = tpu.matmul %76, %59, %cst_28 {dimension_numbers = #tpu.dot_dimension_numbers<[1], [0], [0], [1], [0, 0, 1, 1], [], []>} : vector<8x8xbf16>, vector<8x8xbf16>, vector<8x8xf32> -> vector<8x8xf32>
    %78 = vector.extract_strided_slice %1 {offsets = [0, 24], sizes = [8, 8], strides = [1, 1]} : vector<8x32xf32> to vector<8x8xf32>
    %79 = arith.truncf %78 : vector<8x8xf32> to vector<8x8xbf16>
    %80 = vector.extract_strided_slice %3 {offsets = [0, 24], sizes = [8, 8], strides = [1, 1]} : vector<8x32xf32> to vector<8x8xf32>
    %81 = arith.truncf %80 : vector<8x8xf32> to vector<8x8xbf16>
    %82 = vector.extract_strided_slice %5 {offsets = [0, 24], sizes = [8, 8], strides = [1, 1]} : vector<8x32xf32> to vector<8x8xf32>
    %83 = arith.truncf %82 : vector<8x8xf32> to vector<8x8xbf16>
    %cst_29 = arith.constant dense<0.000000e+00> : vector<8x8xf32>
    %84 = tpu.matmul %79, %81, %cst_29 {dimension_numbers = #tpu.dot_dimension_numbers<[1], [1], [0], [0], [0, 0, 1, 0], [], []>} : vector<8x8xbf16>, vector<8x8xbf16>, vector<8x8xf32> -> vector<8x8xf32>
    %cst_30 = arith.constant 0.353553385 : f32
    %85 = vector.broadcast %cst_30 : f32 to vector<8x8xf32>
    %86 = arith.mulf %84, %85 : vector<8x8xf32>
    %c3 = arith.constant 3 : index
    %c0_31 = arith.constant 0 : index
    %c0_32 = arith.constant 0 : index
    %87 = vector.load %arg5[%c3, %c0_31, %c0_32] : memref<4x8x8xf32, #tpu.memory_space<vmem>>, vector<1x8x8xf32>
    %88 = vector.shape_cast %87 : vector<1x8x8xf32> to vector<8x8xf32>
    %89 = arith.addf %86, %88 : vector<8x8xf32>
    %cst_33 = arith.constant dense<0xFF800000> : vector<8xf32>
    %90 = vector.multi_reduction <maximumf>, %89, %cst_33 [1] : vector<8x8xf32> to vector<8xf32>
    %91 = vector.shape_cast %90 : vector<8xf32> to vector<8x1xf32>
    %92 = vector.broadcast %91 : vector<8x1xf32> to vector<8x8xf32>
    %93 = arith.subf %89, %92 : vector<8x8xf32>
    %94 = math.exp %93 : vector<8x8xf32>
    %cst_34 = arith.constant dense<0.000000e+00> : vector<8xf32>
    %95 = vector.multi_reduction <add>, %94, %cst_34 [1] : vector<8x8xf32> to vector<8xf32>
    %96 = vector.shape_cast %95 : vector<8xf32> to vector<8x1xf32>
    %97 = tpu.reciprocal %96 {approx = true} : vector<8x1xf32> -> vector<8x1xf32>
    %98 = vector.broadcast %97 : vector<8x1xf32> to vector<8x8xf32>
    %99 = arith.mulf %94, %98 : vector<8x8xf32>
    %100 = arith.truncf %99 : vector<8x8xf32> to vector<8x8xbf16>
    %cst_35 = arith.constant dense<0.000000e+00> : vector<8x8xf32>
    %101 = tpu.matmul %100, %83, %cst_35 {dimension_numbers = #tpu.dot_dimension_numbers<[1], [0], [0], [1], [0, 0, 1, 1], [], []>} : vector<8x8xbf16>, vector<8x8xbf16>, vector<8x8xf32> -> vector<8x8xf32>
    %102 = tpu.concatenate %29, %53, %77, %101 in 1 : vector<8x8xf32>, vector<8x8xf32>, vector<8x8xf32>, vector<8x8xf32> -> vector<8x32xf32>
    %c0_36 = arith.constant 0 : index
    %c0_37 = arith.constant 0 : index
    %c0_38 = arith.constant 0 : index
    %103 = vector.load %arg6[%c0_36, %c0_37, %c0_38] : memref<1x8x32xf32, #tpu.memory_space<vmem>>, vector<1x8x32xf32>
    %104 = vector.shape_cast %103 : vector<1x8x32xf32> to vector<8x32xf32>
    %105 = vector.shape_cast %102 : vector<8x32xf32> to vector<1x8x32xf32>
    tpu.vector_store %arg6[%c0_36, %c0_37, %c0_38], %105 {strides = array<i32>} : memref<1x8x32xf32, #tpu.memory_space<vmem>>, vector<1x8x32xf32>,
    return
  }
  func.func @transform_0(%arg0: i32, %arg1: i32) -> (i32, i32, i32) {
    %c0_i32 = arith.constant 0 : i32
    %c0_i32_0 = arith.constant 0 : i32
    return %arg0, %arg1, %c0_i32 : i32, i32, i32
  }
  func.func @transform_1(%arg0: i32, %arg1: i32) -> (i32, i32, i32) {
    %c0_i32 = arith.constant 0 : i32
    %c0_i32_0 = arith.constant 0 : i32
    %c0_i32_1 = arith.constant 0 : i32
    return %arg0, %c0_i32, %c0_i32_0 : i32, i32, i32
  }
  func.func @transform_2(%arg0: i32, %arg1: i32) -> (i32, i32, i32) {
    %c0_i32 = arith.constant 0 : i32
    %c0_i32_0 = arith.constant 0 : i32
    %c0_i32_1 = arith.constant 0 : i32
    return %arg0, %c0_i32, %c0_i32_0 : i32, i32, i32
  }
  func.func @transform_3(%arg0: i32, %arg1: i32) -> (i32, i32, i32) {
    %c0_i32 = arith.constant 0 : i32
    %c0_i32_0 = arith.constant 0 : i32
    %c0_i32_1 = arith.constant 0 : i32
    return %c0_i32, %arg1, %c0_i32_0 : i32, i32, i32
  }
  func.func @transform_4(%arg0: i32, %arg1: i32) -> (i32, i32, i32) {
    %c0_i32 = arith.constant 0 : i32
    %c0_i32_0 = arith.constant 0 : i32
    return %arg0, %arg1, %c0_i32 : i32, i32, i32
  }
}

module attributes {stable_mosaic.version = 11 : i64} {
  func.func @_linear_kernel(%arg0: i32, %arg1: i32, %arg2: i32, %arg3: memref<16x32xf32, #tpu.memory_space<vmem>>, %arg4: memref<32x32xbf16, #tpu.memory_space<vmem>>, %arg5: memref<1x32xf32, #tpu.memory_space<vmem>>, %arg6: memref<16x32xf32, #tpu.memory_space<vmem>>, %arg7: memref<16x32xf32, #tpu.memory_space<vmem>>) attributes {dimension_semantics = [#tpu.dimension_semantics<parallel>, #tpu.dimension_semantics<parallel>, #tpu.dimension_semantics<arbitrary>], iteration_bounds = array<i64: 1, 1, 1>, scalar_prefetch = 0 : i64, scratch_operands = 1 : i64, tpu.core_type = #tpu.core_type<tc>, window_params = [{transform_indices = @transform_0, window_bounds = array<i64: 16, 32>}, {transform_indices = @transform_1, window_bounds = array<i64: 32, 32>}, {transform_indices = @transform_2, window_bounds = array<i64: 1, 32>}, {transform_indices = @transform_3, window_bounds = array<i64: 16, 32>}]} {
    %c0_i32 = arith.constant 0 : i32
    %0 = arith.cmpi eq, %arg2, %c0_i32 : i32
    %1 = arith.extui %0 : i1 to i32
    %c0_i32_0 = arith.constant 0 : i32
    %2 = arith.cmpi ne, %1, %c0_i32_0 : i32
    scf.if %2 {
      %cst_10 = arith.constant 0.000000e+00 : f32
      %13 = vector.broadcast %cst_10 : f32 to vector<16x32xf32>
      %c0_11 = arith.constant 0 : index
      %c0_12 = arith.constant 0 : index
      %14 = vector.load %arg7[%c0_11, %c0_12] : memref<16x32xf32, #tpu.memory_space<vmem>>, vector<16x32xf32>
      tpu.vector_store %arg7[%c0_11, %c0_12], %13 {strides = array<i32>} : memref<16x32xf32, #tpu.memory_space<vmem>>, vector<16x32xf32>,
    } else {
    }
    %c0 = arith.constant 0 : index
    %c0_1 = arith.constant 0 : index
    %3 = vector.load %arg7[%c0, %c0_1] : memref<16x32xf32, #tpu.memory_space<vmem>>, vector<16x32xf32>
    %c0_2 = arith.constant 0 : index
    %c0_3 = arith.constant 0 : index
    %4 = vector.load %arg3[%c0_2, %c0_3] : memref<16x32xf32, #tpu.memory_space<vmem>>, vector<16x32xf32>
    %5 = arith.truncf %4 : vector<16x32xf32> to vector<16x32xbf16>
    %c0_4 = arith.constant 0 : index
    %c0_5 = arith.constant 0 : index
    %6 = vector.load %arg4[%c0_4, %c0_5] : memref<32x32xbf16, #tpu.memory_space<vmem>>, vector<32x32xbf16>
    %cst = arith.constant dense<0.000000e+00> : vector<16x32xf32>
    %7 = tpu.matmul %5, %6, %cst {dimension_numbers = #tpu.dot_dimension_numbers<[1], [0], [0], [1], [0, 0, 1, 1], [], []>} : vector<16x32xbf16>, vector<32x32xbf16>, vector<16x32xf32> -> vector<16x32xf32>
    %8 = arith.addf %3, %7 : vector<16x32xf32>
    %c0_6 = arith.constant 0 : index
    %c0_7 = arith.constant 0 : index
    %9 = vector.load %arg7[%c0_6, %c0_7] : memref<16x32xf32, #tpu.memory_space<vmem>>, vector<16x32xf32>
    tpu.vector_store %arg7[%c0_6, %c0_7], %8 {strides = array<i32>} : memref<16x32xf32, #tpu.memory_space<vmem>>, vector<16x32xf32>,
    %c0_i32_8 = arith.constant 0 : i32
    %10 = arith.cmpi eq, %arg2, %c0_i32_8 : i32
    %11 = arith.extui %10 : i1 to i32
    %c0_i32_9 = arith.constant 0 : i32
    %12 = arith.cmpi ne, %11, %c0_i32_9 : i32
    scf.if %12 {
      %c0_10 = arith.constant 0 : index
      %c0_11 = arith.constant 0 : index
      %13 = vector.load %arg7[%c0_10, %c0_11] : memref<16x32xf32, #tpu.memory_space<vmem>>, vector<16x32xf32>
      %c0_12 = arith.constant 0 : index
      %c0_13 = arith.constant 0 : index
      %14 = vector.load %arg5[%c0_12, %c0_13] : memref<1x32xf32, #tpu.memory_space<vmem>>, vector<1x32xf32>
      %15 = vector.broadcast %14 : vector<1x32xf32> to vector<16x32xf32>
      %16 = arith.addf %13, %15 : vector<16x32xf32>
      %c0_14 = arith.constant 0 : index
      %c0_15 = arith.constant 0 : index
      %17 = vector.load %arg6[%c0_14, %c0_15] : memref<16x32xf32, #tpu.memory_space<vmem>>, vector<16x32xf32>
      tpu.vector_store %arg6[%c0_14, %c0_15], %16 {strides = array<i32>} : memref<16x32xf32, #tpu.memory_space<vmem>>, vector<16x32xf32>,
    } else {
    }
    return
  }
  func.func @transform_0(%arg0: i32, %arg1: i32, %arg2: i32) -> (i32, i32) {
    %c0_i32 = arith.constant 0 : i32
    return %arg0, %arg2 : i32, i32
  }
  func.func @transform_1(%arg0: i32, %arg1: i32, %arg2: i32) -> (i32, i32) {
    %c0_i32 = arith.constant 0 : i32
    return %arg2, %arg1 : i32, i32
  }
  func.func @transform_2(%arg0: i32, %arg1: i32, %arg2: i32) -> (i32, i32) {
    %c0_i32 = arith.constant 0 : i32
    %c0_i32_0 = arith.constant 0 : i32
    return %c0_i32, %arg1 : i32, i32
  }
  func.func @transform_3(%arg0: i32, %arg1: i32, %arg2: i32) -> (i32, i32) {
    %c0_i32 = arith.constant 0 : i32
    return %arg0, %arg1 : i32, i32
  }
}

module attributes {stable_mosaic.version = 11 : i64} {
  func.func @_ln_linear_kernel(%arg0: i32, %arg1: i32, %arg2: memref<16x32xf32, #tpu.memory_space<vmem>>, %arg3: memref<1x32xf32, #tpu.memory_space<vmem>>, %arg4: memref<1x32xf32, #tpu.memory_space<vmem>>, %arg5: memref<32x32xbf16, #tpu.memory_space<vmem>>, %arg6: memref<1x32xf32, #tpu.memory_space<vmem>>, %arg7: memref<16x32xf32, #tpu.memory_space<vmem>>) attributes {dimension_semantics = [#tpu.dimension_semantics<parallel>, #tpu.dimension_semantics<parallel>], iteration_bounds = array<i64: 1, 1>, scalar_prefetch = 0 : i64, scratch_operands = 0 : i64, tpu.core_type = #tpu.core_type<tc>, window_params = [{transform_indices = @transform_0, window_bounds = array<i64: 16, 32>}, {pipeline_mode = #tpu.pipeline_mode<synchronous>, transform_indices = @transform_1, window_bounds = array<i64: 1, 32>}, {pipeline_mode = #tpu.pipeline_mode<synchronous>, transform_indices = @transform_2, window_bounds = array<i64: 1, 32>}, {transform_indices = @transform_3, window_bounds = array<i64: 32, 32>}, {transform_indices = @transform_4, window_bounds = array<i64: 1, 32>}, {transform_indices = @transform_5, window_bounds = array<i64: 16, 32>}]} {
    %c0 = arith.constant 0 : index
    %c0_0 = arith.constant 0 : index
    %0 = vector.load %arg2[%c0, %c0_0] : memref<16x32xf32, #tpu.memory_space<vmem>>, vector<16x32xf32>
    %cst = arith.constant dense<0.000000e+00> : vector<16xf32>
    %1 = vector.multi_reduction <add>, %0, %cst [1] : vector<16x32xf32> to vector<16xf32>
    %2 = vector.shape_cast %1 : vector<16xf32> to vector<16x1xf32>
    %cst_1 = arith.constant 3.200000e+01 : f32
    %3 = vector.broadcast %cst_1 : f32 to vector<16x1xf32>
    %4 = arith.divf %2, %3 : vector<16x1xf32>
    %5 = vector.broadcast %4 : vector<16x1xf32> to vector<16x32xf32>
    %6 = arith.subf %0, %5 : vector<16x32xf32>
    %7 = arith.mulf %6, %6 : vector<16x32xf32>
    %cst_2 = arith.constant dense<0.000000e+00> : vector<16xf32>
    %8 = vector.multi_reduction <add>, %7, %cst_2 [1] : vector<16x32xf32> to vector<16xf32>
    %9 = vector.shape_cast %8 : vector<16xf32> to vector<16x1xf32>
    %cst_3 = arith.constant 3.200000e+01 : f32
    %10 = vector.broadcast %cst_3 : f32 to vector<16x1xf32>
    %11 = arith.divf %9, %10 : vector<16x1xf32>
    %12 = vector.broadcast %4 : vector<16x1xf32> to vector<16x32xf32>
    %13 = arith.subf %0, %12 : vector<16x32xf32>
    %cst_4 = arith.constant 9.99999974E-6 : f32
    %14 = vector.broadcast %cst_4 : f32 to vector<16x1xf32>
    %15 = arith.addf %11, %14 : vector<16x1xf32>
    %16 = math.rsqrt %15 : vector<16x1xf32>
    %17 = vector.broadcast %16 : vector<16x1xf32> to vector<16x32xf32>
    %18 = arith.mulf %13, %17 : vector<16x32xf32>
    %c0_5 = arith.constant 0 : index
    %c0_6 = arith.constant 0 : index
    %19 = vector.load %arg3[%c0_5, %c0_6] : memref<1x32xf32, #tpu.memory_space<vmem>>, vector<1x32xf32>
    %20 = vector.broadcast %19 : vector<1x32xf32> to vector<16x32xf32>
    %21 = arith.mulf %18, %20 : vector<16x32xf32>
    %c0_7 = arith.constant 0 : index
    %c0_8 = arith.constant 0 : index
    %22 = vector.load %arg4[%c0_7, %c0_8] : memref<1x32xf32, #tpu.memory_space<vmem>>, vector<1x32xf32>
    %23 = vector.broadcast %22 : vector<1x32xf32> to vector<16x32xf32>
    %24 = arith.addf %21, %23 : vector<16x32xf32>
    %25 = arith.truncf %24 : vector<16x32xf32> to vector<16x32xbf16>
    %c0_9 = arith.constant 0 : index
    %c0_10 = arith.constant 0 : index
    %26 = vector.load %arg5[%c0_9, %c0_10] : memref<32x32xbf16, #tpu.memory_space<vmem>>, vector<32x32xbf16>
    %cst_11 = arith.constant dense<0.000000e+00> : vector<16x32xf32>
    %27 = tpu.matmul %25, %26, %cst_11 {dimension_numbers = #tpu.dot_dimension_numbers<[1], [0], [0], [1], [0, 0, 1, 1], [], []>} : vector<16x32xbf16>, vector<32x32xbf16>, vector<16x32xf32> -> vector<16x32xf32>
    %c0_12 = arith.constant 0 : index
    %c0_13 = arith.constant 0 : index
    %28 = vector.load %arg6[%c0_12, %c0_13] : memref<1x32xf32, #tpu.memory_space<vmem>>, vector<1x32xf32>
    %29 = vector.broadcast %28 : vector<1x32xf32> to vector<16x32xf32>
    %30 = arith.addf %27, %29 : vector<16x32xf32>
    %c0_14 = arith.constant 0 : index
    %c0_15 = arith.constant 0 : index
    %31 = vector.load %arg7[%c0_14, %c0_15] : memref<16x32xf32, #tpu.memory_space<vmem>>, vector<16x32xf32>
    tpu.vector_store %arg7[%c0_14, %c0_15], %30 {strides = array<i32>} : memref<16x32xf32, #tpu.memory_space<vmem>>, vector<16x32xf32>,
    return
  }
  func.func @transform_0(%arg0: i32, %arg1: i32) -> (i32, i32) {
    %c0_i32 = arith.constant 0 : i32
    %c0_i32_0 = arith.constant 0 : i32
    return %arg0, %c0_i32 : i32, i32
  }
  func.func @transform_1(%arg0: i32, %arg1: i32) -> (i32, i32) {
    %c0_i32 = arith.constant 0 : i32
    %c0_i32_0 = arith.constant 0 : i32
    %c0_i32_1 = arith.constant 0 : i32
    return %c0_i32, %c0_i32_0 : i32, i32
  }
  func.func @transform_2(%arg0: i32, %arg1: i32) -> (i32, i32) {
    %c0_i32 = arith.constant 0 : i32
    %c0_i32_0 = arith.constant 0 : i32
    %c0_i32_1 = arith.constant 0 : i32
    return %c0_i32, %c0_i32_0 : i32, i32
  }
  func.func @transform_3(%arg0: i32, %arg1: i32) -> (i32, i32) {
    %c0_i32 = arith.constant 0 : i32
    %c0_i32_0 = arith.constant 0 : i32
    return %c0_i32, %arg1 : i32, i32
  }
  func.func @transform_4(%arg0: i32, %arg1: i32) -> (i32, i32) {
    %c0_i32 = arith.constant 0 : i32
    %c0_i32_0 = arith.constant 0 : i32
    return %c0_i32, %arg1 : i32, i32
  }
  func.func @transform_5(%arg0: i32, %arg1: i32) -> (i32, i32) {
    %c0_i32 = arith.constant 0 : i32
    return %arg0, %arg1 : i32, i32
  }
}

module attributes {stable_mosaic.version = 11 : i64} {
  func.func @_linear_kernel(%arg0: i32, %arg1: i32, %arg2: i32, %arg3: memref<8x32xf32, #tpu.memory_space<vmem>>, %arg4: memref<32x64xbf16, #tpu.memory_space<vmem>>, %arg5: memref<1x64xf32, #tpu.memory_space<vmem>>, %arg6: memref<8x64xf32, #tpu.memory_space<vmem>>, %arg7: memref<8x64xf32, #tpu.memory_space<vmem>>) attributes {dimension_semantics = [#tpu.dimension_semantics<parallel>, #tpu.dimension_semantics<parallel>, #tpu.dimension_semantics<arbitrary>], iteration_bounds = array<i64: 1, 1, 1>, scalar_prefetch = 0 : i64, scratch_operands = 1 : i64, tpu.core_type = #tpu.core_type<tc>, window_params = [{transform_indices = @transform_0, window_bounds = array<i64: 8, 32>}, {transform_indices = @transform_1, window_bounds = array<i64: 32, 64>}, {transform_indices = @transform_2, window_bounds = array<i64: 1, 64>}, {transform_indices = @transform_3, window_bounds = array<i64: 8, 64>}]} {
    %c0_i32 = arith.constant 0 : i32
    %0 = arith.cmpi eq, %arg2, %c0_i32 : i32
    %1 = arith.extui %0 : i1 to i32
    %c0_i32_0 = arith.constant 0 : i32
    %2 = arith.cmpi ne, %1, %c0_i32_0 : i32
    scf.if %2 {
      %cst_10 = arith.constant 0.000000e+00 : f32
      %13 = vector.broadcast %cst_10 : f32 to vector<8x64xf32>
      %c0_11 = arith.constant 0 : index
      %c0_12 = arith.constant 0 : index
      %14 = vector.load %arg7[%c0_11, %c0_12] : memref<8x64xf32, #tpu.memory_space<vmem>>, vector<8x64xf32>
      tpu.vector_store %arg7[%c0_11, %c0_12], %13 {strides = array<i32>} : memref<8x64xf32, #tpu.memory_space<vmem>>, vector<8x64xf32>,
    } else {
    }
    %c0 = arith.constant 0 : index
    %c0_1 = arith.constant 0 : index
    %3 = vector.load %arg7[%c0, %c0_1] : memref<8x64xf32, #tpu.memory_space<vmem>>, vector<8x64xf32>
    %c0_2 = arith.constant 0 : index
    %c0_3 = arith.constant 0 : index
    %4 = vector.load %arg3[%c0_2, %c0_3] : memref<8x32xf32, #tpu.memory_space<vmem>>, vector<8x32xf32>
    %5 = arith.truncf %4 : vector<8x32xf32> to vector<8x32xbf16>
    %c0_4 = arith.constant 0 : index
    %c0_5 = arith.constant 0 : index
    %6 = vector.load %arg4[%c0_4, %c0_5] : memref<32x64xbf16, #tpu.memory_space<vmem>>, vector<32x64xbf16>
    %cst = arith.constant dense<0.000000e+00> : vector<8x64xf32>
    %7 = tpu.matmul %5, %6, %cst {dimension_numbers = #tpu.dot_dimension_numbers<[1], [0], [0], [1], [0, 0, 1, 1], [], []>} : vector<8x32xbf16>, vector<32x64xbf16>, vector<8x64xf32> -> vector<8x64xf32>
    %8 = arith.addf %3, %7 : vector<8x64xf32>
    %c0_6 = arith.constant 0 : index
    %c0_7 = arith.constant 0 : index
    %9 = vector.load %arg7[%c0_6, %c0_7] : memref<8x64xf32, #tpu.memory_space<vmem>>, vector<8x64xf32>
    tpu.vector_store %arg7[%c0_6, %c0_7], %8 {strides = array<i32>} : memref<8x64xf32, #tpu.memory_space<vmem>>, vector<8x64xf32>,
    %c0_i32_8 = arith.constant 0 : i32
    %10 = arith.cmpi eq, %arg2, %c0_i32_8 : i32
    %11 = arith.extui %10 : i1 to i32
    %c0_i32_9 = arith.constant 0 : i32
    %12 = arith.cmpi ne, %11, %c0_i32_9 : i32
    scf.if %12 {
      %c0_10 = arith.constant 0 : index
      %c0_11 = arith.constant 0 : index
      %13 = vector.load %arg7[%c0_10, %c0_11] : memref<8x64xf32, #tpu.memory_space<vmem>>, vector<8x64xf32>
      %c0_12 = arith.constant 0 : index
      %c0_13 = arith.constant 0 : index
      %14 = vector.load %arg5[%c0_12, %c0_13] : memref<1x64xf32, #tpu.memory_space<vmem>>, vector<1x64xf32>
      %15 = vector.broadcast %14 : vector<1x64xf32> to vector<8x64xf32>
      %16 = arith.addf %13, %15 : vector<8x64xf32>
      %c0_14 = arith.constant 0 : index
      %c0_15 = arith.constant 0 : index
      %17 = vector.load %arg6[%c0_14, %c0_15] : memref<8x64xf32, #tpu.memory_space<vmem>>, vector<8x64xf32>
      tpu.vector_store %arg6[%c0_14, %c0_15], %16 {strides = array<i32>} : memref<8x64xf32, #tpu.memory_space<vmem>>, vector<8x64xf32>,
    } else {
    }
    return
  }
  func.func @transform_0(%arg0: i32, %arg1: i32, %arg2: i32) -> (i32, i32) {
    %c0_i32 = arith.constant 0 : i32
    return %arg0, %arg2 : i32, i32
  }
  func.func @transform_1(%arg0: i32, %arg1: i32, %arg2: i32) -> (i32, i32) {
    %c0_i32 = arith.constant 0 : i32
    return %arg2, %arg1 : i32, i32
  }
  func.func @transform_2(%arg0: i32, %arg1: i32, %arg2: i32) -> (i32, i32) {
    %c0_i32 = arith.constant 0 : i32
    %c0_i32_0 = arith.constant 0 : i32
    return %c0_i32, %arg1 : i32, i32
  }
  func.func @transform_3(%arg0: i32, %arg1: i32, %arg2: i32) -> (i32, i32) {
    %c0_i32 = arith.constant 0 : i32
    return %arg0, %arg1 : i32, i32
  }
}

module attributes {stable_mosaic.version = 11 : i64} {
  func.func @_attn_kernel(%arg0: i32, %arg1: i32, %arg2: memref<1x8x32xf32, #tpu.memory_space<vmem>>, %arg3: memref<1x4x32xf32, #tpu.memory_space<vmem>>, %arg4: memref<1x4x32xf32, #tpu.memory_space<vmem>>, %arg5: memref<1x8x32xf32, #tpu.memory_space<vmem>>) attributes {dimension_semantics = [#tpu.dimension_semantics<parallel>, #tpu.dimension_semantics<parallel>], iteration_bounds = array<i64: 2, 1>, scalar_prefetch = 0 : i64, scratch_operands = 0 : i64, tpu.core_type = #tpu.core_type<tc>, window_params = [{transform_indices = @transform_0, window_bounds = array<i64: 1, 8, 32>}, {transform_indices = @transform_1, window_bounds = array<i64: 1, 4, 32>}, {transform_indices = @transform_2, window_bounds = array<i64: 1, 4, 32>}, {transform_indices = @transform_3, window_bounds = array<i64: 1, 8, 32>}]} {
    %c0 = arith.constant 0 : index
    %c0_0 = arith.constant 0 : index
    %c0_1 = arith.constant 0 : index
    %0 = vector.load %arg2[%c0, %c0_0, %c0_1] : memref<1x8x32xf32, #tpu.memory_space<vmem>>, vector<1x8x32xf32>
    %1 = vector.shape_cast %0 : vector<1x8x32xf32> to vector<8x32xf32>
    %c0_2 = arith.constant 0 : index
    %c0_3 = arith.constant 0 : index
    %c0_4 = arith.constant 0 : index
    %2 = vector.load %arg3[%c0_2, %c0_3, %c0_4] : memref<1x4x32xf32, #tpu.memory_space<vmem>>, vector<1x4x32xf32>
    %3 = vector.shape_cast %2 : vector<1x4x32xf32> to vector<4x32xf32>
    %c0_5 = arith.constant 0 : index
    %c0_6 = arith.constant 0 : index
    %c0_7 = arith.constant 0 : index
    %4 = vector.load %arg4[%c0_5, %c0_6, %c0_7] : memref<1x4x32xf32, #tpu.memory_space<vmem>>, vector<1x4x32xf32>
    %5 = vector.shape_cast %4 : vector<1x4x32xf32> to vector<4x32xf32>
    %6 = vector.extract_strided_slice %1 {offsets = [0, 0], sizes = [8, 8], strides = [1, 1]} : vector<8x32xf32> to vector<8x8xf32>
    %7 = arith.truncf %6 : vector<8x8xf32> to vector<8x8xbf16>
    %8 = vector.extract_strided_slice %3 {offsets = [0, 0], sizes = [4, 8], strides = [1, 1]} : vector<4x32xf32> to vector<4x8xf32>
    %9 = arith.truncf %8 : vector<4x8xf32> to vector<4x8xbf16>
    %10 = vector.extract_strided_slice %5 {offsets = [0, 0], sizes = [4, 8], strides = [1, 1]} : vector<4x32xf32> to vector<4x8xf32>
    %11 = arith.truncf %10 : vector<4x8xf32> to vector<4x8xbf16>
    %cst = arith.constant dense<0.000000e+00> : vector<8x4xf32>
    %12 = tpu.matmul %7, %9, %cst {dimension_numbers = #tpu.dot_dimension_numbers<[1], [1], [0], [0], [0, 0, 1, 0], [], []>} : vector<8x8xbf16>, vector<4x8xbf16>, vector<8x4xf32> -> vector<8x4xf32>
    %cst_8 = arith.constant 0.353553385 : f32
    %13 = vector.broadcast %cst_8 : f32 to vector<8x4xf32>
    %14 = arith.mulf %12, %13 : vector<8x4xf32>
    %cst_9 = arith.constant dense<0xFF800000> : vector<8xf32>
    %15 = vector.multi_reduction <maximumf>, %14, %cst_9 [1] : vector<8x4xf32> to vector<8xf32>
    %16 = vector.shape_cast %15 : vector<8xf32> to vector<8x1xf32>
    %17 = vector.broadcast %16 : vector<8x1xf32> to vector<8x4xf32>
    %18 = arith.subf %14, %17 : vector<8x4xf32>
    %19 = math.exp %18 : vector<8x4xf32>
    %cst_10 = arith.constant dense<0.000000e+00> : vector<8xf32>
    %20 = vector.multi_reduction <add>, %19, %cst_10 [1] : vector<8x4xf32> to vector<8xf32>
    %21 = vector.shape_cast %20 : vector<8xf32> to vector<8x1xf32>
    %22 = tpu.reciprocal %21 {approx = true} : vector<8x1xf32> -> vector<8x1xf32>
    %23 = vector.broadcast %22 : vector<8x1xf32> to vector<8x4xf32>
    %24 = arith.mulf %19, %23 : vector<8x4xf32>
    %25 = arith.truncf %24 : vector<8x4xf32> to vector<8x4xbf16>
    %cst_11 = arith.constant dense<0.000000e+00> : vector<8x8xf32>
    %26 = tpu.matmul %25, %11, %cst_11 {dimension_numbers = #tpu.dot_dimension_numbers<[1], [0], [0], [1], [0, 0, 1, 1], [], []>} : vector<8x4xbf16>, vector<4x8xbf16>, vector<8x8xf32> -> vector<8x8xf32>
    %27 = vector.extract_strided_slice %1 {offsets = [0, 8], sizes = [8, 8], strides = [1, 1]} : vector<8x32xf32> to vector<8x8xf32>
    %28 = arith.truncf %27 : vector<8x8xf32> to vector<8x8xbf16>
    %29 = vector.extract_strided_slice %3 {offsets = [0, 8], sizes = [4, 8], strides = [1, 1]} : vector<4x32xf32> to vector<4x8xf32>
    %30 = arith.truncf %29 : vector<4x8xf32> to vector<4x8xbf16>
    %31 = vector.extract_strided_slice %5 {offsets = [0, 8], sizes = [4, 8], strides = [1, 1]} : vector<4x32xf32> to vector<4x8xf32>
    %32 = arith.truncf %31 : vector<4x8xf32> to vector<4x8xbf16>
    %cst_12 = arith.constant dense<0.000000e+00> : vector<8x4xf32>
    %33 = tpu.matmul %28, %30, %cst_12 {dimension_numbers = #tpu.dot_dimension_numbers<[1], [1], [0], [0], [0, 0, 1, 0], [], []>} : vector<8x8xbf16>, vector<4x8xbf16>, vector<8x4xf32> -> vector<8x4xf32>
    %cst_13 = arith.constant 0.353553385 : f32
    %34 = vector.broadcast %cst_13 : f32 to vector<8x4xf32>
    %35 = arith.mulf %33, %34 : vector<8x4xf32>
    %cst_14 = arith.constant dense<0xFF800000> : vector<8xf32>
    %36 = vector.multi_reduction <maximumf>, %35, %cst_14 [1] : vector<8x4xf32> to vector<8xf32>
    %37 = vector.shape_cast %36 : vector<8xf32> to vector<8x1xf32>
    %38 = vector.broadcast %37 : vector<8x1xf32> to vector<8x4xf32>
    %39 = arith.subf %35, %38 : vector<8x4xf32>
    %40 = math.exp %39 : vector<8x4xf32>
    %cst_15 = arith.constant dense<0.000000e+00> : vector<8xf32>
    %41 = vector.multi_reduction <add>, %40, %cst_15 [1] : vector<8x4xf32> to vector<8xf32>
    %42 = vector.shape_cast %41 : vector<8xf32> to vector<8x1xf32>
    %43 = tpu.reciprocal %42 {approx = true} : vector<8x1xf32> -> vector<8x1xf32>
    %44 = vector.broadcast %43 : vector<8x1xf32> to vector<8x4xf32>
    %45 = arith.mulf %40, %44 : vector<8x4xf32>
    %46 = arith.truncf %45 : vector<8x4xf32> to vector<8x4xbf16>
    %cst_16 = arith.constant dense<0.000000e+00> : vector<8x8xf32>
    %47 = tpu.matmul %46, %32, %cst_16 {dimension_numbers = #tpu.dot_dimension_numbers<[1], [0], [0], [1], [0, 0, 1, 1], [], []>} : vector<8x4xbf16>, vector<4x8xbf16>, vector<8x8xf32> -> vector<8x8xf32>
    %48 = vector.extract_strided_slice %1 {offsets = [0, 16], sizes = [8, 8], strides = [1, 1]} : vector<8x32xf32> to vector<8x8xf32>
    %49 = arith.truncf %48 : vector<8x8xf32> to vector<8x8xbf16>
    %50 = vector.extract_strided_slice %3 {offsets = [0, 16], sizes = [4, 8], strides = [1, 1]} : vector<4x32xf32> to vector<4x8xf32>
    %51 = arith.truncf %50 : vector<4x8xf32> to vector<4x8xbf16>
    %52 = vector.extract_strided_slice %5 {offsets = [0, 16], sizes = [4, 8], strides = [1, 1]} : vector<4x32xf32> to vector<4x8xf32>
    %53 = arith.truncf %52 : vector<4x8xf32> to vector<4x8xbf16>
    %cst_17 = arith.constant dense<0.000000e+00> : vector<8x4xf32>
    %54 = tpu.matmul %49, %51, %cst_17 {dimension_numbers = #tpu.dot_dimension_numbers<[1], [1], [0], [0], [0, 0, 1, 0], [], []>} : vector<8x8xbf16>, vector<4x8xbf16>, vector<8x4xf32> -> vector<8x4xf32>
    %cst_18 = arith.constant 0.353553385 : f32
    %55 = vector.broadcast %cst_18 : f32 to vector<8x4xf32>
    %56 = arith.mulf %54, %55 : vector<8x4xf32>
    %cst_19 = arith.constant dense<0xFF800000> : vector<8xf32>
    %57 = vector.multi_reduction <maximumf>, %56, %cst_19 [1] : vector<8x4xf32> to vector<8xf32>
    %58 = vector.shape_cast %57 : vector<8xf32> to vector<8x1xf32>
    %59 = vector.broadcast %58 : vector<8x1xf32> to vector<8x4xf32>
    %60 = arith.subf %56, %59 : vector<8x4xf32>
    %61 = math.exp %60 : vector<8x4xf32>
    %cst_20 = arith.constant dense<0.000000e+00> : vector<8xf32>
    %62 = vector.multi_reduction <add>, %61, %cst_20 [1] : vector<8x4xf32> to vector<8xf32>
    %63 = vector.shape_cast %62 : vector<8xf32> to vector<8x1xf32>
    %64 = tpu.reciprocal %63 {approx = true} : vector<8x1xf32> -> vector<8x1xf32>
    %65 = vector.broadcast %64 : vector<8x1xf32> to vector<8x4xf32>
    %66 = arith.mulf %61, %65 : vector<8x4xf32>
    %67 = arith.truncf %66 : vector<8x4xf32> to vector<8x4xbf16>
    %cst_21 = arith.constant dense<0.000000e+00> : vector<8x8xf32>
    %68 = tpu.matmul %67, %53, %cst_21 {dimension_numbers = #tpu.dot_dimension_numbers<[1], [0], [0], [1], [0, 0, 1, 1], [], []>} : vector<8x4xbf16>, vector<4x8xbf16>, vector<8x8xf32> -> vector<8x8xf32>
    %69 = vector.extract_strided_slice %1 {offsets = [0, 24], sizes = [8, 8], strides = [1, 1]} : vector<8x32xf32> to vector<8x8xf32>
    %70 = arith.truncf %69 : vector<8x8xf32> to vector<8x8xbf16>
    %71 = vector.extract_strided_slice %3 {offsets = [0, 24], sizes = [4, 8], strides = [1, 1]} : vector<4x32xf32> to vector<4x8xf32>
    %72 = arith.truncf %71 : vector<4x8xf32> to vector<4x8xbf16>
    %73 = vector.extract_strided_slice %5 {offsets = [0, 24], sizes = [4, 8], strides = [1, 1]} : vector<4x32xf32> to vector<4x8xf32>
    %74 = arith.truncf %73 : vector<4x8xf32> to vector<4x8xbf16>
    %cst_22 = arith.constant dense<0.000000e+00> : vector<8x4xf32>
    %75 = tpu.matmul %70, %72, %cst_22 {dimension_numbers = #tpu.dot_dimension_numbers<[1], [1], [0], [0], [0, 0, 1, 0], [], []>} : vector<8x8xbf16>, vector<4x8xbf16>, vector<8x4xf32> -> vector<8x4xf32>
    %cst_23 = arith.constant 0.353553385 : f32
    %76 = vector.broadcast %cst_23 : f32 to vector<8x4xf32>
    %77 = arith.mulf %75, %76 : vector<8x4xf32>
    %cst_24 = arith.constant dense<0xFF800000> : vector<8xf32>
    %78 = vector.multi_reduction <maximumf>, %77, %cst_24 [1] : vector<8x4xf32> to vector<8xf32>
    %79 = vector.shape_cast %78 : vector<8xf32> to vector<8x1xf32>
    %80 = vector.broadcast %79 : vector<8x1xf32> to vector<8x4xf32>
    %81 = arith.subf %77, %80 : vector<8x4xf32>
    %82 = math.exp %81 : vector<8x4xf32>
    %cst_25 = arith.constant dense<0.000000e+00> : vector<8xf32>
    %83 = vector.multi_reduction <add>, %82, %cst_25 [1] : vector<8x4xf32> to vector<8xf32>
    %84 = vector.shape_cast %83 : vector<8xf32> to vector<8x1xf32>
    %85 = tpu.reciprocal %84 {approx = true} : vector<8x1xf32> -> vector<8x1xf32>
    %86 = vector.broadcast %85 : vector<8x1xf32> to vector<8x4xf32>
    %87 = arith.mulf %82, %86 : vector<8x4xf32>
    %88 = arith.truncf %87 : vector<8x4xf32> to vector<8x4xbf16>
    %cst_26 = arith.constant dense<0.000000e+00> : vector<8x8xf32>
    %89 = tpu.matmul %88, %74, %cst_26 {dimension_numbers = #tpu.dot_dimension_numbers<[1], [0], [0], [1], [0, 0, 1, 1], [], []>} : vector<8x4xbf16>, vector<4x8xbf16>, vector<8x8xf32> -> vector<8x8xf32>
    %90 = tpu.concatenate %26, %47, %68, %89 in 1 : vector<8x8xf32>, vector<8x8xf32>, vector<8x8xf32>, vector<8x8xf32> -> vector<8x32xf32>
    %c0_27 = arith.constant 0 : index
    %c0_28 = arith.constant 0 : index
    %c0_29 = arith.constant 0 : index
    %91 = vector.load %arg5[%c0_27, %c0_28, %c0_29] : memref<1x8x32xf32, #tpu.memory_space<vmem>>, vector<1x8x32xf32>
    %92 = vector.shape_cast %91 : vector<1x8x32xf32> to vector<8x32xf32>
    %93 = vector.shape_cast %90 : vector<8x32xf32> to vector<1x8x32xf32>
    tpu.vector_store %arg5[%c0_27, %c0_28, %c0_29], %93 {strides = array<i32>} : memref<1x8x32xf32, #tpu.memory_space<vmem>>, vector<1x8x32xf32>,
    return
  }
  func.func @transform_0(%arg0: i32, %arg1: i32) -> (i32, i32, i32) {
    %c0_i32 = arith.constant 0 : i32
    %c0_i32_0 = arith.constant 0 : i32
    return %arg0, %arg1, %c0_i32 : i32, i32, i32
  }
  func.func @transform_1(%arg0: i32, %arg1: i32) -> (i32, i32, i32) {
    %c0_i32 = arith.constant 0 : i32
    %c0_i32_0 = arith.constant 0 : i32
    %c0_i32_1 = arith.constant 0 : i32
    return %arg0, %c0_i32, %c0_i32_0 : i32, i32, i32
  }
  func.func @transform_2(%arg0: i32, %arg1: i32) -> (i32, i32, i32) {
    %c0_i32 = arith.constant 0 : i32
    %c0_i32_0 = arith.constant 0 : i32
    %c0_i32_1 = arith.constant 0 : i32
    return %arg0, %c0_i32, %c0_i32_0 : i32, i32, i32
  }
  func.func @transform_3(%arg0: i32, %arg1: i32) -> (i32, i32, i32) {
    %c0_i32 = arith.constant 0 : i32
    %c0_i32_0 = arith.constant 0 : i32
    return %arg0, %arg1, %c0_i32 : i32, i32, i32
  }
}

module attributes {stable_mosaic.version = 11 : i64} {
  func.func @_linear_kernel(%arg0: i32, %arg1: i32, %arg2: i32, %arg3: memref<16x128xf32, #tpu.memory_space<vmem>>, %arg4: memref<128x32xbf16, #tpu.memory_space<vmem>>, %arg5: memref<1x32xf32, #tpu.memory_space<vmem>>, %arg6: memref<16x32xf32, #tpu.memory_space<vmem>>, %arg7: memref<16x32xf32, #tpu.memory_space<vmem>>) attributes {dimension_semantics = [#tpu.dimension_semantics<parallel>, #tpu.dimension_semantics<parallel>, #tpu.dimension_semantics<arbitrary>], iteration_bounds = array<i64: 1, 1, 1>, scalar_prefetch = 0 : i64, scratch_operands = 1 : i64, tpu.core_type = #tpu.core_type<tc>, window_params = [{transform_indices = @transform_0, window_bounds = array<i64: 16, 128>}, {transform_indices = @transform_1, window_bounds = array<i64: 128, 32>}, {transform_indices = @transform_2, window_bounds = array<i64: 1, 32>}, {transform_indices = @transform_3, window_bounds = array<i64: 16, 32>}]} {
    %c0_i32 = arith.constant 0 : i32
    %0 = arith.cmpi eq, %arg2, %c0_i32 : i32
    %1 = arith.extui %0 : i1 to i32
    %c0_i32_0 = arith.constant 0 : i32
    %2 = arith.cmpi ne, %1, %c0_i32_0 : i32
    scf.if %2 {
      %cst_10 = arith.constant 0.000000e+00 : f32
      %13 = vector.broadcast %cst_10 : f32 to vector<16x32xf32>
      %c0_11 = arith.constant 0 : index
      %c0_12 = arith.constant 0 : index
      %14 = vector.load %arg7[%c0_11, %c0_12] : memref<16x32xf32, #tpu.memory_space<vmem>>, vector<16x32xf32>
      tpu.vector_store %arg7[%c0_11, %c0_12], %13 {strides = array<i32>} : memref<16x32xf32, #tpu.memory_space<vmem>>, vector<16x32xf32>,
    } else {
    }
    %c0 = arith.constant 0 : index
    %c0_1 = arith.constant 0 : index
    %3 = vector.load %arg7[%c0, %c0_1] : memref<16x32xf32, #tpu.memory_space<vmem>>, vector<16x32xf32>
    %c0_2 = arith.constant 0 : index
    %c0_3 = arith.constant 0 : index
    %4 = vector.load %arg3[%c0_2, %c0_3] : memref<16x128xf32, #tpu.memory_space<vmem>>, vector<16x128xf32>
    %5 = arith.truncf %4 : vector<16x128xf32> to vector<16x128xbf16>
    %c0_4 = arith.constant 0 : index
    %c0_5 = arith.constant 0 : index
    %6 = vector.load %arg4[%c0_4, %c0_5] : memref<128x32xbf16, #tpu.memory_space<vmem>>, vector<128x32xbf16>
    %cst = arith.constant dense<0.000000e+00> : vector<16x32xf32>
    %7 = tpu.matmul %5, %6, %cst {dimension_numbers = #tpu.dot_dimension_numbers<[1], [0], [0], [1], [0, 0, 1, 1], [], []>} : vector<16x128xbf16>, vector<128x32xbf16>, vector<16x32xf32> -> vector<16x32xf32>
    %8 = arith.addf %3, %7 : vector<16x32xf32>
    %c0_6 = arith.constant 0 : index
    %c0_7 = arith.constant 0 : index
    %9 = vector.load %arg7[%c0_6, %c0_7] : memref<16x32xf32, #tpu.memory_space<vmem>>, vector<16x32xf32>
    tpu.vector_store %arg7[%c0_6, %c0_7], %8 {strides = array<i32>} : memref<16x32xf32, #tpu.memory_space<vmem>>, vector<16x32xf32>,
    %c0_i32_8 = arith.constant 0 : i32
    %10 = arith.cmpi eq, %arg2, %c0_i32_8 : i32
    %11 = arith.extui %10 : i1 to i32
    %c0_i32_9 = arith.constant 0 : i32
    %12 = arith.cmpi ne, %11, %c0_i32_9 : i32
    scf.if %12 {
      %c0_10 = arith.constant 0 : index
      %c0_11 = arith.constant 0 : index
      %13 = vector.load %arg7[%c0_10, %c0_11] : memref<16x32xf32, #tpu.memory_space<vmem>>, vector<16x32xf32>
      %c0_12 = arith.constant 0 : index
      %c0_13 = arith.constant 0 : index
      %14 = vector.load %arg5[%c0_12, %c0_13] : memref<1x32xf32, #tpu.memory_space<vmem>>, vector<1x32xf32>
      %15 = vector.broadcast %14 : vector<1x32xf32> to vector<16x32xf32>
      %16 = arith.addf %13, %15 : vector<16x32xf32>
      %c0_14 = arith.constant 0 : index
      %c0_15 = arith.constant 0 : index
      %17 = vector.load %arg6[%c0_14, %c0_15] : memref<16x32xf32, #tpu.memory_space<vmem>>, vector<16x32xf32>
      tpu.vector_store %arg6[%c0_14, %c0_15], %16 {strides = array<i32>} : memref<16x32xf32, #tpu.memory_space<vmem>>, vector<16x32xf32>,
    } else {
    }
    return
  }
  func.func @transform_0(%arg0: i32, %arg1: i32, %arg2: i32) -> (i32, i32) {
    %c0_i32 = arith.constant 0 : i32
    return %arg0, %arg2 : i32, i32
  }
  func.func @transform_1(%arg0: i32, %arg1: i32, %arg2: i32) -> (i32, i32) {
    %c0_i32 = arith.constant 0 : i32
    return %arg2, %arg1 : i32, i32
  }
  func.func @transform_2(%arg0: i32, %arg1: i32, %arg2: i32) -> (i32, i32) {
    %c0_i32 = arith.constant 0 : i32
    %c0_i32_0 = arith.constant 0 : i32
    return %c0_i32, %arg1 : i32, i32
  }
  func.func @transform_3(%arg0: i32, %arg1: i32, %arg2: i32) -> (i32, i32) {
    %c0_i32 = arith.constant 0 : i32
    return %arg0, %arg1 : i32, i32
  }
}

module attributes {stable_mosaic.version = 11 : i64} {
  func.func @_ln_linear_kernel(%arg0: i32, %arg1: i32, %arg2: memref<16x32xf32, #tpu.memory_space<vmem>>, %arg3: memref<1x32xf32, #tpu.memory_space<vmem>>, %arg4: memref<1x32xf32, #tpu.memory_space<vmem>>, %arg5: memref<32x128xbf16, #tpu.memory_space<vmem>>, %arg6: memref<1x128xf32, #tpu.memory_space<vmem>>, %arg7: memref<16x128xf32, #tpu.memory_space<vmem>>) attributes {dimension_semantics = [#tpu.dimension_semantics<parallel>, #tpu.dimension_semantics<parallel>], iteration_bounds = array<i64: 1, 1>, scalar_prefetch = 0 : i64, scratch_operands = 0 : i64, tpu.core_type = #tpu.core_type<tc>, window_params = [{transform_indices = @transform_0, window_bounds = array<i64: 16, 32>}, {pipeline_mode = #tpu.pipeline_mode<synchronous>, transform_indices = @transform_1, window_bounds = array<i64: 1, 32>}, {pipeline_mode = #tpu.pipeline_mode<synchronous>, transform_indices = @transform_2, window_bounds = array<i64: 1, 32>}, {transform_indices = @transform_3, window_bounds = array<i64: 32, 128>}, {transform_indices = @transform_4, window_bounds = array<i64: 1, 128>}, {transform_indices = @transform_5, window_bounds = array<i64: 16, 128>}]} {
    %c0 = arith.constant 0 : index
    %c0_0 = arith.constant 0 : index
    %0 = vector.load %arg2[%c0, %c0_0] : memref<16x32xf32, #tpu.memory_space<vmem>>, vector<16x32xf32>
    %cst = arith.constant dense<0.000000e+00> : vector<16xf32>
    %1 = vector.multi_reduction <add>, %0, %cst [1] : vector<16x32xf32> to vector<16xf32>
    %2 = vector.shape_cast %1 : vector<16xf32> to vector<16x1xf32>
    %cst_1 = arith.constant 3.200000e+01 : f32
    %3 = vector.broadcast %cst_1 : f32 to vector<16x1xf32>
    %4 = arith.divf %2, %3 : vector<16x1xf32>
    %5 = vector.broadcast %4 : vector<16x1xf32> to vector<16x32xf32>
    %6 = arith.subf %0, %5 : vector<16x32xf32>
    %7 = arith.mulf %6, %6 : vector<16x32xf32>
    %cst_2 = arith.constant dense<0.000000e+00> : vector<16xf32>
    %8 = vector.multi_reduction <add>, %7, %cst_2 [1] : vector<16x32xf32> to vector<16xf32>
    %9 = vector.shape_cast %8 : vector<16xf32> to vector<16x1xf32>
    %cst_3 = arith.constant 3.200000e+01 : f32
    %10 = vector.broadcast %cst_3 : f32 to vector<16x1xf32>
    %11 = arith.divf %9, %10 : vector<16x1xf32>
    %12 = vector.broadcast %4 : vector<16x1xf32> to vector<16x32xf32>
    %13 = arith.subf %0, %12 : vector<16x32xf32>
    %cst_4 = arith.constant 9.99999974E-6 : f32
    %14 = vector.broadcast %cst_4 : f32 to vector<16x1xf32>
    %15 = arith.addf %11, %14 : vector<16x1xf32>
    %16 = math.rsqrt %15 : vector<16x1xf32>
    %17 = vector.broadcast %16 : vector<16x1xf32> to vector<16x32xf32>
    %18 = arith.mulf %13, %17 : vector<16x32xf32>
    %c0_5 = arith.constant 0 : index
    %c0_6 = arith.constant 0 : index
    %19 = vector.load %arg3[%c0_5, %c0_6] : memref<1x32xf32, #tpu.memory_space<vmem>>, vector<1x32xf32>
    %20 = vector.broadcast %19 : vector<1x32xf32> to vector<16x32xf32>
    %21 = arith.mulf %18, %20 : vector<16x32xf32>
    %c0_7 = arith.constant 0 : index
    %c0_8 = arith.constant 0 : index
    %22 = vector.load %arg4[%c0_7, %c0_8] : memref<1x32xf32, #tpu.memory_space<vmem>>, vector<1x32xf32>
    %23 = vector.broadcast %22 : vector<1x32xf32> to vector<16x32xf32>
    %24 = arith.addf %21, %23 : vector<16x32xf32>
    %25 = arith.truncf %24 : vector<16x32xf32> to vector<16x32xbf16>
    %c0_9 = arith.constant 0 : index
    %c0_10 = arith.constant 0 : index
    %26 = vector.load %arg5[%c0_9, %c0_10] : memref<32x128xbf16, #tpu.memory_space<vmem>>, vector<32x128xbf16>
    %cst_11 = arith.constant dense<0.000000e+00> : vector<16x128xf32>
    %27 = tpu.matmul %25, %26, %cst_11 {dimension_numbers = #tpu.dot_dimension_numbers<[1], [0], [0], [1], [0, 0, 1, 1], [], []>} : vector<16x32xbf16>, vector<32x128xbf16>, vector<16x128xf32> -> vector<16x128xf32>
    %c0_12 = arith.constant 0 : index
    %c0_13 = arith.constant 0 : index
    %28 = vector.load %arg6[%c0_12, %c0_13] : memref<1x128xf32, #tpu.memory_space<vmem>>, vector<1x128xf32>
    %29 = vector.broadcast %28 : vector<1x128xf32> to vector<16x128xf32>
    %30 = arith.addf %27, %29 : vector<16x128xf32>
    %cst_14 = arith.constant 5.000000e-01 : f32
    %31 = vector.broadcast %cst_14 : f32 to vector<16x128xf32>
    %32 = arith.mulf %31, %30 : vector<16x128xf32>
    %cst_15 = arith.constant 0.707106769 : f32
    %33 = vector.broadcast %cst_15 : f32 to vector<16x128xf32>
    %34 = arith.mulf %30, %33 : vector<16x128xf32>
    %35 = math.erf %34 : vector<16x128xf32>
    %cst_16 = arith.constant 1.000000e+00 : f32
    %36 = vector.broadcast %cst_16 : f32 to vector<16x128xf32>
    %37 = arith.addf %36, %35 : vector<16x128xf32>
    %38 = arith.mulf %32, %37 : vector<16x128xf32>
    %c0_17 = arith.constant 0 : index
    %c0_18 = arith.constant 0 : index
    %39 = vector.load %arg7[%c0_17, %c0_18] : memref<16x128xf32, #tpu.memory_space<vmem>>, vector<16x128xf32>
    tpu.vector_store %arg7[%c0_17, %c0_18], %38 {strides = array<i32>} : memref<16x128xf32, #tpu.memory_space<vmem>>, vector<16x128xf32>,
    return
  }
  func.func @transform_0(%arg0: i32, %arg1: i32) -> (i32, i32) {
    %c0_i32 = arith.constant 0 : i32
    %c0_i32_0 = arith.constant 0 : i32
    return %arg0, %c0_i32 : i32, i32
  }
  func.func @transform_1(%arg0: i32, %arg1: i32) -> (i32, i32) {
    %c0_i32 = arith.constant 0 : i32
    %c0_i32_0 = arith.constant 0 : i32
    %c0_i32_1 = arith.constant 0 : i32
    return %c0_i32, %c0_i32_0 : i32, i32
  }
  func.func @transform_2(%arg0: i32, %arg1: i32) -> (i32, i32) {
    %c0_i32 = arith.constant 0 : i32
    %c0_i32_0 = arith.constant 0 : i32
    %c0_i32_1 = arith.constant 0 : i32
    return %c0_i32, %c0_i32_0 : i32, i32
  }
  func.func @transform_3(%arg0: i32, %arg1: i32) -> (i32, i32) {
    %c0_i32 = arith.constant 0 : i32
    %c0_i32_0 = arith.constant 0 : i32
    return %c0_i32, %arg1 : i32, i32
  }
  func.func @transform_4(%arg0: i32, %arg1: i32) -> (i32, i32) {
    %c0_i32 = arith.constant 0 : i32
    %c0_i32_0 = arith.constant 0 : i32
    return %c0_i32, %arg1 : i32, i32
  }
  func.func @transform_5(%arg0: i32, %arg1: i32) -> (i32, i32) {
    %c0_i32 = arith.constant 0 : i32
    return %arg0, %arg1 : i32, i32
  }
}

module attributes {stable_mosaic.version = 11 : i64} {
  func.func @_layernorm_kernel(%arg0: i32, %arg1: memref<16x32xf32, #tpu.memory_space<vmem>>, %arg2: memref<1x32xf32, #tpu.memory_space<vmem>>, %arg3: memref<1x32xf32, #tpu.memory_space<vmem>>, %arg4: memref<16x32xf32, #tpu.memory_space<vmem>>) attributes {dimension_semantics = [#tpu.dimension_semantics<parallel>], iteration_bounds = array<i64: 1>, scalar_prefetch = 0 : i64, scratch_operands = 0 : i64, tpu.core_type = #tpu.core_type<tc>, window_params = [{transform_indices = @transform_0, window_bounds = array<i64: 16, 32>}, {pipeline_mode = #tpu.pipeline_mode<synchronous>, transform_indices = @transform_1, window_bounds = array<i64: 1, 32>}, {pipeline_mode = #tpu.pipeline_mode<synchronous>, transform_indices = @transform_2, window_bounds = array<i64: 1, 32>}, {transform_indices = @transform_3, window_bounds = array<i64: 16, 32>}]} {
    %c0 = arith.constant 0 : index
    %c0_0 = arith.constant 0 : index
    %0 = vector.load %arg1[%c0, %c0_0] : memref<16x32xf32, #tpu.memory_space<vmem>>, vector<16x32xf32>
    %cst = arith.constant dense<0.000000e+00> : vector<16xf32>
    %1 = vector.multi_reduction <add>, %0, %cst [1] : vector<16x32xf32> to vector<16xf32>
    %2 = vector.shape_cast %1 : vector<16xf32> to vector<16x1xf32>
    %cst_1 = arith.constant 3.200000e+01 : f32
    %3 = vector.broadcast %cst_1 : f32 to vector<16x1xf32>
    %4 = arith.divf %2, %3 : vector<16x1xf32>
    %5 = vector.broadcast %4 : vector<16x1xf32> to vector<16x32xf32>
    %6 = arith.subf %0, %5 : vector<16x32xf32>
    %7 = arith.mulf %6, %6 : vector<16x32xf32>
    %cst_2 = arith.constant dense<0.000000e+00> : vector<16xf32>
    %8 = vector.multi_reduction <add>, %7, %cst_2 [1] : vector<16x32xf32> to vector<16xf32>
    %9 = vector.shape_cast %8 : vector<16xf32> to vector<16x1xf32>
    %cst_3 = arith.constant 3.200000e+01 : f32
    %10 = vector.broadcast %cst_3 : f32 to vector<16x1xf32>
    %11 = arith.divf %9, %10 : vector<16x1xf32>
    %12 = vector.broadcast %4 : vector<16x1xf32> to vector<16x32xf32>
    %13 = arith.subf %0, %12 : vector<16x32xf32>
    %cst_4 = arith.constant 9.99999974E-6 : f32
    %14 = vector.broadcast %cst_4 : f32 to vector<16x1xf32>
    %15 = arith.addf %11, %14 : vector<16x1xf32>
    %16 = math.rsqrt %15 : vector<16x1xf32>
    %17 = vector.broadcast %16 : vector<16x1xf32> to vector<16x32xf32>
    %18 = arith.mulf %13, %17 : vector<16x32xf32>
    %c0_5 = arith.constant 0 : index
    %c0_6 = arith.constant 0 : index
    %19 = vector.load %arg2[%c0_5, %c0_6] : memref<1x32xf32, #tpu.memory_space<vmem>>, vector<1x32xf32>
    %20 = vector.broadcast %19 : vector<1x32xf32> to vector<16x32xf32>
    %21 = arith.mulf %18, %20 : vector<16x32xf32>
    %c0_7 = arith.constant 0 : index
    %c0_8 = arith.constant 0 : index
    %22 = vector.load %arg3[%c0_7, %c0_8] : memref<1x32xf32, #tpu.memory_space<vmem>>, vector<1x32xf32>
    %23 = vector.broadcast %22 : vector<1x32xf32> to vector<16x32xf32>
    %24 = arith.addf %21, %23 : vector<16x32xf32>
    %c0_9 = arith.constant 0 : index
    %c0_10 = arith.constant 0 : index
    %25 = vector.load %arg4[%c0_9, %c0_10] : memref<16x32xf32, #tpu.memory_space<vmem>>, vector<16x32xf32>
    tpu.vector_store %arg4[%c0_9, %c0_10], %24 {strides = array<i32>} : memref<16x32xf32, #tpu.memory_space<vmem>>, vector<16x32xf32>,
    return
  }
  func.func @transform_0(%arg0: i32) -> (i32, i32) {
    %c0_i32 = arith.constant 0 : i32
    %c0_i32_0 = arith.constant 0 : i32
    return %arg0, %c0_i32 : i32, i32
  }
  func.func @transform_1(%arg0: i32) -> (i32, i32) {
    %c0_i32 = arith.constant 0 : i32
    %c0_i32_0 = arith.constant 0 : i32
    %c0_i32_1 = arith.constant 0 : i32
    return %c0_i32, %c0_i32_0 : i32, i32
  }
  func.func @transform_2(%arg0: i32) -> (i32, i32) {
    %c0_i32 = arith.constant 0 : i32
    %c0_i32_0 = arith.constant 0 : i32
    %c0_i32_1 = arith.constant 0 : i32
    return %c0_i32, %c0_i32_0 : i32, i32
  }
  func.func @transform_3(%arg0: i32) -> (i32, i32) {
    %c0_i32 = arith.constant 0 : i32
    %c0_i32_0 = arith.constant 0 : i32
    return %arg0, %c0_i32 : i32, i32
  }
}

module attributes {stable_mosaic.version = 11 : i64} {
  func.func @_linear_kernel(%arg0: i32, %arg1: i32, %arg2: i32, %arg3: memref<24x32xf32, #tpu.memory_space<vmem>>, %arg4: memref<32x64xbf16, #tpu.memory_space<vmem>>, %arg5: memref<1x64xf32, #tpu.memory_space<vmem>>, %arg6: memref<24x64xf32, #tpu.memory_space<vmem>>, %arg7: memref<24x64xf32, #tpu.memory_space<vmem>>) attributes {dimension_semantics = [#tpu.dimension_semantics<parallel>, #tpu.dimension_semantics<parallel>, #tpu.dimension_semantics<arbitrary>], iteration_bounds = array<i64: 1, 1, 1>, scalar_prefetch = 0 : i64, scratch_operands = 1 : i64, tpu.core_type = #tpu.core_type<tc>, window_params = [{transform_indices = @transform_0, window_bounds = array<i64: 24, 32>}, {transform_indices = @transform_1, window_bounds = array<i64: 32, 64>}, {transform_indices = @transform_2, window_bounds = array<i64: 1, 64>}, {transform_indices = @transform_3, window_bounds = array<i64: 24, 64>}]} {
    %c0_i32 = arith.constant 0 : i32
    %0 = arith.cmpi eq, %arg2, %c0_i32 : i32
    %1 = arith.extui %0 : i1 to i32
    %c0_i32_0 = arith.constant 0 : i32
    %2 = arith.cmpi ne, %1, %c0_i32_0 : i32
    scf.if %2 {
      %cst_10 = arith.constant 0.000000e+00 : f32
      %13 = vector.broadcast %cst_10 : f32 to vector<24x64xf32>
      %c0_11 = arith.constant 0 : index
      %c0_12 = arith.constant 0 : index
      %14 = vector.load %arg7[%c0_11, %c0_12] : memref<24x64xf32, #tpu.memory_space<vmem>>, vector<24x64xf32>
      tpu.vector_store %arg7[%c0_11, %c0_12], %13 {strides = array<i32>} : memref<24x64xf32, #tpu.memory_space<vmem>>, vector<24x64xf32>,
    } else {
    }
    %c0 = arith.constant 0 : index
    %c0_1 = arith.constant 0 : index
    %3 = vector.load %arg7[%c0, %c0_1] : memref<24x64xf32, #tpu.memory_space<vmem>>, vector<24x64xf32>
    %c0_2 = arith.constant 0 : index
    %c0_3 = arith.constant 0 : index
    %4 = vector.load %arg3[%c0_2, %c0_3] : memref<24x32xf32, #tpu.memory_space<vmem>>, vector<24x32xf32>
    %5 = arith.truncf %4 : vector<24x32xf32> to vector<24x32xbf16>
    %c0_4 = arith.constant 0 : index
    %c0_5 = arith.constant 0 : index
    %6 = vector.load %arg4[%c0_4, %c0_5] : memref<32x64xbf16, #tpu.memory_space<vmem>>, vector<32x64xbf16>
    %cst = arith.constant dense<0.000000e+00> : vector<24x64xf32>
    %7 = tpu.matmul %5, %6, %cst {dimension_numbers = #tpu.dot_dimension_numbers<[1], [0], [0], [1], [0, 0, 1, 1], [], []>} : vector<24x32xbf16>, vector<32x64xbf16>, vector<24x64xf32> -> vector<24x64xf32>
    %8 = arith.addf %3, %7 : vector<24x64xf32>
    %c0_6 = arith.constant 0 : index
    %c0_7 = arith.constant 0 : index
    %9 = vector.load %arg7[%c0_6, %c0_7] : memref<24x64xf32, #tpu.memory_space<vmem>>, vector<24x64xf32>
    tpu.vector_store %arg7[%c0_6, %c0_7], %8 {strides = array<i32>} : memref<24x64xf32, #tpu.memory_space<vmem>>, vector<24x64xf32>,
    %c0_i32_8 = arith.constant 0 : i32
    %10 = arith.cmpi eq, %arg2, %c0_i32_8 : i32
    %11 = arith.extui %10 : i1 to i32
    %c0_i32_9 = arith.constant 0 : i32
    %12 = arith.cmpi ne, %11, %c0_i32_9 : i32
    scf.if %12 {
      %c0_10 = arith.constant 0 : index
      %c0_11 = arith.constant 0 : index
      %13 = vector.load %arg7[%c0_10, %c0_11] : memref<24x64xf32, #tpu.memory_space<vmem>>, vector<24x64xf32>
      %c0_12 = arith.constant 0 : index
      %c0_13 = arith.constant 0 : index
      %14 = vector.load %arg5[%c0_12, %c0_13] : memref<1x64xf32, #tpu.memory_space<vmem>>, vector<1x64xf32>
      %15 = vector.broadcast %14 : vector<1x64xf32> to vector<24x64xf32>
      %16 = arith.addf %13, %15 : vector<24x64xf32>
      %c0_14 = arith.constant 0 : index
      %c0_15 = arith.constant 0 : index
      %17 = vector.load %arg6[%c0_14, %c0_15] : memref<24x64xf32, #tpu.memory_space<vmem>>, vector<24x64xf32>
      tpu.vector_store %arg6[%c0_14, %c0_15], %16 {strides = array<i32>} : memref<24x64xf32, #tpu.memory_space<vmem>>, vector<24x64xf32>,
    } else {
    }
    return
  }
  func.func @transform_0(%arg0: i32, %arg1: i32, %arg2: i32) -> (i32, i32) {
    %c0_i32 = arith.constant 0 : i32
    return %arg0, %arg2 : i32, i32
  }
  func.func @transform_1(%arg0: i32, %arg1: i32, %arg2: i32) -> (i32, i32) {
    %c0_i32 = arith.constant 0 : i32
    return %arg2, %arg1 : i32, i32
  }
  func.func @transform_2(%arg0: i32, %arg1: i32, %arg2: i32) -> (i32, i32) {
    %c0_i32 = arith.constant 0 : i32
    %c0_i32_0 = arith.constant 0 : i32
    return %c0_i32, %arg1 : i32, i32
  }
  func.func @transform_3(%arg0: i32, %arg1: i32, %arg2: i32) -> (i32, i32) {
    %c0_i32 = arith.constant 0 : i32
    return %arg0, %arg1 : i32, i32
  }
}

module attributes {stable_mosaic.version = 11 : i64} {
  func.func @_linear_kernel(%arg0: i32, %arg1: i32, %arg2: i32, %arg3: memref<8x32xf32, #tpu.memory_space<vmem>>, %arg4: memref<32x32xbf16, #tpu.memory_space<vmem>>, %arg5: memref<1x32xf32, #tpu.memory_space<vmem>>, %arg6: memref<8x32xf32, #tpu.memory_space<vmem>>, %arg7: memref<8x32xf32, #tpu.memory_space<vmem>>) attributes {dimension_semantics = [#tpu.dimension_semantics<parallel>, #tpu.dimension_semantics<parallel>, #tpu.dimension_semantics<arbitrary>], iteration_bounds = array<i64: 1, 1, 1>, scalar_prefetch = 0 : i64, scratch_operands = 1 : i64, tpu.core_type = #tpu.core_type<tc>, window_params = [{transform_indices = @transform_0, window_bounds = array<i64: 8, 32>}, {transform_indices = @transform_1, window_bounds = array<i64: 32, 32>}, {transform_indices = @transform_2, window_bounds = array<i64: 1, 32>}, {transform_indices = @transform_3, window_bounds = array<i64: 8, 32>}]} {
    %c0_i32 = arith.constant 0 : i32
    %0 = arith.cmpi eq, %arg2, %c0_i32 : i32
    %1 = arith.extui %0 : i1 to i32
    %c0_i32_0 = arith.constant 0 : i32
    %2 = arith.cmpi ne, %1, %c0_i32_0 : i32
    scf.if %2 {
      %cst_10 = arith.constant 0.000000e+00 : f32
      %13 = vector.broadcast %cst_10 : f32 to vector<8x32xf32>
      %c0_11 = arith.constant 0 : index
      %c0_12 = arith.constant 0 : index
      %14 = vector.load %arg7[%c0_11, %c0_12] : memref<8x32xf32, #tpu.memory_space<vmem>>, vector<8x32xf32>
      tpu.vector_store %arg7[%c0_11, %c0_12], %13 {strides = array<i32>} : memref<8x32xf32, #tpu.memory_space<vmem>>, vector<8x32xf32>,
    } else {
    }
    %c0 = arith.constant 0 : index
    %c0_1 = arith.constant 0 : index
    %3 = vector.load %arg7[%c0, %c0_1] : memref<8x32xf32, #tpu.memory_space<vmem>>, vector<8x32xf32>
    %c0_2 = arith.constant 0 : index
    %c0_3 = arith.constant 0 : index
    %4 = vector.load %arg3[%c0_2, %c0_3] : memref<8x32xf32, #tpu.memory_space<vmem>>, vector<8x32xf32>
    %5 = arith.truncf %4 : vector<8x32xf32> to vector<8x32xbf16>
    %c0_4 = arith.constant 0 : index
    %c0_5 = arith.constant 0 : index
    %6 = vector.load %arg4[%c0_4, %c0_5] : memref<32x32xbf16, #tpu.memory_space<vmem>>, vector<32x32xbf16>
    %cst = arith.constant dense<0.000000e+00> : vector<8x32xf32>
    %7 = tpu.matmul %5, %6, %cst {dimension_numbers = #tpu.dot_dimension_numbers<[1], [0], [0], [1], [0, 0, 1, 1], [], []>} : vector<8x32xbf16>, vector<32x32xbf16>, vector<8x32xf32> -> vector<8x32xf32>
    %8 = arith.addf %3, %7 : vector<8x32xf32>
    %c0_6 = arith.constant 0 : index
    %c0_7 = arith.constant 0 : index
    %9 = vector.load %arg7[%c0_6, %c0_7] : memref<8x32xf32, #tpu.memory_space<vmem>>, vector<8x32xf32>
    tpu.vector_store %arg7[%c0_6, %c0_7], %8 {strides = array<i32>} : memref<8x32xf32, #tpu.memory_space<vmem>>, vector<8x32xf32>,
    %c0_i32_8 = arith.constant 0 : i32
    %10 = arith.cmpi eq, %arg2, %c0_i32_8 : i32
    %11 = arith.extui %10 : i1 to i32
    %c0_i32_9 = arith.constant 0 : i32
    %12 = arith.cmpi ne, %11, %c0_i32_9 : i32
    scf.if %12 {
      %c0_10 = arith.constant 0 : index
      %c0_11 = arith.constant 0 : index
      %13 = vector.load %arg7[%c0_10, %c0_11] : memref<8x32xf32, #tpu.memory_space<vmem>>, vector<8x32xf32>
      %c0_12 = arith.constant 0 : index
      %c0_13 = arith.constant 0 : index
      %14 = vector.load %arg5[%c0_12, %c0_13] : memref<1x32xf32, #tpu.memory_space<vmem>>, vector<1x32xf32>
      %15 = vector.broadcast %14 : vector<1x32xf32> to vector<8x32xf32>
      %16 = arith.addf %13, %15 : vector<8x32xf32>
      %c0_14 = arith.constant 0 : index
      %c0_15 = arith.constant 0 : index
      %17 = vector.load %arg6[%c0_14, %c0_15] : memref<8x32xf32, #tpu.memory_space<vmem>>, vector<8x32xf32>
      tpu.vector_store %arg6[%c0_14, %c0_15], %16 {strides = array<i32>} : memref<8x32xf32, #tpu.memory_space<vmem>>, vector<8x32xf32>,
    } else {
    }
    return
  }
  func.func @transform_0(%arg0: i32, %arg1: i32, %arg2: i32) -> (i32, i32) {
    %c0_i32 = arith.constant 0 : i32
    return %arg0, %arg2 : i32, i32
  }
  func.func @transform_1(%arg0: i32, %arg1: i32, %arg2: i32) -> (i32, i32) {
    %c0_i32 = arith.constant 0 : i32
    return %arg2, %arg1 : i32, i32
  }
  func.func @transform_2(%arg0: i32, %arg1: i32, %arg2: i32) -> (i32, i32) {
    %c0_i32 = arith.constant 0 : i32
    %c0_i32_0 = arith.constant 0 : i32
    return %c0_i32, %arg1 : i32, i32
  }
  func.func @transform_3(%arg0: i32, %arg1: i32, %arg2: i32) -> (i32, i32) {
    %c0_i32 = arith.constant 0 : i32
    return %arg0, %arg1 : i32, i32
  }
}

module attributes {stable_mosaic.version = 11 : i64} {
  func.func @_gru_kernel(%arg0: i32, %arg1: memref<8x32xf32, #tpu.memory_space<vmem>>, %arg2: memref<8x32xf32, #tpu.memory_space<vmem>>, %arg3: memref<32x96xbf16, #tpu.memory_space<vmem>>, %arg4: memref<32x96xbf16, #tpu.memory_space<vmem>>, %arg5: memref<1x96xf32, #tpu.memory_space<vmem>>, %arg6: memref<1x96xf32, #tpu.memory_space<vmem>>, %arg7: memref<8x32xf32, #tpu.memory_space<vmem>>) attributes {dimension_semantics = [#tpu.dimension_semantics<parallel>], iteration_bounds = array<i64: 1>, scalar_prefetch = 0 : i64, scratch_operands = 0 : i64, tpu.core_type = #tpu.core_type<tc>, window_params = [{transform_indices = @transform_0, window_bounds = array<i64: 8, 32>}, {transform_indices = @transform_1, window_bounds = array<i64: 8, 32>}, {pipeline_mode = #tpu.pipeline_mode<synchronous>, transform_indices = @transform_2, window_bounds = array<i64: 32, 96>}, {pipeline_mode = #tpu.pipeline_mode<synchronous>, transform_indices = @transform_3, window_bounds = array<i64: 32, 96>}, {pipeline_mode = #tpu.pipeline_mode<synchronous>, transform_indices = @transform_4, window_bounds = array<i64: 1, 96>}, {pipeline_mode = #tpu.pipeline_mode<synchronous>, transform_indices = @transform_5, window_bounds = array<i64: 1, 96>}, {transform_indices = @transform_6, window_bounds = array<i64: 8, 32>}]} {
    %c0 = arith.constant 0 : index
    %c0_0 = arith.constant 0 : index
    %0 = vector.load %arg1[%c0, %c0_0] : memref<8x32xf32, #tpu.memory_space<vmem>>, vector<8x32xf32>
    %c0_1 = arith.constant 0 : index
    %c0_2 = arith.constant 0 : index
    %1 = vector.load %arg2[%c0_1, %c0_2] : memref<8x32xf32, #tpu.memory_space<vmem>>, vector<8x32xf32>
    %2 = arith.truncf %0 : vector<8x32xf32> to vector<8x32xbf16>
    %c0_3 = arith.constant 0 : index
    %c0_4 = arith.constant 0 : index
    %3 = vector.load %arg3[%c0_3, %c0_4] : memref<32x96xbf16, #tpu.memory_space<vmem>>, vector<32x96xbf16>
    %cst = arith.constant dense<0.000000e+00> : vector<8x96xf32>
    %4 = tpu.matmul %2, %3, %cst {dimension_numbers = #tpu.dot_dimension_numbers<[1], [0], [0], [1], [0, 0, 1, 1], [], []>} : vector<8x32xbf16>, vector<32x96xbf16>, vector<8x96xf32> -> vector<8x96xf32>
    %c0_5 = arith.constant 0 : index
    %c0_6 = arith.constant 0 : index
    %5 = vector.load %arg5[%c0_5, %c0_6] : memref<1x96xf32, #tpu.memory_space<vmem>>, vector<1x96xf32>
    %6 = vector.broadcast %5 : vector<1x96xf32> to vector<8x96xf32>
    %7 = arith.addf %4, %6 : vector<8x96xf32>
    %8 = arith.truncf %1 : vector<8x32xf32> to vector<8x32xbf16>
    %c0_7 = arith.constant 0 : index
    %c0_8 = arith.constant 0 : index
    %9 = vector.load %arg4[%c0_7, %c0_8] : memref<32x96xbf16, #tpu.memory_space<vmem>>, vector<32x96xbf16>
    %cst_9 = arith.constant dense<0.000000e+00> : vector<8x96xf32>
    %10 = tpu.matmul %8, %9, %cst_9 {dimension_numbers = #tpu.dot_dimension_numbers<[1], [0], [0], [1], [0, 0, 1, 1], [], []>} : vector<8x32xbf16>, vector<32x96xbf16>, vector<8x96xf32> -> vector<8x96xf32>
    %c0_10 = arith.constant 0 : index
    %c0_11 = arith.constant 0 : index
    %11 = vector.load %arg6[%c0_10, %c0_11] : memref<1x96xf32, #tpu.memory_space<vmem>>, vector<1x96xf32>
    %12 = vector.broadcast %11 : vector<1x96xf32> to vector<8x96xf32>
    %13 = arith.addf %10, %12 : vector<8x96xf32>
    %14 = vector.extract_strided_slice %7 {offsets = [0, 0], sizes = [8, 32], strides = [1, 1]} : vector<8x96xf32> to vector<8x32xf32>
    %15 = vector.extract_strided_slice %13 {offsets = [0, 0], sizes = [8, 32], strides = [1, 1]} : vector<8x96xf32> to vector<8x32xf32>
    %16 = arith.addf %14, %15 : vector<8x32xf32>
    %17 = arith.negf %16 : vector<8x32xf32>
    %18 = math.exp %17 : vector<8x32xf32>
    %cst_12 = arith.constant 1.000000e+00 : f32
    %19 = vector.broadcast %cst_12 : f32 to vector<8x32xf32>
    %20 = arith.addf %19, %18 : vector<8x32xf32>
    %21 = arith.divf %19, %20 : vector<8x32xf32>
    %22 = vector.extract_strided_slice %7 {offsets = [0, 32], sizes = [8, 32], strides = [1, 1]} : vector<8x96xf32> to vector<8x32xf32>
    %23 = vector.extract_strided_slice %13 {offsets = [0, 32], sizes = [8, 32], strides = [1, 1]} : vector<8x96xf32> to vector<8x32xf32>
    %24 = arith.addf %22, %23 : vector<8x32xf32>
    %25 = arith.negf %24 : vector<8x32xf32>
    %26 = math.exp %25 : vector<8x32xf32>
    %cst_13 = arith.constant 1.000000e+00 : f32
    %27 = vector.broadcast %cst_13 : f32 to vector<8x32xf32>
    %28 = arith.addf %27, %26 : vector<8x32xf32>
    %29 = arith.divf %27, %28 : vector<8x32xf32>
    %30 = vector.extract_strided_slice %7 {offsets = [0, 64], sizes = [8, 32], strides = [1, 1]} : vector<8x96xf32> to vector<8x32xf32>
    %31 = vector.extract_strided_slice %13 {offsets = [0, 64], sizes = [8, 32], strides = [1, 1]} : vector<8x96xf32> to vector<8x32xf32>
    %32 = arith.mulf %21, %31 : vector<8x32xf32>
    %33 = arith.addf %30, %32 : vector<8x32xf32>
    %34 = math.tanh %33 : vector<8x32xf32>
    %cst_14 = arith.constant 1.000000e+00 : f32
    %35 = vector.broadcast %cst_14 : f32 to vector<8x32xf32>
    %36 = arith.subf %35, %29 : vector<8x32xf32>
    %37 = arith.mulf %36, %34 : vector<8x32xf32>
    %38 = arith.mulf %29, %1 : vector<8x32xf32>
    %39 = arith.addf %37, %38 : vector<8x32xf32>
    %c0_15 = arith.constant 0 : index
    %c0_16 = arith.constant 0 : index
    %40 = vector.load %arg7[%c0_15, %c0_16] : memref<8x32xf32, #tpu.memory_space<vmem>>, vector<8x32xf32>
    tpu.vector_store %arg7[%c0_15, %c0_16], %39 {strides = array<i32>} : memref<8x32xf32, #tpu.memory_space<vmem>>, vector<8x32xf32>,
    return
  }
  func.func @transform_0(%arg0: i32) -> (i32, i32) {
    %c0_i32 = arith.constant 0 : i32
    %c0_i32_0 = arith.constant 0 : i32
    return %arg0, %c0_i32 : i32, i32
  }
  func.func @transform_1(%arg0: i32) -> (i32, i32) {
    %c0_i32 = arith.constant 0 : i32
    %c0_i32_0 = arith.constant 0 : i32
    return %arg0, %c0_i32 : i32, i32
  }
  func.func @transform_2(%arg0: i32) -> (i32, i32) {
    %c0_i32 = arith.constant 0 : i32
    %c0_i32_0 = arith.constant 0 : i32
    %c0_i32_1 = arith.constant 0 : i32
    return %c0_i32, %c0_i32_0 : i32, i32
  }
  func.func @transform_3(%arg0: i32) -> (i32, i32) {
    %c0_i32 = arith.constant 0 : i32
    %c0_i32_0 = arith.constant 0 : i32
    %c0_i32_1 = arith.constant 0 : i32
    return %c0_i32, %c0_i32_0 : i32, i32
  }
  func.func @transform_4(%arg0: i32) -> (i32, i32) {
    %c0_i32 = arith.constant 0 : i32
    %c0_i32_0 = arith.constant 0 : i32
    %c0_i32_1 = arith.constant 0 : i32
    return %c0_i32, %c0_i32_0 : i32, i32
  }
  func.func @transform_5(%arg0: i32) -> (i32, i32) {
    %c0_i32 = arith.constant 0 : i32
    %c0_i32_0 = arith.constant 0 : i32
    %c0_i32_1 = arith.constant 0 : i32
    return %c0_i32, %c0_i32_0 : i32, i32
  }
  func.func @transform_6(%arg0: i32) -> (i32, i32) {
    %c0_i32 = arith.constant 0 : i32
    %c0_i32_0 = arith.constant 0 : i32
    return %arg0, %c0_i32 : i32, i32
  }
}

module attributes {stable_mosaic.version = 11 : i64} {
  func.func @_attn_kernel(%arg0: i32, %arg1: i32, %arg2: memref<1x4x32xf32, #tpu.memory_space<vmem>>, %arg3: memref<1x12x32xf32, #tpu.memory_space<vmem>>, %arg4: memref<1x12x32xf32, #tpu.memory_space<vmem>>, %arg5: memref<1x4x12xf32, #tpu.memory_space<vmem>>, %arg6: memref<1x4x32xf32, #tpu.memory_space<vmem>>) attributes {dimension_semantics = [#tpu.dimension_semantics<parallel>, #tpu.dimension_semantics<parallel>], iteration_bounds = array<i64: 2, 1>, scalar_prefetch = 0 : i64, scratch_operands = 0 : i64, tpu.core_type = #tpu.core_type<tc>, window_params = [{transform_indices = @transform_0, window_bounds = array<i64: 1, 4, 32>}, {transform_indices = @transform_1, window_bounds = array<i64: 1, 12, 32>}, {transform_indices = @transform_2, window_bounds = array<i64: 1, 12, 32>}, {transform_indices = @transform_3, window_bounds = array<i64: 1, 4, 12>}, {transform_indices = @transform_4, window_bounds = array<i64: 1, 4, 32>}]} {
    %c0 = arith.constant 0 : index
    %c0_0 = arith.constant 0 : index
    %c0_1 = arith.constant 0 : index
    %0 = vector.load %arg2[%c0, %c0_0, %c0_1] : memref<1x4x32xf32, #tpu.memory_space<vmem>>, vector<1x4x32xf32>
    %1 = vector.shape_cast %0 : vector<1x4x32xf32> to vector<4x32xf32>
    %c0_2 = arith.constant 0 : index
    %c0_3 = arith.constant 0 : index
    %c0_4 = arith.constant 0 : index
    %2 = vector.load %arg3[%c0_2, %c0_3, %c0_4] : memref<1x12x32xf32, #tpu.memory_space<vmem>>, vector<1x12x32xf32>
    %3 = vector.shape_cast %2 : vector<1x12x32xf32> to vector<12x32xf32>
    %c0_5 = arith.constant 0 : index
    %c0_6 = arith.constant 0 : index
    %c0_7 = arith.constant 0 : index
    %4 = vector.load %arg4[%c0_5, %c0_6, %c0_7] : memref<1x12x32xf32, #tpu.memory_space<vmem>>, vector<1x12x32xf32>
    %5 = vector.shape_cast %4 : vector<1x12x32xf32> to vector<12x32xf32>
    %c0_8 = arith.constant 0 : index
    %c0_9 = arith.constant 0 : index
    %c0_10 = arith.constant 0 : index
    %6 = vector.load %arg5[%c0_8, %c0_9, %c0_10] : memref<1x4x12xf32, #tpu.memory_space<vmem>>, vector<1x4x12xf32>
    %7 = vector.shape_cast %6 : vector<1x4x12xf32> to vector<4x12xf32>
    %cst = arith.constant 5.000000e-01 : f32
    %8 = vector.broadcast %cst : f32 to vector<4x12xf32>
    %9 = arith.cmpf ogt, %7, %8 : vector<4x12xf32>
    %10 = vector.extract_strided_slice %1 {offsets = [0, 0], sizes = [4, 8], strides = [1, 1]} : vector<4x32xf32> to vector<4x8xf32>
    %11 = arith.truncf %10 : vector<4x8xf32> to vector<4x8xbf16>
    %12 = vector.extract_strided_slice %3 {offsets = [0, 0], sizes = [12, 8], strides = [1, 1]} : vector<12x32xf32> to vector<12x8xf32>
    %13 = arith.truncf %12 : vector<12x8xf32> to vector<12x8xbf16>
    %14 = vector.extract_strided_slice %5 {offsets = [0, 0], sizes = [12, 8], strides = [1, 1]} : vector<12x32xf32> to vector<12x8xf32>
    %15 = arith.truncf %14 : vector<12x8xf32> to vector<12x8xbf16>
    %cst_11 = arith.constant dense<0.000000e+00> : vector<4x12xf32>
    %16 = tpu.matmul %11, %13, %cst_11 {dimension_numbers = #tpu.dot_dimension_numbers<[1], [1], [0], [0], [0, 0, 1, 0], [], []>} : vector<4x8xbf16>, vector<12x8xbf16>, vector<4x12xf32> -> vector<4x12xf32>
    %cst_12 = arith.constant 0.353553385 : f32
    %17 = vector.broadcast %cst_12 : f32 to vector<4x12xf32>
    %18 = arith.mulf %16, %17 : vector<4x12xf32>
    %cst_13 = arith.constant -3.40282347E+38 : f32
    %19 = vector.broadcast %cst_13 : f32 to vector<4x12xf32>
    %20 = arith.select %9, %18, %19 : vector<4x12xi1>, vector<4x12xf32>
    %cst_14 = arith.constant dense<0xFF800000> : vector<4xf32>
    %21 = vector.multi_reduction <maximumf>, %20, %cst_14 [1] : vector<4x12xf32> to vector<4xf32>
    %22 = vector.shape_cast %21 : vector<4xf32> to vector<4x1xf32>
    %23 = vector.broadcast %22 : vector<4x1xf32> to vector<4x12xf32>
    %24 = arith.subf %20, %23 : vector<4x12xf32>
    %25 = math.exp %24 : vector<4x12xf32>
    %cst_15 = arith.constant dense<0.000000e+00> : vector<4xf32>
    %26 = vector.multi_reduction <add>, %25, %cst_15 [1] : vector<4x12xf32> to vector<4xf32>
    %27 = vector.shape_cast %26 : vector<4xf32> to vector<4x1xf32>
    %28 = tpu.reciprocal %27 {approx = true} : vector<4x1xf32> -> vector<4x1xf32>
    %29 = vector.broadcast %28 : vector<4x1xf32> to vector<4x12xf32>
    %30 = arith.mulf %25, %29 : vector<4x12xf32>
    %31 = arith.truncf %30 : vector<4x12xf32> to vector<4x12xbf16>
    %cst_16 = arith.constant dense<0.000000e+00> : vector<4x8xf32>
    %32 = tpu.matmul %31, %15, %cst_16 {dimension_numbers = #tpu.dot_dimension_numbers<[1], [0], [0], [1], [0, 0, 1, 1], [], []>} : vector<4x12xbf16>, vector<12x8xbf16>, vector<4x8xf32> -> vector<4x8xf32>
    %33 = vector.extract_strided_slice %1 {offsets = [0, 8], sizes = [4, 8], strides = [1, 1]} : vector<4x32xf32> to vector<4x8xf32>
    %34 = arith.truncf %33 : vector<4x8xf32> to vector<4x8xbf16>
    %35 = vector.extract_strided_slice %3 {offsets = [0, 8], sizes = [12, 8], strides = [1, 1]} : vector<12x32xf32> to vector<12x8xf32>
    %36 = arith.truncf %35 : vector<12x8xf32> to vector<12x8xbf16>
    %37 = vector.extract_strided_slice %5 {offsets = [0, 8], sizes = [12, 8], strides = [1, 1]} : vector<12x32xf32> to vector<12x8xf32>
    %38 = arith.truncf %37 : vector<12x8xf32> to vector<12x8xbf16>
    %cst_17 = arith.constant dense<0.000000e+00> : vector<4x12xf32>
    %39 = tpu.matmul %34, %36, %cst_17 {dimension_numbers = #tpu.dot_dimension_numbers<[1], [1], [0], [0], [0, 0, 1, 0], [], []>} : vector<4x8xbf16>, vector<12x8xbf16>, vector<4x12xf32> -> vector<4x12xf32>
    %cst_18 = arith.constant 0.353553385 : f32
    %40 = vector.broadcast %cst_18 : f32 to vector<4x12xf32>
    %41 = arith.mulf %39, %40 : vector<4x12xf32>
    %cst_19 = arith.constant -3.40282347E+38 : f32
    %42 = vector.broadcast %cst_19 : f32 to vector<4x12xf32>
    %43 = arith.select %9, %41, %42 : vector<4x12xi1>, vector<4x12xf32>
    %cst_20 = arith.constant dense<0xFF800000> : vector<4xf32>
    %44 = vector.multi_reduction <maximumf>, %43, %cst_20 [1] : vector<4x12xf32> to vector<4xf32>
    %45 = vector.shape_cast %44 : vector<4xf32> to vector<4x1xf32>
    %46 = vector.broadcast %45 : vector<4x1xf32> to vector<4x12xf32>
    %47 = arith.subf %43, %46 : vector<4x12xf32>
    %48 = math.exp %47 : vector<4x12xf32>
    %cst_21 = arith.constant dense<0.000000e+00> : vector<4xf32>
    %49 = vector.multi_reduction <add>, %48, %cst_21 [1] : vector<4x12xf32> to vector<4xf32>
    %50 = vector.shape_cast %49 : vector<4xf32> to vector<4x1xf32>
    %51 = tpu.reciprocal %50 {approx = true} : vector<4x1xf32> -> vector<4x1xf32>
    %52 = vector.broadcast %51 : vector<4x1xf32> to vector<4x12xf32>
    %53 = arith.mulf %48, %52 : vector<4x12xf32>
    %54 = arith.truncf %53 : vector<4x12xf32> to vector<4x12xbf16>
    %cst_22 = arith.constant dense<0.000000e+00> : vector<4x8xf32>
    %55 = tpu.matmul %54, %38, %cst_22 {dimension_numbers = #tpu.dot_dimension_numbers<[1], [0], [0], [1], [0, 0, 1, 1], [], []>} : vector<4x12xbf16>, vector<12x8xbf16>, vector<4x8xf32> -> vector<4x8xf32>
    %56 = vector.extract_strided_slice %1 {offsets = [0, 16], sizes = [4, 8], strides = [1, 1]} : vector<4x32xf32> to vector<4x8xf32>
    %57 = arith.truncf %56 : vector<4x8xf32> to vector<4x8xbf16>
    %58 = vector.extract_strided_slice %3 {offsets = [0, 16], sizes = [12, 8], strides = [1, 1]} : vector<12x32xf32> to vector<12x8xf32>
    %59 = arith.truncf %58 : vector<12x8xf32> to vector<12x8xbf16>
    %60 = vector.extract_strided_slice %5 {offsets = [0, 16], sizes = [12, 8], strides = [1, 1]} : vector<12x32xf32> to vector<12x8xf32>
    %61 = arith.truncf %60 : vector<12x8xf32> to vector<12x8xbf16>
    %cst_23 = arith.constant dense<0.000000e+00> : vector<4x12xf32>
    %62 = tpu.matmul %57, %59, %cst_23 {dimension_numbers = #tpu.dot_dimension_numbers<[1], [1], [0], [0], [0, 0, 1, 0], [], []>} : vector<4x8xbf16>, vector<12x8xbf16>, vector<4x12xf32> -> vector<4x12xf32>
    %cst_24 = arith.constant 0.353553385 : f32
    %63 = vector.broadcast %cst_24 : f32 to vector<4x12xf32>
    %64 = arith.mulf %62, %63 : vector<4x12xf32>
    %cst_25 = arith.constant -3.40282347E+38 : f32
    %65 = vector.broadcast %cst_25 : f32 to vector<4x12xf32>
    %66 = arith.select %9, %64, %65 : vector<4x12xi1>, vector<4x12xf32>
    %cst_26 = arith.constant dense<0xFF800000> : vector<4xf32>
    %67 = vector.multi_reduction <maximumf>, %66, %cst_26 [1] : vector<4x12xf32> to vector<4xf32>
    %68 = vector.shape_cast %67 : vector<4xf32> to vector<4x1xf32>
    %69 = vector.broadcast %68 : vector<4x1xf32> to vector<4x12xf32>
    %70 = arith.subf %66, %69 : vector<4x12xf32>
    %71 = math.exp %70 : vector<4x12xf32>
    %cst_27 = arith.constant dense<0.000000e+00> : vector<4xf32>
    %72 = vector.multi_reduction <add>, %71, %cst_27 [1] : vector<4x12xf32> to vector<4xf32>
    %73 = vector.shape_cast %72 : vector<4xf32> to vector<4x1xf32>
    %74 = tpu.reciprocal %73 {approx = true} : vector<4x1xf32> -> vector<4x1xf32>
    %75 = vector.broadcast %74 : vector<4x1xf32> to vector<4x12xf32>
    %76 = arith.mulf %71, %75 : vector<4x12xf32>
    %77 = arith.truncf %76 : vector<4x12xf32> to vector<4x12xbf16>
    %cst_28 = arith.constant dense<0.000000e+00> : vector<4x8xf32>
    %78 = tpu.matmul %77, %61, %cst_28 {dimension_numbers = #tpu.dot_dimension_numbers<[1], [0], [0], [1], [0, 0, 1, 1], [], []>} : vector<4x12xbf16>, vector<12x8xbf16>, vector<4x8xf32> -> vector<4x8xf32>
    %79 = vector.extract_strided_slice %1 {offsets = [0, 24], sizes = [4, 8], strides = [1, 1]} : vector<4x32xf32> to vector<4x8xf32>
    %80 = arith.truncf %79 : vector<4x8xf32> to vector<4x8xbf16>
    %81 = vector.extract_strided_slice %3 {offsets = [0, 24], sizes = [12, 8], strides = [1, 1]} : vector<12x32xf32> to vector<12x8xf32>
    %82 = arith.truncf %81 : vector<12x8xf32> to vector<12x8xbf16>
    %83 = vector.extract_strided_slice %5 {offsets = [0, 24], sizes = [12, 8], strides = [1, 1]} : vector<12x32xf32> to vector<12x8xf32>
    %84 = arith.truncf %83 : vector<12x8xf32> to vector<12x8xbf16>
    %cst_29 = arith.constant dense<0.000000e+00> : vector<4x12xf32>
    %85 = tpu.matmul %80, %82, %cst_29 {dimension_numbers = #tpu.dot_dimension_numbers<[1], [1], [0], [0], [0, 0, 1, 0], [], []>} : vector<4x8xbf16>, vector<12x8xbf16>, vector<4x12xf32> -> vector<4x12xf32>
    %cst_30 = arith.constant 0.353553385 : f32
    %86 = vector.broadcast %cst_30 : f32 to vector<4x12xf32>
    %87 = arith.mulf %85, %86 : vector<4x12xf32>
    %cst_31 = arith.constant -3.40282347E+38 : f32
    %88 = vector.broadcast %cst_31 : f32 to vector<4x12xf32>
    %89 = arith.select %9, %87, %88 : vector<4x12xi1>, vector<4x12xf32>
    %cst_32 = arith.constant dense<0xFF800000> : vector<4xf32>
    %90 = vector.multi_reduction <maximumf>, %89, %cst_32 [1] : vector<4x12xf32> to vector<4xf32>
    %91 = vector.shape_cast %90 : vector<4xf32> to vector<4x1xf32>
    %92 = vector.broadcast %91 : vector<4x1xf32> to vector<4x12xf32>
    %93 = arith.subf %89, %92 : vector<4x12xf32>
    %94 = math.exp %93 : vector<4x12xf32>
    %cst_33 = arith.constant dense<0.000000e+00> : vector<4xf32>
    %95 = vector.multi_reduction <add>, %94, %cst_33 [1] : vector<4x12xf32> to vector<4xf32>
    %96 = vector.shape_cast %95 : vector<4xf32> to vector<4x1xf32>
    %97 = tpu.reciprocal %96 {approx = true} : vector<4x1xf32> -> vector<4x1xf32>
    %98 = vector.broadcast %97 : vector<4x1xf32> to vector<4x12xf32>
    %99 = arith.mulf %94, %98 : vector<4x12xf32>
    %100 = arith.truncf %99 : vector<4x12xf32> to vector<4x12xbf16>
    %cst_34 = arith.constant dense<0.000000e+00> : vector<4x8xf32>
    %101 = tpu.matmul %100, %84, %cst_34 {dimension_numbers = #tpu.dot_dimension_numbers<[1], [0], [0], [1], [0, 0, 1, 1], [], []>} : vector<4x12xbf16>, vector<12x8xbf16>, vector<4x8xf32> -> vector<4x8xf32>
    %102 = tpu.concatenate %32, %55, %78, %101 in 1 : vector<4x8xf32>, vector<4x8xf32>, vector<4x8xf32>, vector<4x8xf32> -> vector<4x32xf32>
    %c0_35 = arith.constant 0 : index
    %c0_36 = arith.constant 0 : index
    %c0_37 = arith.constant 0 : index
    %103 = vector.load %arg6[%c0_35, %c0_36, %c0_37] : memref<1x4x32xf32, #tpu.memory_space<vmem>>, vector<1x4x32xf32>
    %104 = vector.shape_cast %103 : vector<1x4x32xf32> to vector<4x32xf32>
    %105 = vector.shape_cast %102 : vector<4x32xf32> to vector<1x4x32xf32>
    tpu.vector_store %arg6[%c0_35, %c0_36, %c0_37], %105 {strides = array<i32>} : memref<1x4x32xf32, #tpu.memory_space<vmem>>, vector<1x4x32xf32>,
    return
  }
  func.func @transform_0(%arg0: i32, %arg1: i32) -> (i32, i32, i32) {
    %c0_i32 = arith.constant 0 : i32
    %c0_i32_0 = arith.constant 0 : i32
    return %arg0, %arg1, %c0_i32 : i32, i32, i32
  }
  func.func @transform_1(%arg0: i32, %arg1: i32) -> (i32, i32, i32) {
    %c0_i32 = arith.constant 0 : i32
    %c0_i32_0 = arith.constant 0 : i32
    %c0_i32_1 = arith.constant 0 : i32
    return %arg0, %c0_i32, %c0_i32_0 : i32, i32, i32
  }
  func.func @transform_2(%arg0: i32, %arg1: i32) -> (i32, i32, i32) {
    %c0_i32 = arith.constant 0 : i32
    %c0_i32_0 = arith.constant 0 : i32
    %c0_i32_1 = arith.constant 0 : i32
    return %arg0, %c0_i32, %c0_i32_0 : i32, i32, i32
  }
  func.func @transform_3(%arg0: i32, %arg1: i32) -> (i32, i32, i32) {
    %c0_i32 = arith.constant 0 : i32
    %c0_i32_0 = arith.constant 0 : i32
    return %arg0, %arg1, %c0_i32 : i32, i32, i32
  }
  func.func @transform_4(%arg0: i32, %arg1: i32) -> (i32, i32, i32) {
    %c0_i32 = arith.constant 0 : i32
    %c0_i32_0 = arith.constant 0 : i32
    return %arg0, %arg1, %c0_i32 : i32, i32, i32
  }
}

module attributes {stable_mosaic.version = 11 : i64} {
  func.func @_linear_kernel(%arg0: i32, %arg1: i32, %arg2: i32, %arg3: memref<8x128xf32, #tpu.memory_space<vmem>>, %arg4: memref<128x32xbf16, #tpu.memory_space<vmem>>, %arg5: memref<1x32xf32, #tpu.memory_space<vmem>>, %arg6: memref<8x32xf32, #tpu.memory_space<vmem>>, %arg7: memref<8x32xf32, #tpu.memory_space<vmem>>) attributes {dimension_semantics = [#tpu.dimension_semantics<parallel>, #tpu.dimension_semantics<parallel>, #tpu.dimension_semantics<arbitrary>], iteration_bounds = array<i64: 1, 1, 1>, scalar_prefetch = 0 : i64, scratch_operands = 1 : i64, tpu.core_type = #tpu.core_type<tc>, window_params = [{transform_indices = @transform_0, window_bounds = array<i64: 8, 128>}, {transform_indices = @transform_1, window_bounds = array<i64: 128, 32>}, {transform_indices = @transform_2, window_bounds = array<i64: 1, 32>}, {transform_indices = @transform_3, window_bounds = array<i64: 8, 32>}]} {
    %c0_i32 = arith.constant 0 : i32
    %0 = arith.cmpi eq, %arg2, %c0_i32 : i32
    %1 = arith.extui %0 : i1 to i32
    %c0_i32_0 = arith.constant 0 : i32
    %2 = arith.cmpi ne, %1, %c0_i32_0 : i32
    scf.if %2 {
      %cst_10 = arith.constant 0.000000e+00 : f32
      %13 = vector.broadcast %cst_10 : f32 to vector<8x32xf32>
      %c0_11 = arith.constant 0 : index
      %c0_12 = arith.constant 0 : index
      %14 = vector.load %arg7[%c0_11, %c0_12] : memref<8x32xf32, #tpu.memory_space<vmem>>, vector<8x32xf32>
      tpu.vector_store %arg7[%c0_11, %c0_12], %13 {strides = array<i32>} : memref<8x32xf32, #tpu.memory_space<vmem>>, vector<8x32xf32>,
    } else {
    }
    %c0 = arith.constant 0 : index
    %c0_1 = arith.constant 0 : index
    %3 = vector.load %arg7[%c0, %c0_1] : memref<8x32xf32, #tpu.memory_space<vmem>>, vector<8x32xf32>
    %c0_2 = arith.constant 0 : index
    %c0_3 = arith.constant 0 : index
    %4 = vector.load %arg3[%c0_2, %c0_3] : memref<8x128xf32, #tpu.memory_space<vmem>>, vector<8x128xf32>
    %5 = arith.truncf %4 : vector<8x128xf32> to vector<8x128xbf16>
    %c0_4 = arith.constant 0 : index
    %c0_5 = arith.constant 0 : index
    %6 = vector.load %arg4[%c0_4, %c0_5] : memref<128x32xbf16, #tpu.memory_space<vmem>>, vector<128x32xbf16>
    %cst = arith.constant dense<0.000000e+00> : vector<8x32xf32>
    %7 = tpu.matmul %5, %6, %cst {dimension_numbers = #tpu.dot_dimension_numbers<[1], [0], [0], [1], [0, 0, 1, 1], [], []>} : vector<8x128xbf16>, vector<128x32xbf16>, vector<8x32xf32> -> vector<8x32xf32>
    %8 = arith.addf %3, %7 : vector<8x32xf32>
    %c0_6 = arith.constant 0 : index
    %c0_7 = arith.constant 0 : index
    %9 = vector.load %arg7[%c0_6, %c0_7] : memref<8x32xf32, #tpu.memory_space<vmem>>, vector<8x32xf32>
    tpu.vector_store %arg7[%c0_6, %c0_7], %8 {strides = array<i32>} : memref<8x32xf32, #tpu.memory_space<vmem>>, vector<8x32xf32>,
    %c0_i32_8 = arith.constant 0 : i32
    %10 = arith.cmpi eq, %arg2, %c0_i32_8 : i32
    %11 = arith.extui %10 : i1 to i32
    %c0_i32_9 = arith.constant 0 : i32
    %12 = arith.cmpi ne, %11, %c0_i32_9 : i32
    scf.if %12 {
      %c0_10 = arith.constant 0 : index
      %c0_11 = arith.constant 0 : index
      %13 = vector.load %arg7[%c0_10, %c0_11] : memref<8x32xf32, #tpu.memory_space<vmem>>, vector<8x32xf32>
      %c0_12 = arith.constant 0 : index
      %c0_13 = arith.constant 0 : index
      %14 = vector.load %arg5[%c0_12, %c0_13] : memref<1x32xf32, #tpu.memory_space<vmem>>, vector<1x32xf32>
      %15 = vector.broadcast %14 : vector<1x32xf32> to vector<8x32xf32>
      %16 = arith.addf %13, %15 : vector<8x32xf32>
      %c0_14 = arith.constant 0 : index
      %c0_15 = arith.constant 0 : index
      %17 = vector.load %arg6[%c0_14, %c0_15] : memref<8x32xf32, #tpu.memory_space<vmem>>, vector<8x32xf32>
      tpu.vector_store %arg6[%c0_14, %c0_15], %16 {strides = array<i32>} : memref<8x32xf32, #tpu.memory_space<vmem>>, vector<8x32xf32>,
    } else {
    }
    return
  }
  func.func @transform_0(%arg0: i32, %arg1: i32, %arg2: i32) -> (i32, i32) {
    %c0_i32 = arith.constant 0 : i32
    return %arg0, %arg2 : i32, i32
  }
  func.func @transform_1(%arg0: i32, %arg1: i32, %arg2: i32) -> (i32, i32) {
    %c0_i32 = arith.constant 0 : i32
    return %arg2, %arg1 : i32, i32
  }
  func.func @transform_2(%arg0: i32, %arg1: i32, %arg2: i32) -> (i32, i32) {
    %c0_i32 = arith.constant 0 : i32
    %c0_i32_0 = arith.constant 0 : i32
    return %c0_i32, %arg1 : i32, i32
  }
  func.func @transform_3(%arg0: i32, %arg1: i32, %arg2: i32) -> (i32, i32) {
    %c0_i32 = arith.constant 0 : i32
    return %arg0, %arg1 : i32, i32
  }
}

module attributes {stable_mosaic.version = 11 : i64} {
  func.func @_ln_linear_kernel(%arg0: i32, %arg1: i32, %arg2: memref<8x32xf32, #tpu.memory_space<vmem>>, %arg3: memref<1x32xf32, #tpu.memory_space<vmem>>, %arg4: memref<1x32xf32, #tpu.memory_space<vmem>>, %arg5: memref<32x128xbf16, #tpu.memory_space<vmem>>, %arg6: memref<1x128xf32, #tpu.memory_space<vmem>>, %arg7: memref<8x128xf32, #tpu.memory_space<vmem>>) attributes {dimension_semantics = [#tpu.dimension_semantics<parallel>, #tpu.dimension_semantics<parallel>], iteration_bounds = array<i64: 1, 1>, scalar_prefetch = 0 : i64, scratch_operands = 0 : i64, tpu.core_type = #tpu.core_type<tc>, window_params = [{transform_indices = @transform_0, window_bounds = array<i64: 8, 32>}, {pipeline_mode = #tpu.pipeline_mode<synchronous>, transform_indices = @transform_1, window_bounds = array<i64: 1, 32>}, {pipeline_mode = #tpu.pipeline_mode<synchronous>, transform_indices = @transform_2, window_bounds = array<i64: 1, 32>}, {transform_indices = @transform_3, window_bounds = array<i64: 32, 128>}, {transform_indices = @transform_4, window_bounds = array<i64: 1, 128>}, {transform_indices = @transform_5, window_bounds = array<i64: 8, 128>}]} {
    %c0 = arith.constant 0 : index
    %c0_0 = arith.constant 0 : index
    %0 = vector.load %arg2[%c0, %c0_0] : memref<8x32xf32, #tpu.memory_space<vmem>>, vector<8x32xf32>
    %cst = arith.constant dense<0.000000e+00> : vector<8xf32>
    %1 = vector.multi_reduction <add>, %0, %cst [1] : vector<8x32xf32> to vector<8xf32>
    %2 = vector.shape_cast %1 : vector<8xf32> to vector<8x1xf32>
    %cst_1 = arith.constant 3.200000e+01 : f32
    %3 = vector.broadcast %cst_1 : f32 to vector<8x1xf32>
    %4 = arith.divf %2, %3 : vector<8x1xf32>
    %5 = vector.broadcast %4 : vector<8x1xf32> to vector<8x32xf32>
    %6 = arith.subf %0, %5 : vector<8x32xf32>
    %7 = arith.mulf %6, %6 : vector<8x32xf32>
    %cst_2 = arith.constant dense<0.000000e+00> : vector<8xf32>
    %8 = vector.multi_reduction <add>, %7, %cst_2 [1] : vector<8x32xf32> to vector<8xf32>
    %9 = vector.shape_cast %8 : vector<8xf32> to vector<8x1xf32>
    %cst_3 = arith.constant 3.200000e+01 : f32
    %10 = vector.broadcast %cst_3 : f32 to vector<8x1xf32>
    %11 = arith.divf %9, %10 : vector<8x1xf32>
    %12 = vector.broadcast %4 : vector<8x1xf32> to vector<8x32xf32>
    %13 = arith.subf %0, %12 : vector<8x32xf32>
    %cst_4 = arith.constant 9.99999974E-6 : f32
    %14 = vector.broadcast %cst_4 : f32 to vector<8x1xf32>
    %15 = arith.addf %11, %14 : vector<8x1xf32>
    %16 = math.rsqrt %15 : vector<8x1xf32>
    %17 = vector.broadcast %16 : vector<8x1xf32> to vector<8x32xf32>
    %18 = arith.mulf %13, %17 : vector<8x32xf32>
    %c0_5 = arith.constant 0 : index
    %c0_6 = arith.constant 0 : index
    %19 = vector.load %arg3[%c0_5, %c0_6] : memref<1x32xf32, #tpu.memory_space<vmem>>, vector<1x32xf32>
    %20 = vector.broadcast %19 : vector<1x32xf32> to vector<8x32xf32>
    %21 = arith.mulf %18, %20 : vector<8x32xf32>
    %c0_7 = arith.constant 0 : index
    %c0_8 = arith.constant 0 : index
    %22 = vector.load %arg4[%c0_7, %c0_8] : memref<1x32xf32, #tpu.memory_space<vmem>>, vector<1x32xf32>
    %23 = vector.broadcast %22 : vector<1x32xf32> to vector<8x32xf32>
    %24 = arith.addf %21, %23 : vector<8x32xf32>
    %25 = arith.truncf %24 : vector<8x32xf32> to vector<8x32xbf16>
    %c0_9 = arith.constant 0 : index
    %c0_10 = arith.constant 0 : index
    %26 = vector.load %arg5[%c0_9, %c0_10] : memref<32x128xbf16, #tpu.memory_space<vmem>>, vector<32x128xbf16>
    %cst_11 = arith.constant dense<0.000000e+00> : vector<8x128xf32>
    %27 = tpu.matmul %25, %26, %cst_11 {dimension_numbers = #tpu.dot_dimension_numbers<[1], [0], [0], [1], [0, 0, 1, 1], [], []>} : vector<8x32xbf16>, vector<32x128xbf16>, vector<8x128xf32> -> vector<8x128xf32>
    %c0_12 = arith.constant 0 : index
    %c0_13 = arith.constant 0 : index
    %28 = vector.load %arg6[%c0_12, %c0_13] : memref<1x128xf32, #tpu.memory_space<vmem>>, vector<1x128xf32>
    %29 = vector.broadcast %28 : vector<1x128xf32> to vector<8x128xf32>
    %30 = arith.addf %27, %29 : vector<8x128xf32>
    %cst_14 = arith.constant 5.000000e-01 : f32
    %31 = vector.broadcast %cst_14 : f32 to vector<8x128xf32>
    %32 = arith.mulf %31, %30 : vector<8x128xf32>
    %cst_15 = arith.constant 0.707106769 : f32
    %33 = vector.broadcast %cst_15 : f32 to vector<8x128xf32>
    %34 = arith.mulf %30, %33 : vector<8x128xf32>
    %35 = math.erf %34 : vector<8x128xf32>
    %cst_16 = arith.constant 1.000000e+00 : f32
    %36 = vector.broadcast %cst_16 : f32 to vector<8x128xf32>
    %37 = arith.addf %36, %35 : vector<8x128xf32>
    %38 = arith.mulf %32, %37 : vector<8x128xf32>
    %c0_17 = arith.constant 0 : index
    %c0_18 = arith.constant 0 : index
    %39 = vector.load %arg7[%c0_17, %c0_18] : memref<8x128xf32, #tpu.memory_space<vmem>>, vector<8x128xf32>
    tpu.vector_store %arg7[%c0_17, %c0_18], %38 {strides = array<i32>} : memref<8x128xf32, #tpu.memory_space<vmem>>, vector<8x128xf32>,
    return
  }
  func.func @transform_0(%arg0: i32, %arg1: i32) -> (i32, i32) {
    %c0_i32 = arith.constant 0 : i32
    %c0_i32_0 = arith.constant 0 : i32
    return %arg0, %c0_i32 : i32, i32
  }
  func.func @transform_1(%arg0: i32, %arg1: i32) -> (i32, i32) {
    %c0_i32 = arith.constant 0 : i32
    %c0_i32_0 = arith.constant 0 : i32
    %c0_i32_1 = arith.constant 0 : i32
    return %c0_i32, %c0_i32_0 : i32, i32
  }
  func.func @transform_2(%arg0: i32, %arg1: i32) -> (i32, i32) {
    %c0_i32 = arith.constant 0 : i32
    %c0_i32_0 = arith.constant 0 : i32
    %c0_i32_1 = arith.constant 0 : i32
    return %c0_i32, %c0_i32_0 : i32, i32
  }
  func.func @transform_3(%arg0: i32, %arg1: i32) -> (i32, i32) {
    %c0_i32 = arith.constant 0 : i32
    %c0_i32_0 = arith.constant 0 : i32
    return %c0_i32, %arg1 : i32, i32
  }
  func.func @transform_4(%arg0: i32, %arg1: i32) -> (i32, i32) {
    %c0_i32 = arith.constant 0 : i32
    %c0_i32_0 = arith.constant 0 : i32
    return %c0_i32, %arg1 : i32, i32
  }
  func.func @transform_5(%arg0: i32, %arg1: i32) -> (i32, i32) {
    %c0_i32 = arith.constant 0 : i32
    return %arg0, %arg1 : i32, i32
  }
}

</mosaic_0001>

<llo_original>
// kernel: memformer_forward.26
$region0: #{memformer_forward.26}
  #allocation0 [shape = 'u32[]', space=smem, size = 0x4, offset = 0x4, fixed_abs, tag = 'smem constant byte address 0x4 - core index']
  #allocation1 [shape = 'u32[72,128]{1,0:T(1,128)}', space=vmem, size = 0x9000, scoped, tag = 'internal scratch']
  %s0 = inlined_call_operand.vmem [shape: f32[16,32], index: 0, kind: input, shape index: {}]
  %s1 = inlined_call_operand.vmem [shape: f32[1,32], index: 1, kind: input, shape index: {}]
  %s2 = inlined_call_operand.vmem [shape: f32[1,32], index: 2, kind: input, shape index: {}]
  %s3 = inlined_call_operand.vmem [shape: bf16[32,96], index: 3, kind: input, shape index: {}]
  %s4 = inlined_call_operand.vmem [shape: f32[1,96], index: 4, kind: input, shape index: {}]
  %s5 = inlined_call_operand.vmem [shape: f32[16,96], index: 5, kind: output, shape index: {}]
  %s6 = sld [smem:[#allocation0]]
  $region30: #{memformer_forward.26} parent=0
    _
  %s8 = ssub.s32 1, %s6
  %s9 = scalar_select 0, %s8, %s6
  // Predicated region
  $region2: #{memformer_forward.26} parent=0 // pred_check
    _
  $region3: #{memformer_forward.26} parent=0 // pred_check_branch
    %11 = sbr.rel (0) target = $region5
  $region4: #{memformer_forward.26} parent=0 // pred_region
    _
  $region5: #{memformer_forward.26} parent=0 // pred_fallthru
    _
  // Predicated region
  $region6: #{memformer_forward.26} parent=0 // pred_check
    _
  $region7: #{memformer_forward.26} parent=0 // pred_check_branch
    %13 = sbr.rel (0) target = $region9
  $region8: #{memformer_forward.26} parent=0 // pred_region
    _
  $region9: #{memformer_forward.26} parent=0 // pred_fallthru
    _
  // Predicated region
  $region10: #{memformer_forward.26} parent=0 // pred_check
    _
  $region11: #{memformer_forward.26} parent=0 // pred_check_branch
    %15 = sbr.rel (0) target = $region13
  $region12: #{memformer_forward.26} parent=0 // pred_region
    _
  $region13: #{memformer_forward.26} parent=0 // pred_fallthru
    _
  // Predicated region
  $region14: #{memformer_forward.26} parent=0 // pred_check
    _
  $region15: #{memformer_forward.26} parent=0 // pred_check_branch
    %17 = sbr.rel (0) target = $region17
  $region16: #{memformer_forward.26} parent=0 // pred_region
    _
  $region17: #{memformer_forward.26} parent=0 // pred_fallthru
    _
  // Predicated region
  $region18: #{memformer_forward.26} parent=0 // pred_check
    _
  $region19: #{memformer_forward.26} parent=0 // pred_check_branch
    %19 = sbr.rel (0) target = $region21
  $region20: #{memformer_forward.26} parent=0 // pred_region
    _
  $region21: #{memformer_forward.26} parent=0 // pred_fallthru
    _
  %v21 = vld [vmem:[%s0] sm:$0xff]
  %v22 = vld [vmem:[%s0 + $0x8] sm:$0xff]
  %vm23 = vcmask 261120
  %v24 = vsel %vm23, %v21, 0.0
  %25 = vadd.xlane.f32.xlu0 %v24
  %v26 = vpop.xlane.xlu0 %25
  %v27 = vsel %vm23, %v22, 0.0
  %28 = vadd.xlane.f32.xlu0 %v27
  %v29 = vpop.xlane.xlu0 %28
  %v30 = vrcp.pop 32.0
  %v31 = vmul.f32 32.0, %v30
  %v32 = vsub.f32 1.0, %v31
  %v33 = vmul.f32 %v30, %v32
  %v34 = vadd.f32 %v30, %v33
  %vm35 = vweird.f32 %v30
  %v36 = vsel %vm35, %v30, %v34
  %v37 = vmul.f32 %v26, %v36
  %v38 = vmul.f32 %v29, %v36
  %v39 = vsub.f32 %v21, %v37
  %v40 = vsub.f32 %v22, %v38
  %v41 = vmul.f32 %v39, %v39
  %v42 = vmul.f32 %v40, %v40
  %v43 = vsel %vm23, %v41, 0.0
  %44 = vadd.xlane.f32.xlu0 %v43
  %v45 = vpop.xlane.xlu0 %44
  %v46 = vsel %vm23, %v42, 0.0
  %47 = vadd.xlane.f32.xlu0 %v46
  %v48 = vpop.xlane.xlu0 %47
  %v49 = vmul.f32 %v45, %v36
  %v50 = vmul.f32 %v48, %v36
  %v51 = vadd.f32 %v49, 1e-05
  %v52 = vadd.f32 %v50, 1e-05
  %v53 = vrsqrt.pop %v51
  %v54 = vmul.f32 %v53, %v51
  %v55 = vmul.f32 %v54, %v53
  %v56 = vmul.f32 0.5, %v55
  %v57 = vsub.f32 1.5, %v56
  %v58 = vmul.f32 %v53, %v57
  %vm59 = vweird.f32 %v51
  %vm60 = vweird.f32 %v53
  %vm61 = vmor %vm59, %vm60
  %v62 = vsel %vm61, %v53, %v58
  %v63 = vrsqrt.pop %v52
  %v64 = vmul.f32 %v63, %v52
  %v65 = vmul.f32 %v64, %v63
  %v66 = vmul.f32 0.5, %v65
  %v67 = vsub.f32 1.5, %v66
  %v68 = vmul.f32 %v63, %v67
  %vm69 = vweird.f32 %v52
  %vm70 = vweird.f32 %v63
  %vm71 = vmor %vm69, %vm70
  %v72 = vsel %vm71, %v63, %v68
  %v73 = vmul.f32 %v39, %v62
  %v74 = vmul.f32 %v40, %v72
  %v75 = vld [vmem:[%s1] sm:$0x1]
  %v77 = vperm.slane %v75, 0
  %v79 = vmul.f32 %v73, %v77
  %v80 = vmul.f32 %v74, %v77
  %v81 = vld [vmem:[%s2] sm:$0x1]
  %v83 = vperm.slane %v81, 0
  %v85 = vadd.f32 %v79, %v83
  %v86 = vadd.f32 %v80, %v83
  %v87 = vpack.c.bf16 %v86, %v85
  %v88 = vld [vmem:[%s3] sm:$0xf]
  %v89 = vld [vmem:[%s3 + $0x4] sm:$0xf]
  %v90 = vld [vmem:[%s3 + $0x8] sm:$0xf]
  %v91 = vld [vmem:[%s3 + $0xc] sm:$0xf]
  %v92 = vld [vmem:[%s4] sm:$0x1]
  %v94 = vperm.slane %v92, 0
  %v100 = vunpack.c.l.b16 %v88
  %v101 = vunpack.c.l.b16 %v89
  %v102 = vunpack.c.l.b16 %v90
  %v103 = vunpack.c.l.b16 %v91
  %v104 = vpack.c.b16 %v101, %v100
  %v105 = vpack.c.b16 %v103, %v102
  %v109 = vsel %vm23, %v87, 0
  %111 = vmatpush.bf16.msra.mxu0 0
  %112 = vmatpush.bf16.msra.mxu0 0
  %113 = vmatpush.bf16.msra.mxu0 0
  %114 = vmatpush.bf16.msra.mxu0 0
  %115 = vmatpush.bf16.msra.mxu0 0
  %116 = vmatpush.bf16.msra.mxu0 0
  %117 = vmatpush.bf16.msra.mxu0 %v105
  %118 = vmatpush.bf16.msra.mxu0 %v104
  %119 = vmatmul.bf16.gmra.mxu0 %v109
  %v120 = vpop.f32.mrf.mxu0
  %v121 = vadd.f32 %v94, %v120
  %v122 = vpop.f32.mrf.mxu0
  %v123 = vadd.f32 %v94, %v122
  %124 = vdwg.mxu0
  %vm125 = vcmask 785408
  %126 = vst.msk [vmem:[%s5] sm:$0xff] %vm125, %v121
  %127 = vst.msk [vmem:[%s5 + $0x8] sm:$0xff] %vm125, %v123
  // Predicated region
  $region22: #{memformer_forward.26} parent=0 // pred_check
    _
  $region23: #{memformer_forward.26} parent=0 // pred_check_branch
    %129 = sbr.rel (0) target = $region25
  $region24: #{memformer_forward.26} parent=0 // pred_region
    _
  $region25: #{memformer_forward.26} parent=0 // pred_fallthru
    _
  // Predicated region
  $region26: #{memformer_forward.26} parent=0 // pred_check
    _
  $region27: #{memformer_forward.26} parent=0 // pred_check_branch
    %131 = sbr.rel (0) target = $region29
  $region28: #{memformer_forward.26} parent=0 // pred_region
    _
  $region29: #{memformer_forward.26} parent=0 // pred_fallthru
    _

// kernel: memformer_forward.28
$region0: #{memformer_forward.28}
  #allocation0 [shape = 'u32[]', space=smem, size = 0x4, offset = 0x4, fixed_abs, tag = 'smem constant byte address 0x4 - core index']
  #allocation1 [shape = 'u32[72,128]{1,0:T(1,128)}', space=vmem, size = 0x9000, scoped, tag = 'internal scratch']
  #allocation2 [shape = 'f32[16,32]{1,0:T(8,128)}', space=vmem, size = 0x2000, scoped, tag = 'scratch operand']
  %s0 = inlined_call_operand.vmem [shape: f32[16,32], index: 0, kind: input, shape index: {}]
  %s1 = inlined_call_operand.vmem [shape: bf16[32,32], index: 1, kind: input, shape index: {}]
  %s2 = inlined_call_operand.vmem [shape: f32[1,32], index: 2, kind: input, shape index: {}]
  %s3 = inlined_call_operand.vmem [shape: f32[16,32], index: 3, kind: output, shape index: {}]
  %s4 = sld [smem:[#allocation0]]
  $region30: #{memformer_forward.28} parent=0
    _
  %s6 = ssub.s32 1, %s4
  %s7 = scalar_select 0, %s6, %s4
  // Predicated region
  $region2: #{memformer_forward.28} parent=0 // pred_check
    _
  $region3: #{memformer_forward.28} parent=0 // pred_check_branch
    %9 = sbr.rel (0) target = $region5
  $region4: #{memformer_forward.28} parent=0 // pred_region
    _
  $region5: #{memformer_forward.28} parent=0 // pred_fallthru
    _
  // Predicated region
  $region6: #{memformer_forward.28} parent=0 // pred_check
    _
  $region7: #{memformer_forward.28} parent=0 // pred_check_branch
    %11 = sbr.rel (0) target = $region9
  $region8: #{memformer_forward.28} parent=0 // pred_region
    _
  $region9: #{memformer_forward.28} parent=0 // pred_fallthru
    _
  // Predicated region
  $region10: #{memformer_forward.28} parent=0 // pred_check
    _
  $region11: #{memformer_forward.28} parent=0 // pred_check_branch
    %13 = sbr.rel (0) target = $region13
  $region12: #{memformer_forward.28} parent=0 // pred_region
    _
  $region13: #{memformer_forward.28} parent=0 // pred_fallthru
    _
  %p15 = scmp.eq.s32.totalorder 0, 0
  // Predicated region
  $region14: #{memformer_forward.28} parent=0 // pred_check
    %p16 = pneg %p15
  $region15: #{memformer_forward.28} parent=0 // pred_check_branch
    %18 = sbr.rel (%p16) target = $region17
  $region16: #{memformer_forward.28} parent=0 // pred_region
    %vm19 = vcmask 261120
    %20 = vst.msk [vmem:[#allocation2] sm:$0xff] %vm19, 0.0
    %21 = vst.msk [vmem:[#allocation2 + $0x8] sm:$0xff] %vm19, 0.0
  $region17: #{memformer_forward.28} parent=0 // pred_fallthru
    _
  %v22 = vld [vmem:[#allocation2] sm:$0xff]
  %v23 = vld [vmem:[#allocation2 + $0x8] sm:$0xff]
  %v24 = vld [vmem:[%s0] sm:$0xff]
  %v25 = vld [vmem:[%s0 + $0x8] sm:$0xff]
  %v26 = vpack.c.bf16 %v25, %v24
  %v27 = vld [vmem:[%s1] sm:$0xf]
  %v28 = vld [vmem:[%s1 + $0x4] sm:$0xf]
  %v29 = vld [vmem:[%s1 + $0x8] sm:$0xf]
  %v30 = vld [vmem:[%s1 + $0xc] sm:$0xf]
  %v35 = vunpack.c.l.b16 %v27
  %v36 = vunpack.c.l.b16 %v28
  %v37 = vunpack.c.l.b16 %v29
  %v38 = vunpack.c.l.b16 %v30
  %v39 = vpack.c.b16 %v36, %v35
  %v40 = vpack.c.b16 %v38, %v37
  %vm43 = vcmask 261120
  %v45 = vsel %vm43, %v26, 0
  %47 = vmatpush.bf16.msra.mxu0 0
  %48 = vmatpush.bf16.msra.mxu0 0
  %49 = vmatpush.bf16.msra.mxu0 0
  %50 = vmatpush.bf16.msra.mxu0 0
  %51 = vmatpush.bf16.msra.mxu0 0
  %52 = vmatpush.bf16.msra.mxu0 0
  %53 = vmatpush.bf16.msra.mxu0 %v40
  %54 = vmatpush.bf16.msra.mxu0 %v39
  %55 = vmatmul.bf16.gmra.mxu0 %v45
  %v56 = vpop.f32.mrf.mxu0
  %v57 = vadd.f32 0.0, %v56
  %v58 = vpop.f32.mrf.mxu0
  %v59 = vadd.f32 0.0, %v58
  %60 = vdwg.mxu0
  %v61 = vadd.f32 %v22, %v57
  %v62 = vadd.f32 %v23, %v59
  %63 = vst.msk [vmem:[#allocation2] sm:$0xff] %vm43, %v61
  %64 = vst.msk [vmem:[#allocation2 + $0x8] sm:$0xff] %vm43, %v62
  // Predicated region
  $region18: #{memformer_forward.28} parent=0 // pred_check
    %p65 = pneg %p15
  $region19: #{memformer_forward.28} parent=0 // pred_check_branch
    %67 = sbr.rel (%p65) target = $region21
  $region20: #{memformer_forward.28} parent=0 // pred_region
    %v68 = vld [vmem:[#allocation2] sm:$0xff]
    %v69 = vld [vmem:[#allocation2 + $0x8] sm:$0xff]
    %v70 = vld [vmem:[%s2] sm:$0x1]
    %v72 = vperm.slane %v70, 0
    %v74 = vadd.f32 %v68, %v72
    %v75 = vadd.f32 %v69, %v72
    %76 = vst.msk [vmem:[%s3] sm:$0xff] %vm43, %v74
    %77 = vst.msk [vmem:[%s3 + $0x8] sm:$0xff] %vm43, %v75
  $region21: #{memformer_forward.28} parent=0 // pred_fallthru
    _
  // Predicated region
  $region22: #{memformer_forward.28} parent=0 // pred_check
    _
  $region23: #{memformer_forward.28} parent=0 // pred_check_branch
    %79 = sbr.rel (0) target = $region25
  $region24: #{memformer_forward.28} parent=0 // pred_region
    _
  $region25: #{memformer_forward.28} parent=0 // pred_fallthru
    _
  // Predicated region
  $region26: #{memformer_forward.28} parent=0 // pred_check
    _
  $region27: #{memformer_forward.28} parent=0 // pred_check_branch
    %81 = sbr.rel (0) target = $region29
  $region28: #{memformer_forward.28} parent=0 // pred_region
    _
  $region29: #{memformer_forward.28} parent=0 // pred_fallthru
    _

// kernel: memformer_forward.27
$region0: #{memformer_forward.27}
  #allocation0 [shape = 'u32[]', space=smem, size = 0x4, offset = 0x4, fixed_abs, tag = 'smem constant byte address 0x4 - core index']
  #allocation1 [shape = 'u32[72,128]{1,0:T(1,128)}', space=vmem, size = 0x9000, scoped, tag = 'internal scratch']
  %s0 = inlined_call_operand.vmem [shape: f32[2,8,32], index: 0, kind: input, shape index: {}]
  %s1 = inlined_call_operand.vmem [shape: f32[2,8,32], index: 1, kind: input, shape index: {}]
  %s2 = inlined_call_operand.vmem [shape: f32[2,8,32], index: 2, kind: input, shape index: {}]
  %s3 = inlined_call_operand.vmem [shape: f32[4,8,8], index: 3, kind: input, shape index: {}]
  %s4 = inlined_call_operand.vmem [shape: f32[2,8,32], index: 4, kind: output, shape index: {}]
  %s5 = sld [smem:[#allocation0]]
  $region49: #{memformer_forward.27} parent=0
    _
  %s7 = ssub.s32 1, %s5
  %s8 = scalar_select 0, %s7, %s5
  loop: start=0, step=1, limit=4
  $region2: #{memformer_forward.27} parent=0 // loop_pre_header
    _
  $region3: #{memformer_forward.27} parent=0 // loop_header
    %s10 = sphi 0, %s14
    %p11 = scmp.ge.s32.totalorder %s10, 4
    %s17 = sphi 0, %s29
    %s18 = sphi 0, %s25
    %s19 = sphi 0, %s17
    %s20 = sphi 0, %s18
    %s21 = sphi 0, %s19
    %s22 = sphi 0, %s20
    %s34 = sphi 0, %s36
    %s37 = sphi 0, %s34
    %s38 = sphi 0, %s37
    %s54 = sphi 0, %s38
    %s60 = sphi 0, %s62
    %s63 = sphi 0, %s60
    %s64 = sphi 0, %s63
    %s80 = sphi 0, %s64
    %s86 = sphi 0, %s88
    %s89 = sphi 0, %s86
    %s90 = sphi 0, %s89
    %s106 = sphi 0, %s90
    %s112 = sphi 0, %s114
    %s115 = sphi 0, %s112
    %s116 = sphi 0, %s115
    %s132 = sphi 0, %s116
    %s140 = sphi 0, %s142
    %s143 = sphi 0, %s140
    %s144 = sphi 0, %s143
    %s160 = sphi 0, %s144
  $region4: #{memformer_forward.27} parent=0 // loop_header_branch
    %13 = sbr.rel (%p11) target = $region8
  $region5: #{memformer_forward.27} parent=0 // loop_body
    %s15 = ssub.s32 %s10, 1
    %s16 = ssub.s32 %s10, 2
    %s23 = sadd.s32 1, %s18
    %p24 = scmp.ge.s32.totalorder %s23, 1
    %s25 = scalar_select %p24, 0, %s23
    %s26 = sadd.s32 1, %s17
    %s27 = scalar_select %p24, %s26, %s17
    %p28 = scmp.ge.s32.totalorder %s27, 2
    %s29 = scalar_select %p28, 0, %s27
    %s30 = ssub.s32 %s17, %s29
    %s31 = ssub.s32 %s18, %s25
    %s32 = sor.u32 %s30, %s31
    %p33 = scmp.eq.s32.totalorder %s32, 0
    %s35 = sadd.s32 %s34, 1
    %s36 = scalar_select %p33, %s34, %s35
    %p39 = pneg %p33
    %p40 = scmp.eq.s32.totalorder %s10, 1
    %p41 = por %p39, %p40
    %p42 = scmp.ne.s32.totalorder %s34, %s37
    %p43 = scmp.eq.s32.totalorder %s10, 0
    %p44 = por %p42, %p43
    %p45 = scmp.ne.s32.totalorder %s34, %s37
    %p46 = scmp.eq.s32.totalorder %s15, 1
    %p47 = por %p45, %p46
    %p48 = scmp.ne.s32.totalorder %s37, %s38
    %p49 = scmp.eq.s32.totalorder %s15, 0
    %p50 = por %p48, %p49
    %p51 = scmp.ne.s32.totalorder %s37, %s38
    %p52 = scmp.eq.s32.totalorder %s16, 1
    %p53 = por %p51, %p52
    %p55 = scmp.ne.s32.totalorder %s38, %s54
    %p56 = scmp.eq.s32.totalorder %s16, 0
    %p57 = por %p55, %p56
    %s58 = ssub.s32 %s17, %s29
    %p59 = scmp.eq.s32.totalorder %s58, 0
    %s61 = sadd.s32 %s60, 1
    %s62 = scalar_select %p59, %s60, %s61
    %p65 = pneg %p59
    %p66 = scmp.eq.s32.totalorder %s10, 1
    %p67 = por %p65, %p66
    %p68 = scmp.ne.s32.totalorder %s60, %s63
    %p69 = scmp.eq.s32.totalorder %s10, 0
    %p70 = por %p68, %p69
    %p71 = scmp.ne.s32.totalorder %s60, %s63
    %p72 = scmp.eq.s32.totalorder %s15, 1
    %p73 = por %p71, %p72
    %p74 = scmp.ne.s32.totalorder %s63, %s64
    %p75 = scmp.eq.s32.totalorder %s15, 0
    %p76 = por %p74, %p75
    %p77 = scmp.ne.s32.totalorder %s63, %s64
    %p78 = scmp.eq.s32.totalorder %s16, 1
    %p79 = por %p77, %p78
    %p81 = scmp.ne.s32.totalorder %s64, %s80
    %p82 = scmp.eq.s32.totalorder %s16, 0
    %p83 = por %p81, %p82
    %s84 = ssub.s32 %s17, %s29
    %p85 = scmp.eq.s32.totalorder %s84, 0
    %s87 = sadd.s32 %s86, 1
    %s88 = scalar_select %p85, %s86, %s87
    %p91 = pneg %p85
    %p92 = scmp.eq.s32.totalorder %s10, 1
    %p93 = por %p91, %p92
    %p94 = scmp.ne.s32.totalorder %s86, %s89
    %p95 = scmp.eq.s32.totalorder %s10, 0
    %p96 = por %p94, %p95
    %p97 = scmp.ne.s32.totalorder %s86, %s89
    %p98 = scmp.eq.s32.totalorder %s15, 1
    %p99 = por %p97, %p98
    %p100 = scmp.ne.s32.totalorder %s89, %s90
    %p101 = scmp.eq.s32.totalorder %s15, 0
    %p102 = por %p100, %p101
    %p103 = scmp.ne.s32.totalorder %s89, %s90
    %p104 = scmp.eq.s32.totalorder %s16, 1
    %p105 = por %p103, %p104
    %p107 = scmp.ne.s32.totalorder %s90, %s106
    %p108 = scmp.eq.s32.totalorder %s16, 0
    %p109 = por %p107, %p108
    %s110 = ssub.s32 %s18, %s25
    %p111 = scmp.eq.s32.totalorder %s110, 0
    %s113 = sadd.s32 %s112, 1
    %s114 = scalar_select %p111, %s112, %s113
    %p117 = pneg %p111
    %p118 = scmp.eq.s32.totalorder %s10, 1
    %p119 = por %p117, %p118
    %p120 = scmp.ne.s32.totalorder %s112, %s115
    %p121 = scmp.eq.s32.totalorder %s10, 0
    %p122 = por %p120, %p121
    %p123 = scmp.ne.s32.totalorder %s112, %s115
    %p124 = scmp.eq.s32.totalorder %s15, 1
    %p125 = por %p123, %p124
    %p126 = scmp.ne.s32.totalorder %s115, %s116
    %p127 = scmp.eq.s32.totalorder %s15, 0
    %p128 = por %p126, %p127
    %p129 = scmp.ne.s32.totalorder %s115, %s116
    %p130 = scmp.eq.s32.totalorder %s16, 1
    %p131 = por %p129, %p130
    %p133 = scmp.ne.s32.totalorder %s116, %s132
    %p134 = scmp.eq.s32.totalorder %s16, 0
    %p135 = por %p133, %p134
    %s136 = ssub.s32 %s17, %s29
    %s137 = ssub.s32 %s18, %s25
    %s138 = sor.u32 %s136, %s137
    %p139 = scmp.eq.s32.totalorder %s138, 0
    %s141 = sadd.s32 %s140, 1
    %s142 = scalar_select %p139, %s140, %s141
    %p145 = pneg %p139
    %p146 = scmp.eq.s32.totalorder %s10, 1
    %p147 = por %p145, %p146
    %p148 = scmp.ne.s32.totalorder %s140, %s143
    %p149 = scmp.eq.s32.totalorder %s10, 0
    %p150 = por %p148, %p149
    %p151 = scmp.ne.s32.totalorder %s140, %s143
    %p152 = scmp.eq.s32.totalorder %s15, 1
    %p153 = por %p151, %p152
    %p154 = scmp.ne.s32.totalorder %s143, %s144
    %p155 = scmp.eq.s32.totalorder %s15, 0
    %p156 = por %p154, %p155
    %p157 = scmp.ne.s32.totalorder %s143, %s144
    %p158 = scmp.eq.s32.totalorder %s16, 1
    %p159 = por %p157, %p158
    %p161 = scmp.ne.s32.totalorder %s144, %s160
    %p162 = scmp.eq.s32.totalorder %s16, 0
    %p163 = por %p161, %p162
    %p164 = scmp.le.s32.totalorder 1, %s10
    %p165 = scmp.lt.s32.totalorder %s10, 3
    %p166 = pnand %p164, %p165
    %p167 = pneg %p166
    // Predicated region
    $region9: #{memformer_forward.27} parent=5 // pred_check
      _
    $region10: #{memformer_forward.27} parent=5 // pred_check_branch
      %169 = sbr.rel (%p166) target = $region12
    $region11: #{memformer_forward.27} parent=5 // pred_region
      %s170 = ssub.s32 %s10, 1
      // Predicated region
      $region13: #{memformer_forward.27} parent=11 // pred_check
        %p171 = pneg %p128
      $region14: #{memformer_forward.27} parent=11 // pred_check_branch
        %173 = sbr.rel (%p171) target = $region16
      $region15: #{memformer_forward.27} parent=11 // pred_region
        %p174 = scmp.lt.s32.totalorder %s20, 0
        %s175 = scalar_select %p174, %s20, 0
        %s176 = smul.addr %s175, 8
        %s177 = scalar_lea.vmem %s3, %s176
      $region16: #{memformer_forward.27} parent=11 // pred_fallthru
        _
    $region12: #{memformer_forward.27} parent=5 // pred_fallthru
      _
    %p178 = scmp.lt.s32.totalorder %s10, 2
    // Predicated region
    $region17: #{memformer_forward.27} parent=5 // pred_check
      %p179 = pneg %p178
    $region18: #{memformer_forward.27} parent=5 // pred_check_branch
      %181 = sbr.rel (%p179) target = $region20
    $region19: #{memformer_forward.27} parent=5 // pred_region
      // Predicated region
      $region21: #{memformer_forward.27} parent=19 // pred_check
        %p182 = pneg %p44
      $region22: #{memformer_forward.27} parent=19 // pred_check_branch
        %184 = sbr.rel (%p182) target = $region24
      $region23: #{memformer_forward.27} parent=19 // pred_region
        %p185 = scmp.lt.s32.totalorder %s17, 1
        %s186 = scalar_select %p185, %s17, 1
        %p187 = scmp.lt.s32.totalorder %s18, 0
        %s188 = scalar_select %p187, %s18, 0
        %s189 = sadd.s32 %s188, %s186
        %s190 = smul.addr %s189, 8
        %s191 = scalar_lea.vmem %s0, %s190
      $region24: #{memformer_forward.27} parent=19 // pred_fallthru
        _
      // Predicated region
      $region25: #{memformer_forward.27} parent=19 // pred_check
        %p192 = pneg %p70
      $region26: #{memformer_forward.27} parent=19 // pred_check_branch
        %194 = sbr.rel (%p192) target = $region28
      $region27: #{memformer_forward.27} parent=19 // pred_region
        %p195 = scmp.lt.s32.totalorder %s17, 1
        %s196 = scalar_select %p195, %s17, 1
        %s197 = smul.addr %s196, 8
        %s198 = scalar_lea.vmem %s1, %s197
      $region28: #{memformer_forward.27} parent=19 // pred_fallthru
        _
      // Predicated region
      $region29: #{memformer_forward.27} parent=19 // pred_check
        %p199 = pneg %p96
      $region30: #{memformer_forward.27} parent=19 // pred_check_branch
        %201 = sbr.rel (%p199) target = $region32
      $region31: #{memformer_forward.27} parent=19 // pred_region
        %p202 = scmp.lt.s32.totalorder %s17, 1
        %s203 = scalar_select %p202, %s17, 1
        %s204 = smul.addr %s203, 8
        %s205 = scalar_lea.vmem %s2, %s204
      $region32: #{memformer_forward.27} parent=19 // pred_fallthru
        _
    $region20: #{memformer_forward.27} parent=5 // pred_fallthru
      _
    %p206 = scmp.le.s32.totalorder 1, %s10
    %p207 = scmp.lt.s32.totalorder %s10, 3
    %p208 = pnand %p206, %p207
    %p209 = pneg %p208
    // Predicated region
    $region33: #{memformer_forward.27} parent=5 // pred_check
      _
    $region34: #{memformer_forward.27} parent=5 // pred_check_branch
      %211 = sbr.rel (%p208) target = $region36
    $region35: #{memformer_forward.27} parent=5 // pred_region
      %s212 = ssub.s32 %s10, 1
      %p213 = scmp.lt.s32.totalorder %s19, 1
      %s214 = scalar_select %p213, %s19, 1
      %p215 = scmp.lt.s32.totalorder %s20, 0
      %s216 = scalar_select %p215, %s20, 0
      %s217 = sadd.s32 %s216, %s214
      %s218 = smul.addr %s217, 8
      %s219 = scalar_lea.vmem %s0, %s218
      %p220 = pneg %p50
      %p221 = pneg %p47
      %p222 = scmp.lt.s32.totalorder %s19, 1
      %s223 = scalar_select %p222, %s19, 1
      %s224 = smul.addr %s223, 8
      %s225 = scalar_lea.vmem %s1, %s224
      %p226 = pneg %p76
      %p227 = pneg %p73
      %p228 = scmp.lt.s32.totalorder %s19, 1
      %s229 = scalar_select %p228, %s19, 1
      %s230 = smul.addr %s229, 8
      %s231 = scalar_lea.vmem %s2, %s230
      %p232 = pneg %p102
      %p233 = pneg %p99
      %p234 = scmp.lt.s32.totalorder %s20, 0
      %s235 = scalar_select %p234, %s20, 0
      %s236 = smul.addr %s235, 8
      %s237 = scalar_lea.vmem %s3, %s236
      %p238 = pneg %p128
      %p239 = pneg %p125
      %p240 = pneg %p156
      %p241 = pneg %p153
      %p242 = scmp.lt.s32.totalorder %s19, 1
      %s243 = scalar_select %p242, %s19, 1
      %p244 = scmp.lt.s32.totalorder %s20, 0
      %s245 = scalar_select %p244, %s20, 0
      %s246 = sadd.s32 %s245, %s243
      %s247 = smul.addr %s246, 8
      %s248 = scalar_lea.vmem %s4, %s247
      %p249 = scmp.lt.s32.totalorder %s19, 1
      %s250 = scalar_select %p249, %s19, 1
      %p251 = scmp.lt.s32.totalorder %s20, 0
      %s252 = scalar_select %p251, %s20, 0
      %s253 = sadd.s32 %s252, %s250
      %s254 = smul.addr %s253, 8
      %s255 = scalar_lea.vmem %s0, %s254
      %p256 = scmp.lt.s32.totalorder %s19, 1
      %s257 = scalar_select %p256, %s19, 1
      %s258 = smul.addr %s257, 8
      %s259 = scalar_lea.vmem %s1, %s258
      %p260 = scmp.lt.s32.totalorder %s19, 1
      %s261 = scalar_select %p260, %s19, 1
      %s262 = smul.addr %s261, 8
      %s263 = scalar_lea.vmem %s2, %s262
      %p264 = scmp.lt.s32.totalorder %s20, 0
      %s265 = scalar_select %p264, %s20, 0
      %s266 = smul.addr %s265, 8
      %s267 = scalar_lea.vmem %s3, %s266
      %p268 = scmp.lt.s32.totalorder %s19, 1
      %s269 = scalar_select %p268, %s19, 1
      %p270 = scmp.lt.s32.totalorder %s20, 0
      %s271 = scalar_select %p270, %s20, 0
      %s272 = sadd.s32 %s271, %s269
      %s273 = smul.addr %s272, 8
      %s274 = scalar_lea.vmem %s4, %s273
      %v276 = vld [vmem:[%s255] sm:$0xff]
      %v277 = vld [vmem:[%s259] sm:$0xff]
      %v278 = vld [vmem:[%s263] sm:$0xff]
      %v279 = vpack.c.bf16 %v276, %v276
      %v280 = vpack.c.bf16 %v277, %v277
      %v281 = vpack.c.bf16 %v278, %v278
      %vm282 = vcmask 64512
      %v284 = vsel %vm282, %v279, 0
      %v287 = vsel %vm282, %v280, 0
      %289 = vmatpush.bf16.xpose.msra.mxu0 0
      %290 = vmatpush.bf16.xpose.msra.mxu0 0
      %291 = vmatpush.bf16.xpose.msra.mxu0 0
      %292 = vmatpush.bf16.xpose.msra.mxu0 0
      %293 = vmatpush.bf16.xpose.msra.mxu0 0
      %294 = vmatpush.bf16.xpose.msra.mxu0 0
      %295 = vmatpush.bf16.xpose.msra.mxu0 0
      %296 = vmatpush.bf16.xpose.msra.mxu0 %v287
      %297 = vmatmul.bf16.gmra.mxu0 %v284
      %v298 = vpop.f32.mrf.mxu0
      %v299 = vadd.f32 0.0, %v298
      %v300 = vpop.f32.mrf.mxu0
      %301 = vdwg.mxu0
      %v302 = vmul.f32 %v299, 0.35355338
      %v303 = vld [vmem:[%s267] sm:$0xff]
      %v304 = vadd.f32 %v302, %v303
      %v305 = vsel %vm282, %v304, -inf
      %306 = vmax.xlane.f32.xlu0 %v305
      %v307 = vpop.xlane.xlu0 %306
      %v308 = vsub.f32 %v304, %v307
      %v309 = vmul.f32 %v308, 1.442695
      %v310 = vpow.pop %v309
      %v311 = vsel %vm282, %v310, 0.0
      %312 = vadd.xlane.f32.xlu0 %v311
      %v313 = vpop.xlane.xlu0 %312
      %v314 = vrcp.pop %v313
      %v315 = vmul.f32 %v310, %v314
      %v316 = vpack.c.bf16 %v315, %v315
      %v318 = vsel %vm282, %v316, 0
      %vm320 = vcmask 1043456
      %v322 = vsel %vm320, %v281, 0
      %324 = vmatpush.bf16.msra.mxu0 0
      %325 = vmatpush.bf16.msra.mxu0 0
      %326 = vmatpush.bf16.msra.mxu0 0
      %327 = vmatpush.bf16.msra.mxu0 0
      %328 = vmatpush.bf16.msra.mxu0 0
      %329 = vmatpush.bf16.msra.mxu0 0
      %330 = vmatpush.bf16.msra.mxu0 0
      %331 = vmatpush.bf16.msra.mxu0 %v322
      %332 = vmatmul.bf16.gmra.mxu0 %v318
      %v333 = vpop.f32.mrf.mxu0
      %v334 = vadd.f32 0.0, %v333
      %v335 = vpop.f32.mrf.mxu0
      %336 = vdwg.mxu0
      %338 = vrot.lane.b32.xlu0 %v279, 120
      %v339 = vpop.permute.xlu0 %338
      %341 = vrot.lane.b32.xlu0 %v280, 120
      %v342 = vpop.permute.xlu0 %341
      %v344 = vsel %vm282, %v339, 0
      %v347 = vsel %vm282, %v342, 0
      %349 = vmatpush.bf16.xpose.msra.mxu0 0
      %350 = vmatpush.bf16.xpose.msra.mxu0 0
      %351 = vmatpush.bf16.xpose.msra.mxu0 0
      %352 = vmatpush.bf16.xpose.msra.mxu0 0
      %353 = vmatpush.bf16.xpose.msra.mxu0 0
      %354 = vmatpush.bf16.xpose.msra.mxu0 0
      %355 = vmatpush.bf16.xpose.msra.mxu0 0
      %356 = vmatpush.bf16.xpose.msra.mxu0 %v347
      %357 = vmatmul.bf16.gmra.mxu0 %v344
      %v358 = vpop.f32.mrf.mxu0
      %v359 = vadd.f32 0.0, %v358
      %v360 = vpop.f32.mrf.mxu0
      %361 = vdwg.mxu0
      %v362 = vmul.f32 %v359, 0.35355338
      %s363 = scalar_lea.vmem %s267, 8
      %v364 = vld [vmem:[%s363] sm:$0xff]
      %v365 = vadd.f32 %v362, %v364
      %v366 = vsel %vm282, %v365, -inf
      %367 = vmax.xlane.f32.xlu0 %v366
      %v368 = vpop.xlane.xlu0 %367
      %v369 = vsub.f32 %v365, %v368
      %v370 = vmul.f32 %v369, 1.442695
      %v371 = vpow.pop %v370
      %v372 = vsel %vm282, %v371, 0.0
      %373 = vadd.xlane.f32.xlu0 %v372
      %v374 = vpop.xlane.xlu0 %373
      %v375 = vrcp.pop %v374
      %v376 = vmul.f32 %v371, %v375
      %v377 = vpack.c.bf16 %v376, %v376
      %379 = vrot.lane.b32.xlu0 %v281, 120
      %v380 = vpop.permute.xlu0 %379
      %v382 = vsel %vm282, %v377, 0
      %v385 = vsel %vm320, %v380, 0
      %387 = vmatpush.bf16.msra.mxu0 0
      %388 = vmatpush.bf16.msra.mxu0 0
      %389 = vmatpush.bf16.msra.mxu0 0
      %390 = vmatpush.bf16.msra.mxu0 0
      %391 = vmatpush.bf16.msra.mxu0 0
      %392 = vmatpush.bf16.msra.mxu0 0
      %393 = vmatpush.bf16.msra.mxu0 0
      %394 = vmatpush.bf16.msra.mxu0 %v385
      %395 = vmatmul.bf16.gmra.mxu0 %v382
      %v396 = vpop.f32.mrf.mxu0
      %v397 = vadd.f32 0.0, %v396
      %v398 = vpop.f32.mrf.mxu0
      %399 = vdwg.mxu0
      %400 = vrot.lane.b32.xlu0 %v279, 112
      %v401 = vpop.permute.xlu0 %400
      %402 = vrot.lane.b32.xlu0 %v280, 112
      %v403 = vpop.permute.xlu0 %402
      %v405 = vsel %vm282, %v401, 0
      %v408 = vsel %vm282, %v403, 0
      %410 = vmatpush.bf16.xpose.msra.mxu0 0
      %411 = vmatpush.bf16.xpose.msra.mxu0 0
      %412 = vmatpush.bf16.xpose.msra.mxu0 0
      %413 = vmatpush.bf16.xpose.msra.mxu0 0
      %414 = vmatpush.bf16.xpose.msra.mxu0 0
      %415 = vmatpush.bf16.xpose.msra.mxu0 0
      %416 = vmatpush.bf16.xpose.msra.mxu0 0
      %417 = vmatpush.bf16.xpose.msra.mxu0 %v408
      %418 = vmatmul.bf16.gmra.mxu0 %v405
      %v419 = vpop.f32.mrf.mxu0
      %v420 = vadd.f32 0.0, %v419
      %v421 = vpop.f32.mrf.mxu0
      %422 = vdwg.mxu0
      %v423 = vmul.f32 %v420, 0.35355338
      %s424 = scalar_lea.vmem %s267, 16
      %v425 = vld [vmem:[%s424] sm:$0xff]
      %v426 = vadd.f32 %v423, %v425
      %v427 = vsel %vm282, %v426, -inf
      %428 = vmax.xlane.f32.xlu0 %v427
      %v429 = vpop.xlane.xlu0 %428
      %v430 = vsub.f32 %v426, %v429
      %v431 = vmul.f32 %v430, 1.442695
      %v432 = vpow.pop %v431
      %v433 = vsel %vm282, %v432, 0.0
      %434 = vadd.xlane.f32.xlu0 %v433
      %v435 = vpop.xlane.xlu0 %434
      %v436 = vrcp.pop %v435
      %v437 = vmul.f32 %v432, %v436
      %v438 = vpack.c.bf16 %v437, %v437
      %439 = vrot.lane.b32.xlu0 %v281, 112
      %v440 = vpop.permute.xlu0 %439
      %v442 = vsel %vm282, %v438, 0
      %v445 = vsel %vm320, %v440, 0
      %447 = vmatpush.bf16.msra.mxu0 0
      %448 = vmatpush.bf16.msra.mxu0 0
      %449 = vmatpush.bf16.msra.mxu0 0
      %450 = vmatpush.bf16.msra.mxu0 0
      %451 = vmatpush.bf16.msra.mxu0 0
      %452 = vmatpush.bf16.msra.mxu0 0
      %453 = vmatpush.bf16.msra.mxu0 0
      %454 = vmatpush.bf16.msra.mxu0 %v445
      %455 = vmatmul.bf16.gmra.mxu0 %v442
      %v456 = vpop.f32.mrf.mxu0
      %v457 = vadd.f32 0.0, %v456
      %v458 = vpop.f32.mrf.mxu0
      %459 = vdwg.mxu0
      %460 = vrot.lane.b32.xlu0 %v279, 104
      %v461 = vpop.permute.xlu0 %460
      %462 = vrot.lane.b32.xlu0 %v280, 104
      %v463 = vpop.permute.xlu0 %462
      %v465 = vsel %vm282, %v461, 0
      %v468 = vsel %vm282, %v463, 0
      %470 = vmatpush.bf16.xpose.msra.mxu0 0
      %471 = vmatpush.bf16.xpose.msra.mxu0 0
      %472 = vmatpush.bf16.xpose.msra.mxu0 0
      %473 = vmatpush.bf16.xpose.msra.mxu0 0
      %474 = vmatpush.bf16.xpose.msra.mxu0 0
      %475 = vmatpush.bf16.xpose.msra.mxu0 0
      %476 = vmatpush.bf16.xpose.msra.mxu0 0
      %477 = vmatpush.bf16.xpose.msra.mxu0 %v468
      %478 = vmatmul.bf16.gmra.mxu0 %v465
      %v479 = vpop.f32.mrf.mxu0
      %v480 = vadd.f32 0.0, %v479
      %v481 = vpop.f32.mrf.mxu0
      %482 = vdwg.mxu0
      %v483 = vmul.f32 %v480, 0.35355338
      %s484 = scalar_lea.vmem %s267, 24
      %v485 = vld [vmem:[%s484] sm:$0xff]
      %v486 = vadd.f32 %v483, %v485
      %v487 = vsel %vm282, %v486, -inf
      %488 = vmax.xlane.f32.xlu0 %v487
      %v489 = vpop.xlane.xlu0 %488
      %v490 = vsub.f32 %v486, %v489
      %v491 = vmul.f32 %v490, 1.442695
      %v492 = vpow.pop %v491
      %v493 = vsel %vm282, %v492, 0.0
      %494 = vadd.xlane.f32.xlu0 %v493
      %v495 = vpop.xlane.xlu0 %494
      %v496 = vrcp.pop %v495
      %v497 = vmul.f32 %v492, %v496
      %v498 = vpack.c.bf16 %v497, %v497
      %499 = vrot.lane.b32.xlu0 %v281, 104
      %v500 = vpop.permute.xlu0 %499
      %v502 = vsel %vm282, %v498, 0
      %v505 = vsel %vm320, %v500, 0
      %507 = vmatpush.bf16.msra.mxu0 0
      %508 = vmatpush.bf16.msra.mxu0 0
      %509 = vmatpush.bf16.msra.mxu0 0
      %510 = vmatpush.bf16.msra.mxu0 0
      %511 = vmatpush.bf16.msra.mxu0 0
      %512 = vmatpush.bf16.msra.mxu0 0
      %513 = vmatpush.bf16.msra.mxu0 0
      %514 = vmatpush.bf16.msra.mxu0 %v505
      %515 = vmatmul.bf16.gmra.mxu0 %v502
      %v516 = vpop.f32.mrf.mxu0
      %v517 = vadd.f32 0.0, %v516
      %v518 = vpop.f32.mrf.mxu0
      %519 = vdwg.mxu0
      %521 = vrot.lane.b32.xlu0 %v397, 8
      %v522 = vpop.permute.xlu0 %521
      %525 = vrot.lane.b32.xlu0 %v457, 16
      %v526 = vpop.permute.xlu0 %525
      %529 = vrot.lane.b32.xlu0 %v517, 24
      %v530 = vpop.permute.xlu0 %529
      %v532 = vsel %vm282, %v334, %v522
      %vm533 = vcmask 130048
      %v534 = vsel %vm533, %v532, %v526
      %vm535 = vcmask 195584
      %v536 = vsel %vm535, %v534, %v530
      %vm537 = vcmask 261120
      %538 = vst.msk [vmem:[%s274] sm:$0xff] %vm537, %v536
      %p539 = scmp.lt.s32.totalorder %s19, 1
      %s540 = scalar_select %p539, %s19, 1
      %p541 = scmp.lt.s32.totalorder %s20, 0
      %s542 = scalar_select %p541, %s20, 0
      %s543 = sadd.s32 %s542, %s540
      %s544 = smul.addr %s543, 8
      %s545 = scalar_lea.vmem %s4, %s544
      // Predicated region
      $region37: #{memformer_forward.27} parent=35 // pred_check
        %p546 = pneg %p153
      $region38: #{memformer_forward.27} parent=35 // pred_check_branch
        %548 = sbr.rel (%p546) target = $region40
      $region39: #{memformer_forward.27} parent=35 // pred_region
        _
      $region40: #{memformer_forward.27} parent=35 // pred_fallthru
        _
    $region36: #{memformer_forward.27} parent=5 // pred_fallthru
      _
    %p549 = scmp.le.s32.totalorder 2, %s10
    // Predicated region
    $region41: #{memformer_forward.27} parent=5 // pred_check
      %p550 = pneg %p549
    $region42: #{memformer_forward.27} parent=5 // pred_check_branch
      %552 = sbr.rel (%p550) target = $region44
    $region43: #{memformer_forward.27} parent=5 // pred_region
      %s553 = ssub.s32 %s10, 2
      // Predicated region
      $region45: #{memformer_forward.27} parent=43 // pred_check
        %p554 = pneg %p159
      $region46: #{memformer_forward.27} parent=43 // pred_check_branch
        %556 = sbr.rel (%p554) target = $region48
      $region47: #{memformer_forward.27} parent=43 // pred_region
        %p557 = scmp.lt.s32.totalorder %s21, 1
        %s558 = scalar_select %p557, %s21, 1
        %p559 = scmp.lt.s32.totalorder %s22, 0
        %s560 = scalar_select %p559, %s22, 0
        %s561 = sadd.s32 %s560, %s558
        %s562 = smul.addr %s561, 8
        %s563 = scalar_lea.vmem %s4, %s562
      $region48: #{memformer_forward.27} parent=43 // pred_fallthru
        _
    $region44: #{memformer_forward.27} parent=5 // pred_fallthru
      _
  $region6: #{memformer_forward.27} parent=0 // loop_footer
    %s14 = sadd.s32 1, %s10
  $region7: #{memformer_forward.27} parent=0 // loop_footer_branch
    %9 = sbr.rel target = $region3
  $region8: #{memformer_forward.27} parent=0 // loop_exit
    _

// kernel: memformer_forward.29
$region0: #{memformer_forward.29}
  #allocation0 [shape = 'u32[]', space=smem, size = 0x4, offset = 0x4, fixed_abs, tag = 'smem constant byte address 0x4 - core index']
  #allocation1 [shape = 'u32[72,128]{1,0:T(1,128)}', space=vmem, size = 0x9000, scoped, tag = 'internal scratch']
  %s0 = inlined_call_operand.vmem [shape: f32[16,32], index: 0, kind: input, shape index: {}]
  %s1 = inlined_call_operand.vmem [shape: f32[1,32], index: 1, kind: input, shape index: {}]
  %s2 = inlined_call_operand.vmem [shape: f32[1,32], index: 2, kind: input, shape index: {}]
  %s3 = inlined_call_operand.vmem [shape: bf16[32,32], index: 3, kind: input, shape index: {}]
  %s4 = inlined_call_operand.vmem [shape: f32[1,32], index: 4, kind: input, shape index: {}]
  %s5 = inlined_call_operand.vmem [shape: f32[16,32], index: 5, kind: output, shape index: {}]
  %s6 = sld [smem:[#allocation0]]
  $region30: #{memformer_forward.29} parent=0
    _
  %s8 = ssub.s32 1, %s6
  %s9 = scalar_select 0, %s8, %s6
  // Predicated region
  $region2: #{memformer_forward.29} parent=0 // pred_check
    _
  $region3: #{memformer_forward.29} parent=0 // pred_check_branch
    %11 = sbr.rel (0) target = $region5
  $region4: #{memformer_forward.29} parent=0 // pred_region
    _
  $region5: #{memformer_forward.29} parent=0 // pred_fallthru
    _
  // Predicated region
  $region6: #{memformer_forward.29} parent=0 // pred_check
    _
  $region7: #{memformer_forward.29} parent=0 // pred_check_branch
    %13 = sbr.rel (0) target = $region9
  $region8: #{memformer_forward.29} parent=0 // pred_region
    _
  $region9: #{memformer_forward.29} parent=0 // pred_fallthru
    _
  // Predicated region
  $region10: #{memformer_forward.29} parent=0 // pred_check
    _
  $region11: #{memformer_forward.29} parent=0 // pred_check_branch
    %15 = sbr.rel (0) target = $region13
  $region12: #{memformer_forward.29} parent=0 // pred_region
    _
  $region13: #{memformer_forward.29} parent=0 // pred_fallthru
    _
  // Predicated region
  $region14: #{memformer_forward.29} parent=0 // pred_check
    _
  $region15: #{memformer_forward.29} parent=0 // pred_check_branch
    %17 = sbr.rel (0) target = $region17
  $region16: #{memformer_forward.29} parent=0 // pred_region
    _
  $region17: #{memformer_forward.29} parent=0 // pred_fallthru
    _
  // Predicated region
  $region18: #{memformer_forward.29} parent=0 // pred_check
    _
  $region19: #{memformer_forward.29} parent=0 // pred_check_branch
    %19 = sbr.rel (0) target = $region21
  $region20: #{memformer_forward.29} parent=0 // pred_region
    _
  $region21: #{memformer_forward.29} parent=0 // pred_fallthru
    _
  %v21 = vld [vmem:[%s0] sm:$0xff]
  %v22 = vld [vmem:[%s0 + $0x8] sm:$0xff]
  %vm23 = vcmask 261120
  %v24 = vsel %vm23, %v21, 0.0
  %25 = vadd.xlane.f32.xlu0 %v24
  %v26 = vpop.xlane.xlu0 %25
  %v27 = vsel %vm23, %v22, 0.0
  %28 = vadd.xlane.f32.xlu0 %v27
  %v29 = vpop.xlane.xlu0 %28
  %v30 = vrcp.pop 32.0
  %v31 = vmul.f32 32.0, %v30
  %v32 = vsub.f32 1.0, %v31
  %v33 = vmul.f32 %v30, %v32
  %v34 = vadd.f32 %v30, %v33
  %vm35 = vweird.f32 %v30
  %v36 = vsel %vm35, %v30, %v34
  %v37 = vmul.f32 %v26, %v36
  %v38 = vmul.f32 %v29, %v36
  %v39 = vsub.f32 %v21, %v37
  %v40 = vsub.f32 %v22, %v38
  %v41 = vmul.f32 %v39, %v39
  %v42 = vmul.f32 %v40, %v40
  %v43 = vsel %vm23, %v41, 0.0
  %44 = vadd.xlane.f32.xlu0 %v43
  %v45 = vpop.xlane.xlu0 %44
  %v46 = vsel %vm23, %v42, 0.0
  %47 = vadd.xlane.f32.xlu0 %v46
  %v48 = vpop.xlane.xlu0 %47
  %v49 = vmul.f32 %v45, %v36
  %v50 = vmul.f32 %v48, %v36
  %v51 = vadd.f32 %v49, 1e-05
  %v52 = vadd.f32 %v50, 1e-05
  %v53 = vrsqrt.pop %v51
  %v54 = vmul.f32 %v53, %v51
  %v55 = vmul.f32 %v54, %v53
  %v56 = vmul.f32 0.5, %v55
  %v57 = vsub.f32 1.5, %v56
  %v58 = vmul.f32 %v53, %v57
  %vm59 = vweird.f32 %v51
  %vm60 = vweird.f32 %v53
  %vm61 = vmor %vm59, %vm60
  %v62 = vsel %vm61, %v53, %v58
  %v63 = vrsqrt.pop %v52
  %v64 = vmul.f32 %v63, %v52
  %v65 = vmul.f32 %v64, %v63
  %v66 = vmul.f32 0.5, %v65
  %v67 = vsub.f32 1.5, %v66
  %v68 = vmul.f32 %v63, %v67
  %vm69 = vweird.f32 %v52
  %vm70 = vweird.f32 %v63
  %vm71 = vmor %vm69, %vm70
  %v72 = vsel %vm71, %v63, %v68
  %v73 = vmul.f32 %v39, %v62
  %v74 = vmul.f32 %v40, %v72
  %v75 = vld [vmem:[%s1] sm:$0x1]
  %v77 = vperm.slane %v75, 0
  %v79 = vmul.f32 %v73, %v77
  %v80 = vmul.f32 %v74, %v77
  %v81 = vld [vmem:[%s2] sm:$0x1]
  %v83 = vperm.slane %v81, 0
  %v85 = vadd.f32 %v79, %v83
  %v86 = vadd.f32 %v80, %v83
  %v87 = vpack.c.bf16 %v86, %v85
  %v88 = vld [vmem:[%s3] sm:$0xf]
  %v89 = vld [vmem:[%s3 + $0x4] sm:$0xf]
  %v90 = vld [vmem:[%s3 + $0x8] sm:$0xf]
  %v91 = vld [vmem:[%s3 + $0xc] sm:$0xf]
  %v92 = vld [vmem:[%s4] sm:$0x1]
  %v94 = vperm.slane %v92, 0
  %v100 = vunpack.c.l.b16 %v88
  %v101 = vunpack.c.l.b16 %v89
  %v102 = vunpack.c.l.b16 %v90
  %v103 = vunpack.c.l.b16 %v91
  %v104 = vpack.c.b16 %v101, %v100
  %v105 = vpack.c.b16 %v103, %v102
  %v109 = vsel %vm23, %v87, 0
  %111 = vmatpush.bf16.msra.mxu0 0
  %112 = vmatpush.bf16.msra.mxu0 0
  %113 = vmatpush.bf16.msra.mxu0 0
  %114 = vmatpush.bf16.msra.mxu0 0
  %115 = vmatpush.bf16.msra.mxu0 0
  %116 = vmatpush.bf16.msra.mxu0 0
  %117 = vmatpush.bf16.msra.mxu0 %v105
  %118 = vmatpush.bf16.msra.mxu0 %v104
  %119 = vmatmul.bf16.gmra.mxu0 %v109
  %v120 = vpop.f32.mrf.mxu0
  %v121 = vadd.f32 %v94, %v120
  %v122 = vpop.f32.mrf.mxu0
  %v123 = vadd.f32 %v94, %v122
  %124 = vdwg.mxu0
  %125 = vst.msk [vmem:[%s5] sm:$0xff] %vm23, %v121
  %126 = vst.msk [vmem:[%s5 + $0x8] sm:$0xff] %vm23, %v123
  // Predicated region
  $region22: #{memformer_forward.29} parent=0 // pred_check
    _
  $region23: #{memformer_forward.29} parent=0 // pred_check_branch
    %128 = sbr.rel (0) target = $region25
  $region24: #{memformer_forward.29} parent=0 // pred_region
    _
  $region25: #{memformer_forward.29} parent=0 // pred_fallthru
    _
  // Predicated region
  $region26: #{memformer_forward.29} parent=0 // pred_check
    _
  $region27: #{memformer_forward.29} parent=0 // pred_check_branch
    %130 = sbr.rel (0) target = $region29
  $region28: #{memformer_forward.29} parent=0 // pred_region
    _
  $region29: #{memformer_forward.29} parent=0 // pred_fallthru
    _

// kernel: memformer_forward.30
$region0: #{memformer_forward.30}
  #allocation0 [shape = 'u32[]', space=smem, size = 0x4, offset = 0x4, fixed_abs, tag = 'smem constant byte address 0x4 - core index']
  #allocation1 [shape = 'u32[72,128]{1,0:T(1,128)}', space=vmem, size = 0x9000, scoped, tag = 'internal scratch']
  #allocation2 [shape = 'f32[8,64]{1,0:T(8,128)}', space=vmem, size = 0x1000, scoped, tag = 'scratch operand']
  %s0 = inlined_call_operand.vmem [shape: f32[8,32], index: 0, kind: input, shape index: {}]
  %s1 = inlined_call_operand.vmem [shape: bf16[32,64], index: 1, kind: input, shape index: {}]
  %s2 = inlined_call_operand.vmem [shape: f32[1,64], index: 2, kind: input, shape index: {}]
  %s3 = inlined_call_operand.vmem [shape: f32[8,64], index: 3, kind: output, shape index: {}]
  %s4 = sld [smem:[#allocation0]]
  $region30: #{memformer_forward.30} parent=0
    _
  %s6 = ssub.s32 1, %s4
  %s7 = scalar_select 0, %s6, %s4
  // Predicated region
  $region2: #{memformer_forward.30} parent=0 // pred_check
    _
  $region3: #{memformer_forward.30} parent=0 // pred_check_branch
    %9 = sbr.rel (0) target = $region5
  $region4: #{memformer_forward.30} parent=0 // pred_region
    _
  $region5: #{memformer_forward.30} parent=0 // pred_fallthru
    _
  // Predicated region
  $region6: #{memformer_forward.30} parent=0 // pred_check
    _
  $region7: #{memformer_forward.30} parent=0 // pred_check_branch
    %11 = sbr.rel (0) target = $region9
  $region8: #{memformer_forward.30} parent=0 // pred_region
    _
  $region9: #{memformer_forward.30} parent=0 // pred_fallthru
    _
  // Predicated region
  $region10: #{memformer_forward.30} parent=0 // pred_check
    _
  $region11: #{memformer_forward.30} parent=0 // pred_check_branch
    %13 = sbr.rel (0) target = $region13
  $region12: #{memformer_forward.30} parent=0 // pred_region
    _
  $region13: #{memformer_forward.30} parent=0 // pred_fallthru
    _
  %p15 = scmp.eq.s32.totalorder 0, 0
  // Predicated region
  $region14: #{memformer_forward.30} parent=0 // pred_check
    %p16 = pneg %p15
  $region15: #{memformer_forward.30} parent=0 // pred_check_branch
    %18 = sbr.rel (%p16) target = $region17
  $region16: #{memformer_forward.30} parent=0 // pred_region
    %vm19 = vcmask 523264
    %20 = vst.msk [vmem:[#allocation2] sm:$0xff] %vm19, 0.0
  $region17: #{memformer_forward.30} parent=0 // pred_fallthru
    _
  %v21 = vld [vmem:[#allocation2] sm:$0xff]
  %v22 = vld [vmem:[%s0] sm:$0xff]
  %v23 = vpack.c.bf16 %v22, %v22
  %v24 = vld [vmem:[%s1] sm:$0xf]
  %v25 = vld [vmem:[%s1 + $0x4] sm:$0xf]
  %v26 = vld [vmem:[%s1 + $0x8] sm:$0xf]
  %v27 = vld [vmem:[%s1 + $0xc] sm:$0xf]
  %v32 = vunpack.c.l.b16 %v24
  %v33 = vunpack.c.l.b16 %v25
  %v34 = vunpack.c.l.b16 %v26
  %v35 = vunpack.c.l.b16 %v27
  %v36 = vpack.c.b16 %v33, %v32
  %v37 = vpack.c.b16 %v35, %v34
  %vm40 = vcmask 261120
  %v42 = vsel %vm40, %v23, 0
  %44 = vmatpush.bf16.msra.mxu0 0
  %45 = vmatpush.bf16.msra.mxu0 0
  %46 = vmatpush.bf16.msra.mxu0 0
  %47 = vmatpush.bf16.msra.mxu0 0
  %48 = vmatpush.bf16.msra.mxu0 0
  %49 = vmatpush.bf16.msra.mxu0 0
  %50 = vmatpush.bf16.msra.mxu0 %v37
  %51 = vmatpush.bf16.msra.mxu0 %v36
  %52 = vmatmul.bf16.gmra.mxu0 %v42
  %v53 = vpop.f32.mrf.mxu0
  %v54 = vadd.f32 0.0, %v53
  %v55 = vpop.f32.mrf.mxu0
  %56 = vdwg.mxu0
  %v57 = vadd.f32 %v21, %v54
  %vm58 = vcmask 523264
  %59 = vst.msk [vmem:[#allocation2] sm:$0xff] %vm58, %v57
  // Predicated region
  $region18: #{memformer_forward.30} parent=0 // pred_check
    %p60 = pneg %p15
  $region19: #{memformer_forward.30} parent=0 // pred_check_branch
    %62 = sbr.rel (%p60) target = $region21
  $region20: #{memformer_forward.30} parent=0 // pred_region
    %v63 = vld [vmem:[#allocation2] sm:$0xff]
    %v64 = vld [vmem:[%s2] sm:$0x1]
    %v66 = vperm.slane %v64, 0
    %v68 = vadd.f32 %v63, %v66
    %69 = vst.msk [vmem:[%s3] sm:$0xff] %vm58, %v68
  $region21: #{memformer_forward.30} parent=0 // pred_fallthru
    _
  // Predicated region
  $region22: #{memformer_forward.30} parent=0 // pred_check
    _
  $region23: #{memformer_forward.30} parent=0 // pred_check_branch
    %71 = sbr.rel (0) target = $region25
  $region24: #{memformer_forward.30} parent=0 // pred_region
    _
  $region25: #{memformer_forward.30} parent=0 // pred_fallthru
    _
  // Predicated region
  $region26: #{memformer_forward.30} parent=0 // pred_check
    _
  $region27: #{memformer_forward.30} parent=0 // pred_check_branch
    %73 = sbr.rel (0) target = $region29
  $region28: #{memformer_forward.30} parent=0 // pred_region
    _
  $region29: #{memformer_forward.30} parent=0 // pred_fallthru
    _

// kernel: memformer_forward.31
$region0: #{memformer_forward.31}
  #allocation0 [shape = 'u32[]', space=smem, size = 0x4, offset = 0x4, fixed_abs, tag = 'smem constant byte address 0x4 - core index']
  #allocation1 [shape = 'u32[72,128]{1,0:T(1,128)}', space=vmem, size = 0x9000, scoped, tag = 'internal scratch']
  %s0 = inlined_call_operand.vmem [shape: f32[2,8,32], index: 0, kind: input, shape index: {}]
  %s1 = inlined_call_operand.vmem [shape: f32[2,4,32], index: 1, kind: input, shape index: {}]
  %s2 = inlined_call_operand.vmem [shape: f32[2,4,32], index: 2, kind: input, shape index: {}]
  %s3 = inlined_call_operand.vmem [shape: f32[2,8,32], index: 3, kind: output, shape index: {}]
  %s4 = sld [smem:[#allocation0]]
  $region45: #{memformer_forward.31} parent=0
    _
  %s6 = ssub.s32 1, %s4
  %s7 = scalar_select 0, %s6, %s4
  loop: start=0, step=1, limit=4
  $region2: #{memformer_forward.31} parent=0 // loop_pre_header
    _
  $region3: #{memformer_forward.31} parent=0 // loop_header
    %s9 = sphi 0, %s13
    %p10 = scmp.ge.s32.totalorder %s9, 4
    %s16 = sphi 0, %s28
    %s17 = sphi 0, %s24
    %s18 = sphi 0, %s16
    %s19 = sphi 0, %s17
    %s20 = sphi 0, %s18
    %s21 = sphi 0, %s19
    %s33 = sphi 0, %s35
    %s36 = sphi 0, %s33
    %s37 = sphi 0, %s36
    %s53 = sphi 0, %s37
    %s59 = sphi 0, %s61
    %s62 = sphi 0, %s59
    %s63 = sphi 0, %s62
    %s79 = sphi 0, %s63
    %s85 = sphi 0, %s87
    %s88 = sphi 0, %s85
    %s89 = sphi 0, %s88
    %s105 = sphi 0, %s89
    %s113 = sphi 0, %s115
    %s116 = sphi 0, %s113
    %s117 = sphi 0, %s116
    %s133 = sphi 0, %s117
  $region4: #{memformer_forward.31} parent=0 // loop_header_branch
    %12 = sbr.rel (%p10) target = $region8
  $region5: #{memformer_forward.31} parent=0 // loop_body
    %s14 = ssub.s32 %s9, 1
    %s15 = ssub.s32 %s9, 2
    %s22 = sadd.s32 1, %s17
    %p23 = scmp.ge.s32.totalorder %s22, 1
    %s24 = scalar_select %p23, 0, %s22
    %s25 = sadd.s32 1, %s16
    %s26 = scalar_select %p23, %s25, %s16
    %p27 = scmp.ge.s32.totalorder %s26, 2
    %s28 = scalar_select %p27, 0, %s26
    %s29 = ssub.s32 %s16, %s28
    %s30 = ssub.s32 %s17, %s24
    %s31 = sor.u32 %s29, %s30
    %p32 = scmp.eq.s32.totalorder %s31, 0
    %s34 = sadd.s32 %s33, 1
    %s35 = scalar_select %p32, %s33, %s34
    %p38 = pneg %p32
    %p39 = scmp.eq.s32.totalorder %s9, 1
    %p40 = por %p38, %p39
    %p41 = scmp.ne.s32.totalorder %s33, %s36
    %p42 = scmp.eq.s32.totalorder %s9, 0
    %p43 = por %p41, %p42
    %p44 = scmp.ne.s32.totalorder %s33, %s36
    %p45 = scmp.eq.s32.totalorder %s14, 1
    %p46 = por %p44, %p45
    %p47 = scmp.ne.s32.totalorder %s36, %s37
    %p48 = scmp.eq.s32.totalorder %s14, 0
    %p49 = por %p47, %p48
    %p50 = scmp.ne.s32.totalorder %s36, %s37
    %p51 = scmp.eq.s32.totalorder %s15, 1
    %p52 = por %p50, %p51
    %p54 = scmp.ne.s32.totalorder %s37, %s53
    %p55 = scmp.eq.s32.totalorder %s15, 0
    %p56 = por %p54, %p55
    %s57 = ssub.s32 %s16, %s28
    %p58 = scmp.eq.s32.totalorder %s57, 0
    %s60 = sadd.s32 %s59, 1
    %s61 = scalar_select %p58, %s59, %s60
    %p64 = pneg %p58
    %p65 = scmp.eq.s32.totalorder %s9, 1
    %p66 = por %p64, %p65
    %p67 = scmp.ne.s32.totalorder %s59, %s62
    %p68 = scmp.eq.s32.totalorder %s9, 0
    %p69 = por %p67, %p68
    %p70 = scmp.ne.s32.totalorder %s59, %s62
    %p71 = scmp.eq.s32.totalorder %s14, 1
    %p72 = por %p70, %p71
    %p73 = scmp.ne.s32.totalorder %s62, %s63
    %p74 = scmp.eq.s32.totalorder %s14, 0
    %p75 = por %p73, %p74
    %p76 = scmp.ne.s32.totalorder %s62, %s63
    %p77 = scmp.eq.s32.totalorder %s15, 1
    %p78 = por %p76, %p77
    %p80 = scmp.ne.s32.totalorder %s63, %s79
    %p81 = scmp.eq.s32.totalorder %s15, 0
    %p82 = por %p80, %p81
    %s83 = ssub.s32 %s16, %s28
    %p84 = scmp.eq.s32.totalorder %s83, 0
    %s86 = sadd.s32 %s85, 1
    %s87 = scalar_select %p84, %s85, %s86
    %p90 = pneg %p84
    %p91 = scmp.eq.s32.totalorder %s9, 1
    %p92 = por %p90, %p91
    %p93 = scmp.ne.s32.totalorder %s85, %s88
    %p94 = scmp.eq.s32.totalorder %s9, 0
    %p95 = por %p93, %p94
    %p96 = scmp.ne.s32.totalorder %s85, %s88
    %p97 = scmp.eq.s32.totalorder %s14, 1
    %p98 = por %p96, %p97
    %p99 = scmp.ne.s32.totalorder %s88, %s89
    %p100 = scmp.eq.s32.totalorder %s14, 0
    %p101 = por %p99, %p100
    %p102 = scmp.ne.s32.totalorder %s88, %s89
    %p103 = scmp.eq.s32.totalorder %s15, 1
    %p104 = por %p102, %p103
    %p106 = scmp.ne.s32.totalorder %s89, %s105
    %p107 = scmp.eq.s32.totalorder %s15, 0
    %p108 = por %p106, %p107
    %s109 = ssub.s32 %s16, %s28
    %s110 = ssub.s32 %s17, %s24
    %s111 = sor.u32 %s109, %s110
    %p112 = scmp.eq.s32.totalorder %s111, 0
    %s114 = sadd.s32 %s113, 1
    %s115 = scalar_select %p112, %s113, %s114
    %p118 = pneg %p112
    %p119 = scmp.eq.s32.totalorder %s9, 1
    %p120 = por %p118, %p119
    %p121 = scmp.ne.s32.totalorder %s113, %s116
    %p122 = scmp.eq.s32.totalorder %s9, 0
    %p123 = por %p121, %p122
    %p124 = scmp.ne.s32.totalorder %s113, %s116
    %p125 = scmp.eq.s32.totalorder %s14, 1
    %p126 = por %p124, %p125
    %p127 = scmp.ne.s32.totalorder %s116, %s117
    %p128 = scmp.eq.s32.totalorder %s14, 0
    %p129 = por %p127, %p128
    %p130 = scmp.ne.s32.totalorder %s116, %s117
    %p131 = scmp.eq.s32.totalorder %s15, 1
    %p132 = por %p130, %p131
    %p134 = scmp.ne.s32.totalorder %s117, %s133
    %p135 = scmp.eq.s32.totalorder %s15, 0
    %p136 = por %p134, %p135
    %p137 = scmp.le.s32.totalorder 1, %s9
    %p138 = scmp.lt.s32.totalorder %s9, 3
    %p139 = pnand %p137, %p138
    %p140 = pneg %p139
    // Predicated region
    $region9: #{memformer_forward.31} parent=5 // pred_check
      _
    $region10: #{memformer_forward.31} parent=5 // pred_check_branch
      %142 = sbr.rel (%p139) target = $region12
    $region11: #{memformer_forward.31} parent=5 // pred_region
      %s143 = ssub.s32 %s9, 1
    $region12: #{memformer_forward.31} parent=5 // pred_fallthru
      _
    %p144 = scmp.lt.s32.totalorder %s9, 2
    // Predicated region
    $region13: #{memformer_forward.31} parent=5 // pred_check
      %p145 = pneg %p144
    $region14: #{memformer_forward.31} parent=5 // pred_check_branch
      %147 = sbr.rel (%p145) target = $region16
    $region15: #{memformer_forward.31} parent=5 // pred_region
      // Predicated region
      $region17: #{memformer_forward.31} parent=15 // pred_check
        %p148 = pneg %p43
      $region18: #{memformer_forward.31} parent=15 // pred_check_branch
        %150 = sbr.rel (%p148) target = $region20
      $region19: #{memformer_forward.31} parent=15 // pred_region
        %p151 = scmp.lt.s32.totalorder %s16, 1
        %s152 = scalar_select %p151, %s16, 1
        %p153 = scmp.lt.s32.totalorder %s17, 0
        %s154 = scalar_select %p153, %s17, 0
        %s155 = sadd.s32 %s154, %s152
        %s156 = smul.addr %s155, 8
        %s157 = scalar_lea.vmem %s0, %s156
      $region20: #{memformer_forward.31} parent=15 // pred_fallthru
        _
      // Predicated region
      $region21: #{memformer_forward.31} parent=15 // pred_check
        %p158 = pneg %p69
      $region22: #{memformer_forward.31} parent=15 // pred_check_branch
        %160 = sbr.rel (%p158) target = $region24
      $region23: #{memformer_forward.31} parent=15 // pred_region
        %p161 = scmp.lt.s32.totalorder %s16, 1
        %s162 = scalar_select %p161, %s16, 1
        %s163 = smul.addr %s162, 4
        %s164 = scalar_lea.vmem %s1, %s163
      $region24: #{memformer_forward.31} parent=15 // pred_fallthru
        _
      // Predicated region
      $region25: #{memformer_forward.31} parent=15 // pred_check
        %p165 = pneg %p95
      $region26: #{memformer_forward.31} parent=15 // pred_check_branch
        %167 = sbr.rel (%p165) target = $region28
      $region27: #{memformer_forward.31} parent=15 // pred_region
        %p168 = scmp.lt.s32.totalorder %s16, 1
        %s169 = scalar_select %p168, %s16, 1
        %s170 = smul.addr %s169, 4
        %s171 = scalar_lea.vmem %s2, %s170
      $region28: #{memformer_forward.31} parent=15 // pred_fallthru
        _
    $region16: #{memformer_forward.31} parent=5 // pred_fallthru
      _
    %p172 = scmp.le.s32.totalorder 1, %s9
    %p173 = scmp.lt.s32.totalorder %s9, 3
    %p174 = pnand %p172, %p173
    %p175 = pneg %p174
    // Predicated region
    $region29: #{memformer_forward.31} parent=5 // pred_check
      _
    $region30: #{memformer_forward.31} parent=5 // pred_check_branch
      %177 = sbr.rel (%p174) target = $region32
    $region31: #{memformer_forward.31} parent=5 // pred_region
      %s178 = ssub.s32 %s9, 1
      %p179 = scmp.lt.s32.totalorder %s18, 1
      %s180 = scalar_select %p179, %s18, 1
      %p181 = scmp.lt.s32.totalorder %s19, 0
      %s182 = scalar_select %p181, %s19, 0
      %s183 = sadd.s32 %s182, %s180
      %s184 = smul.addr %s183, 8
      %s185 = scalar_lea.vmem %s0, %s184
      %p186 = pneg %p49
      %p187 = pneg %p46
      %p188 = scmp.lt.s32.totalorder %s18, 1
      %s189 = scalar_select %p188, %s18, 1
      %s190 = smul.addr %s189, 4
      %s191 = scalar_lea.vmem %s1, %s190
      %p192 = pneg %p75
      %p193 = pneg %p72
      %p194 = scmp.lt.s32.totalorder %s18, 1
      %s195 = scalar_select %p194, %s18, 1
      %s196 = smul.addr %s195, 4
      %s197 = scalar_lea.vmem %s2, %s196
      %p198 = pneg %p101
      %p199 = pneg %p98
      %p200 = pneg %p129
      %p201 = pneg %p126
      %p202 = scmp.lt.s32.totalorder %s18, 1
      %s203 = scalar_select %p202, %s18, 1
      %p204 = scmp.lt.s32.totalorder %s19, 0
      %s205 = scalar_select %p204, %s19, 0
      %s206 = sadd.s32 %s205, %s203
      %s207 = smul.addr %s206, 8
      %s208 = scalar_lea.vmem %s3, %s207
      %p209 = scmp.lt.s32.totalorder %s18, 1
      %s210 = scalar_select %p209, %s18, 1
      %p211 = scmp.lt.s32.totalorder %s19, 0
      %s212 = scalar_select %p211, %s19, 0
      %s213 = sadd.s32 %s212, %s210
      %s214 = smul.addr %s213, 8
      %s215 = scalar_lea.vmem %s0, %s214
      %p216 = scmp.lt.s32.totalorder %s18, 1
      %s217 = scalar_select %p216, %s18, 1
      %s218 = smul.addr %s217, 4
      %s219 = scalar_lea.vmem %s1, %s218
      %p220 = scmp.lt.s32.totalorder %s18, 1
      %s221 = scalar_select %p220, %s18, 1
      %s222 = smul.addr %s221, 4
      %s223 = scalar_lea.vmem %s2, %s222
      %p224 = scmp.lt.s32.totalorder %s18, 1
      %s225 = scalar_select %p224, %s18, 1
      %p226 = scmp.lt.s32.totalorder %s19, 0
      %s227 = scalar_select %p226, %s19, 0
      %s228 = sadd.s32 %s227, %s225
      %s229 = smul.addr %s228, 8
      %s230 = scalar_lea.vmem %s3, %s229
      %v232 = vld [vmem:[%s215] sm:$0xff]
      %v233 = vld [vmem:[%s219] sm:$0xf]
      %v234 = vld [vmem:[%s223] sm:$0xf]
      %v235 = vpack.c.bf16 %v232, %v232
      %v236 = vpack.c.bf16 %v233, %v233
      %v237 = vpack.c.bf16 %v234, %v234
      %vm238 = vcmask 64512
      %v240 = vsel %vm238, %v235, 0
      %v243 = vsel %vm238, %v236, 0
      %245 = vmatpush.bf16.xpose.msra.mxu0 0
      %246 = vmatpush.bf16.xpose.msra.mxu0 0
      %247 = vmatpush.bf16.xpose.msra.mxu0 0
      %248 = vmatpush.bf16.xpose.msra.mxu0 0
      %249 = vmatpush.bf16.xpose.msra.mxu0 0
      %250 = vmatpush.bf16.xpose.msra.mxu0 0
      %251 = vmatpush.bf16.xpose.msra.mxu0 0
      %252 = vmatpush.bf16.xpose.msra.mxu0 %v243
      %253 = vmatmul.bf16.gmra.mxu0 %v240
      %v254 = vpop.f32.mrf.mxu0
      %v255 = vadd.f32 0.0, %v254
      %v256 = vpop.f32.mrf.mxu0
      %257 = vdwg.mxu0
      %v258 = vmul.f32 %v255, 0.35355338
      %vm259 = vcmask 31744
      %v260 = vsel %vm259, %v258, -inf
      %261 = vmax.xlane.f32.xlu0 %v260
      %v262 = vpop.xlane.xlu0 %261
      %v263 = vsub.f32 %v258, %v262
      %v264 = vmul.f32 %v263, 1.442695
      %v265 = vpow.pop %v264
      %v266 = vsel %vm259, %v265, 0.0
      %267 = vadd.xlane.f32.xlu0 %v266
      %v268 = vpop.xlane.xlu0 %267
      %v269 = vrcp.pop %v268
      %v270 = vmul.f32 %v265, %v269
      %v271 = vpack.c.bf16 %v270, %v270
      %v273 = vsel %vm259, %v271, 0
      %vm275 = vcmask 1041408
      %v277 = vsel %vm275, %v237, 0
      %279 = vmatpush.bf16.msra.mxu0 0
      %280 = vmatpush.bf16.msra.mxu0 0
      %281 = vmatpush.bf16.msra.mxu0 0
      %282 = vmatpush.bf16.msra.mxu0 0
      %283 = vmatpush.bf16.msra.mxu0 0
      %284 = vmatpush.bf16.msra.mxu0 0
      %285 = vmatpush.bf16.msra.mxu0 0
      %286 = vmatpush.bf16.msra.mxu0 %v277
      %287 = vmatmul.bf16.gmra.mxu0 %v273
      %v288 = vpop.f32.mrf.mxu0
      %v289 = vadd.f32 0.0, %v288
      %v290 = vpop.f32.mrf.mxu0
      %291 = vdwg.mxu0
      %293 = vrot.lane.b32.xlu0 %v235, 120
      %v294 = vpop.permute.xlu0 %293
      %296 = vrot.lane.b32.xlu0 %v236, 120
      %v297 = vpop.permute.xlu0 %296
      %v299 = vsel %vm238, %v294, 0
      %v302 = vsel %vm238, %v297, 0
      %304 = vmatpush.bf16.xpose.msra.mxu0 0
      %305 = vmatpush.bf16.xpose.msra.mxu0 0
      %306 = vmatpush.bf16.xpose.msra.mxu0 0
      %307 = vmatpush.bf16.xpose.msra.mxu0 0
      %308 = vmatpush.bf16.xpose.msra.mxu0 0
      %309 = vmatpush.bf16.xpose.msra.mxu0 0
      %310 = vmatpush.bf16.xpose.msra.mxu0 0
      %311 = vmatpush.bf16.xpose.msra.mxu0 %v302
      %312 = vmatmul.bf16.gmra.mxu0 %v299
      %v313 = vpop.f32.mrf.mxu0
      %v314 = vadd.f32 0.0, %v313
      %v315 = vpop.f32.mrf.mxu0
      %316 = vdwg.mxu0
      %v317 = vmul.f32 %v314, 0.35355338
      %v318 = vsel %vm259, %v317, -inf
      %319 = vmax.xlane.f32.xlu0 %v318
      %v320 = vpop.xlane.xlu0 %319
      %v321 = vsub.f32 %v317, %v320
      %v322 = vmul.f32 %v321, 1.442695
      %v323 = vpow.pop %v322
      %v324 = vsel %vm259, %v323, 0.0
      %325 = vadd.xlane.f32.xlu0 %v324
      %v326 = vpop.xlane.xlu0 %325
      %v327 = vrcp.pop %v326
      %v328 = vmul.f32 %v323, %v327
      %v329 = vpack.c.bf16 %v328, %v328
      %331 = vrot.lane.b32.xlu0 %v237, 120
      %v332 = vpop.permute.xlu0 %331
      %v334 = vsel %vm259, %v329, 0
      %v337 = vsel %vm275, %v332, 0
      %339 = vmatpush.bf16.msra.mxu0 0
      %340 = vmatpush.bf16.msra.mxu0 0
      %341 = vmatpush.bf16.msra.mxu0 0
      %342 = vmatpush.bf16.msra.mxu0 0
      %343 = vmatpush.bf16.msra.mxu0 0
      %344 = vmatpush.bf16.msra.mxu0 0
      %345 = vmatpush.bf16.msra.mxu0 0
      %346 = vmatpush.bf16.msra.mxu0 %v337
      %347 = vmatmul.bf16.gmra.mxu0 %v334
      %v348 = vpop.f32.mrf.mxu0
      %v349 = vadd.f32 0.0, %v348
      %v350 = vpop.f32.mrf.mxu0
      %351 = vdwg.mxu0
      %352 = vrot.lane.b32.xlu0 %v235, 112
      %v353 = vpop.permute.xlu0 %352
      %354 = vrot.lane.b32.xlu0 %v236, 112
      %v355 = vpop.permute.xlu0 %354
      %v357 = vsel %vm238, %v353, 0
      %v360 = vsel %vm238, %v355, 0
      %362 = vmatpush.bf16.xpose.msra.mxu0 0
      %363 = vmatpush.bf16.xpose.msra.mxu0 0
      %364 = vmatpush.bf16.xpose.msra.mxu0 0
      %365 = vmatpush.bf16.xpose.msra.mxu0 0
      %366 = vmatpush.bf16.xpose.msra.mxu0 0
      %367 = vmatpush.bf16.xpose.msra.mxu0 0
      %368 = vmatpush.bf16.xpose.msra.mxu0 0
      %369 = vmatpush.bf16.xpose.msra.mxu0 %v360
      %370 = vmatmul.bf16.gmra.mxu0 %v357
      %v371 = vpop.f32.mrf.mxu0
      %v372 = vadd.f32 0.0, %v371
      %v373 = vpop.f32.mrf.mxu0
      %374 = vdwg.mxu0
      %v375 = vmul.f32 %v372, 0.35355338
      %v376 = vsel %vm259, %v375, -inf
      %377 = vmax.xlane.f32.xlu0 %v376
      %v378 = vpop.xlane.xlu0 %377
      %v379 = vsub.f32 %v375, %v378
      %v380 = vmul.f32 %v379, 1.442695
      %v381 = vpow.pop %v380
      %v382 = vsel %vm259, %v381, 0.0
      %383 = vadd.xlane.f32.xlu0 %v382
      %v384 = vpop.xlane.xlu0 %383
      %v385 = vrcp.pop %v384
      %v386 = vmul.f32 %v381, %v385
      %v387 = vpack.c.bf16 %v386, %v386
      %388 = vrot.lane.b32.xlu0 %v237, 112
      %v389 = vpop.permute.xlu0 %388
      %v391 = vsel %vm259, %v387, 0
      %v394 = vsel %vm275, %v389, 0
      %396 = vmatpush.bf16.msra.mxu0 0
      %397 = vmatpush.bf16.msra.mxu0 0
      %398 = vmatpush.bf16.msra.mxu0 0
      %399 = vmatpush.bf16.msra.mxu0 0
      %400 = vmatpush.bf16.msra.mxu0 0
      %401 = vmatpush.bf16.msra.mxu0 0
      %402 = vmatpush.bf16.msra.mxu0 0
      %403 = vmatpush.bf16.msra.mxu0 %v394
      %404 = vmatmul.bf16.gmra.mxu0 %v391
      %v405 = vpop.f32.mrf.mxu0
      %v406 = vadd.f32 0.0, %v405
      %v407 = vpop.f32.mrf.mxu0
      %408 = vdwg.mxu0
      %409 = vrot.lane.b32.xlu0 %v235, 104
      %v410 = vpop.permute.xlu0 %409
      %411 = vrot.lane.b32.xlu0 %v236, 104
      %v412 = vpop.permute.xlu0 %411
      %v414 = vsel %vm238, %v410, 0
      %v417 = vsel %vm238, %v412, 0
      %419 = vmatpush.bf16.xpose.msra.mxu0 0
      %420 = vmatpush.bf16.xpose.msra.mxu0 0
      %421 = vmatpush.bf16.xpose.msra.mxu0 0
      %422 = vmatpush.bf16.xpose.msra.mxu0 0
      %423 = vmatpush.bf16.xpose.msra.mxu0 0
      %424 = vmatpush.bf16.xpose.msra.mxu0 0
      %425 = vmatpush.bf16.xpose.msra.mxu0 0
      %426 = vmatpush.bf16.xpose.msra.mxu0 %v417
      %427 = vmatmul.bf16.gmra.mxu0 %v414
      %v428 = vpop.f32.mrf.mxu0
      %v429 = vadd.f32 0.0, %v428
      %v430 = vpop.f32.mrf.mxu0
      %431 = vdwg.mxu0
      %v432 = vmul.f32 %v429, 0.35355338
      %v433 = vsel %vm259, %v432, -inf
      %434 = vmax.xlane.f32.xlu0 %v433
      %v435 = vpop.xlane.xlu0 %434
      %v436 = vsub.f32 %v432, %v435
      %v437 = vmul.f32 %v436, 1.442695
      %v438 = vpow.pop %v437
      %v439 = vsel %vm259, %v438, 0.0
      %440 = vadd.xlane.f32.xlu0 %v439
      %v441 = vpop.xlane.xlu0 %440
      %v442 = vrcp.pop %v441
      %v443 = vmul.f32 %v438, %v442
      %v444 = vpack.c.bf16 %v443, %v443
      %445 = vrot.lane.b32.xlu0 %v237, 104
      %v446 = vpop.permute.xlu0 %445
      %v448 = vsel %vm259, %v444, 0
      %v451 = vsel %vm275, %v446, 0
      %453 = vmatpush.bf16.msra.mxu0 0
      %454 = vmatpush.bf16.msra.mxu0 0
      %455 = vmatpush.bf16.msra.mxu0 0
      %456 = vmatpush.bf16.msra.mxu0 0
      %457 = vmatpush.bf16.msra.mxu0 0
      %458 = vmatpush.bf16.msra.mxu0 0
      %459 = vmatpush.bf16.msra.mxu0 0
      %460 = vmatpush.bf16.msra.mxu0 %v451
      %461 = vmatmul.bf16.gmra.mxu0 %v448
      %v462 = vpop.f32.mrf.mxu0
      %v463 = vadd.f32 0.0, %v462
      %v464 = vpop.f32.mrf.mxu0
      %465 = vdwg.mxu0
      %467 = vrot.lane.b32.xlu0 %v349, 8
      %v468 = vpop.permute.xlu0 %467
      %471 = vrot.lane.b32.xlu0 %v406, 16
      %v472 = vpop.permute.xlu0 %471
      %475 = vrot.lane.b32.xlu0 %v463, 24
      %v476 = vpop.permute.xlu0 %475
      %v478 = vsel %vm238, %v289, %v468
      %vm479 = vcmask 130048
      %v480 = vsel %vm479, %v478, %v472
      %vm481 = vcmask 195584
      %v482 = vsel %vm481, %v480, %v476
      %vm483 = vcmask 261120
      %484 = vst.msk [vmem:[%s230] sm:$0xff] %vm483, %v482
      %p485 = scmp.lt.s32.totalorder %s18, 1
      %s486 = scalar_select %p485, %s18, 1
      %p487 = scmp.lt.s32.totalorder %s19, 0
      %s488 = scalar_select %p487, %s19, 0
      %s489 = sadd.s32 %s488, %s486
      %s490 = smul.addr %s489, 8
      %s491 = scalar_lea.vmem %s3, %s490
      // Predicated region
      $region33: #{memformer_forward.31} parent=31 // pred_check
        %p492 = pneg %p126
      $region34: #{memformer_forward.31} parent=31 // pred_check_branch
        %494 = sbr.rel (%p492) target = $region36
      $region35: #{memformer_forward.31} parent=31 // pred_region
        _
      $region36: #{memformer_forward.31} parent=31 // pred_fallthru
        _
    $region32: #{memformer_forward.31} parent=5 // pred_fallthru
      _
    %p495 = scmp.le.s32.totalorder 2, %s9
    // Predicated region
    $region37: #{memformer_forward.31} parent=5 // pred_check
      %p496 = pneg %p495
    $region38: #{memformer_forward.31} parent=5 // pred_check_branch
      %498 = sbr.rel (%p496) target = $region40
    $region39: #{memformer_forward.31} parent=5 // pred_region
      %s499 = ssub.s32 %s9, 2
      // Predicated region
      $region41: #{memformer_forward.31} parent=39 // pred_check
        %p500 = pneg %p132
      $region42: #{memformer_forward.31} parent=39 // pred_check_branch
        %502 = sbr.rel (%p500) target = $region44
      $region43: #{memformer_forward.31} parent=39 // pred_region
        %p503 = scmp.lt.s32.totalorder %s20, 1
        %s504 = scalar_select %p503, %s20, 1
        %p505 = scmp.lt.s32.totalorder %s21, 0
        %s506 = scalar_select %p505, %s21, 0
        %s507 = sadd.s32 %s506, %s504
        %s508 = smul.addr %s507, 8
        %s509 = scalar_lea.vmem %s3, %s508
      $region44: #{memformer_forward.31} parent=39 // pred_fallthru
        _
    $region40: #{memformer_forward.31} parent=5 // pred_fallthru
      _
  $region6: #{memformer_forward.31} parent=0 // loop_footer
    %s13 = sadd.s32 1, %s9
  $region7: #{memformer_forward.31} parent=0 // loop_footer_branch
    %8 = sbr.rel target = $region3
  $region8: #{memformer_forward.31} parent=0 // loop_exit
    _

// kernel: memformer_forward.34
$region0: #{memformer_forward.34}
  #allocation0 [shape = 'u32[]', space=smem, size = 0x4, offset = 0x4, fixed_abs, tag = 'smem constant byte address 0x4 - core index']
  #allocation1 [shape = 'u32[72,128]{1,0:T(1,128)}', space=vmem, size = 0x9000, scoped, tag = 'internal scratch']
  #allocation2 [shape = 'f32[16,32]{1,0:T(8,128)}', space=vmem, size = 0x2000, scoped, tag = 'scratch operand']
  %s0 = inlined_call_operand.vmem [shape: f32[16,128], index: 0, kind: input, shape index: {}]
  %s1 = inlined_call_operand.vmem [shape: bf16[128,32], index: 1, kind: input, shape index: {}]
  %s2 = inlined_call_operand.vmem [shape: f32[1,32], index: 2, kind: input, shape index: {}]
  %s3 = inlined_call_operand.vmem [shape: f32[16,32], index: 3, kind: output, shape index: {}]
  %s4 = sld [smem:[#allocation0]]
  $region30: #{memformer_forward.34} parent=0
    _
  %s6 = ssub.s32 1, %s4
  %s7 = scalar_select 0, %s6, %s4
  // Predicated region
  $region2: #{memformer_forward.34} parent=0 // pred_check
    _
  $region3: #{memformer_forward.34} parent=0 // pred_check_branch
    %9 = sbr.rel (0) target = $region5
  $region4: #{memformer_forward.34} parent=0 // pred_region
    _
  $region5: #{memformer_forward.34} parent=0 // pred_fallthru
    _
  // Predicated region
  $region6: #{memformer_forward.34} parent=0 // pred_check
    _
  $region7: #{memformer_forward.34} parent=0 // pred_check_branch
    %11 = sbr.rel (0) target = $region9
  $region8: #{memformer_forward.34} parent=0 // pred_region
    _
  $region9: #{memformer_forward.34} parent=0 // pred_fallthru
    _
  // Predicated region
  $region10: #{memformer_forward.34} parent=0 // pred_check
    _
  $region11: #{memformer_forward.34} parent=0 // pred_check_branch
    %13 = sbr.rel (0) target = $region13
  $region12: #{memformer_forward.34} parent=0 // pred_region
    _
  $region13: #{memformer_forward.34} parent=0 // pred_fallthru
    _
  %p14 = scmp.eq.s32.totalorder 0, 0
  // Predicated region
  $region14: #{memformer_forward.34} parent=0 // pred_check
    %p15 = pneg %p14
  $region15: #{memformer_forward.34} parent=0 // pred_check_branch
    %17 = sbr.rel (%p15) target = $region17
  $region16: #{memformer_forward.34} parent=0 // pred_region
    %vm18 = vcmask 261120
    %19 = vst.msk [vmem:[#allocation2] sm:$0xff] %vm18, 0.0
    %20 = vst.msk [vmem:[#allocation2 + $0x8] sm:$0xff] %vm18, 0.0
  $region17: #{memformer_forward.34} parent=0 // pred_fallthru
    _
  %v21 = vld [vmem:[#allocation2] sm:$0xff]
  %v22 = vld [vmem:[#allocation2 + $0x8] sm:$0xff]
  %v23 = vld [vmem:[%s0] sm:$0xff]
  %v24 = vld [vmem:[%s0 + $0x8] sm:$0xff]
  %v25 = vpack.c.bf16 %v24, %v23
  %v26 = vld [vmem:[%s1] sm:$0xf]
  %v27 = vld [vmem:[%s1 + $0x4] sm:$0xf]
  %v28 = vld [vmem:[%s1 + $0x8] sm:$0xf]
  %v29 = vld [vmem:[%s1 + $0xc] sm:$0xf]
  %v30 = vld [vmem:[%s1 + $0x10] sm:$0xf]
  %v31 = vld [vmem:[%s1 + $0x14] sm:$0xf]
  %v32 = vld [vmem:[%s1 + $0x18] sm:$0xf]
  %v33 = vld [vmem:[%s1 + $0x1c] sm:$0xf]
  %v34 = vld [vmem:[%s1 + $0x20] sm:$0xf]
  %v35 = vld [vmem:[%s1 + $0x24] sm:$0xf]
  %v36 = vld [vmem:[%s1 + $0x28] sm:$0xf]
  %v37 = vld [vmem:[%s1 + $0x2c] sm:$0xf]
  %v38 = vld [vmem:[%s1 + $0x30] sm:$0xf]
  %v39 = vld [vmem:[%s1 + $0x34] sm:$0xf]
  %v40 = vld [vmem:[%s1 + $0x38] sm:$0xf]
  %v41 = vld [vmem:[%s1 + $0x3c] sm:$0xf]
  %v58 = vunpack.c.l.b16 %v26
  %v59 = vunpack.c.l.b16 %v27
  %v60 = vunpack.c.l.b16 %v28
  %v61 = vunpack.c.l.b16 %v29
  %v62 = vunpack.c.l.b16 %v30
  %v63 = vunpack.c.l.b16 %v31
  %v64 = vunpack.c.l.b16 %v32
  %v65 = vunpack.c.l.b16 %v33
  %v66 = vunpack.c.l.b16 %v34
  %v67 = vunpack.c.l.b16 %v35
  %v68 = vunpack.c.l.b16 %v36
  %v69 = vunpack.c.l.b16 %v37
  %v70 = vunpack.c.l.b16 %v38
  %v71 = vunpack.c.l.b16 %v39
  %v72 = vunpack.c.l.b16 %v40
  %v73 = vunpack.c.l.b16 %v41
  %v74 = vpack.c.b16 %v59, %v58
  %v75 = vpack.c.b16 %v61, %v60
  %v76 = vpack.c.b16 %v63, %v62
  %v77 = vpack.c.b16 %v65, %v64
  %v78 = vpack.c.b16 %v67, %v66
  %v79 = vpack.c.b16 %v69, %v68
  %v80 = vpack.c.b16 %v71, %v70
  %v81 = vpack.c.b16 %v73, %v72
  %90 = vmatpush.bf16.msra.mxu0 %v81
  %91 = vmatpush.bf16.msra.mxu0 %v80
  %92 = vmatpush.bf16.msra.mxu0 %v79
  %93 = vmatpush.bf16.msra.mxu0 %v78
  %94 = vmatpush.bf16.msra.mxu0 %v77
  %95 = vmatpush.bf16.msra.mxu0 %v76
  %96 = vmatpush.bf16.msra.mxu0 %v75
  %97 = vmatpush.bf16.msra.mxu0 %v74
  %98 = vmatmul.bf16.gmra.mxu0 %v25
  %v99 = vpop.f32.mrf.mxu0
  %v100 = vadd.f32 0.0, %v99
  %v101 = vpop.f32.mrf.mxu0
  %v102 = vadd.f32 0.0, %v101
  %103 = vdwg.mxu0
  %v104 = vadd.f32 %v21, %v100
  %v105 = vadd.f32 %v22, %v102
  %vm106 = vcmask 261120
  %107 = vst.msk [vmem:[#allocation2] sm:$0xff] %vm106, %v104
  %108 = vst.msk [vmem:[#allocation2 + $0x8] sm:$0xff] %vm106, %v105
  // Predicated region
  $region18: #{memformer_forward.34} parent=0 // pred_check
    %p109 = pneg %p14
  $region19: #{memformer_forward.34} parent=0 // pred_check_branch
    %111 = sbr.rel (%p109) target = $region21
  $region20: #{memformer_forward.34} parent=0 // pred_region
    %v112 = vld [vmem:[#allocation2] sm:$0xff]
    %v113 = vld [vmem:[#allocation2 + $0x8] sm:$0xff]
    %v114 = vld [vmem:[%s2] sm:$0x1]
    %v116 = vperm.slane %v114, 0
    %v118 = vadd.f32 %v112, %v116
    %v119 = vadd.f32 %v113, %v116
    %120 = vst.msk [vmem:[%s3] sm:$0xff] %vm106, %v118
    %121 = vst.msk [vmem:[%s3 + $0x8] sm:$0xff] %vm106, %v119
  $region21: #{memformer_forward.34} parent=0 // pred_fallthru
    _
  // Predicated region
  $region22: #{memformer_forward.34} parent=0 // pred_check
    _
  $region23: #{memformer_forward.34} parent=0 // pred_check_branch
    %123 = sbr.rel (0) target = $region25
  $region24: #{memformer_forward.34} parent=0 // pred_region
    _
  $region25: #{memformer_forward.34} parent=0 // pred_fallthru
    _
  // Predicated region
  $region26: #{memformer_forward.34} parent=0 // pred_check
    _
  $region27: #{memformer_forward.34} parent=0 // pred_check_branch
    %125 = sbr.rel (0) target = $region29
  $region28: #{memformer_forward.34} parent=0 // pred_region
    _
  $region29: #{memformer_forward.34} parent=0 // pred_fallthru
    _

// kernel: memformer_forward.33
$region0: #{memformer_forward.33}
  #allocation0 [shape = 'u32[]', space=smem, size = 0x4, offset = 0x4, fixed_abs, tag = 'smem constant byte address 0x4 - core index']
  #allocation1 [shape = 'u32[72,128]{1,0:T(1,128)}', space=vmem, size = 0x9000, scoped, tag = 'internal scratch']
  %s0 = inlined_call_operand.vmem [shape: f32[16,32], index: 0, kind: input, shape index: {}]
  %s1 = inlined_call_operand.vmem [shape: f32[1,32], index: 1, kind: input, shape index: {}]
  %s2 = inlined_call_operand.vmem [shape: f32[1,32], index: 2, kind: input, shape index: {}]
  %s3 = inlined_call_operand.vmem [shape: bf16[32,128], index: 3, kind: input, shape index: {}]
  %s4 = inlined_call_operand.vmem [shape: f32[1,128], index: 4, kind: input, shape index: {}]
  %s5 = inlined_call_operand.vmem [shape: f32[16,128], index: 5, kind: output, shape index: {}]
  %s6 = sld [smem:[#allocation0]]
  $region30: #{memformer_forward.33} parent=0
    _
  %s8 = ssub.s32 1, %s6
  %s9 = scalar_select 0, %s8, %s6
  // Predicated region
  $region2: #{memformer_forward.33} parent=0 // pred_check
    _
  $region3: #{memformer_forward.33} parent=0 // pred_check_branch
    %11 = sbr.rel (0) target = $region5
  $region4: #{memformer_forward.33} parent=0 // pred_region
    _
  $region5: #{memformer_forward.33} parent=0 // pred_fallthru
    _
  // Predicated region
  $region6: #{memformer_forward.33} parent=0 // pred_check
    _
  $region7: #{memformer_forward.33} parent=0 // pred_check_branch
    %13 = sbr.rel (0) target = $region9
  $region8: #{memformer_forward.33} parent=0 // pred_region
    _
  $region9: #{memformer_forward.33} parent=0 // pred_fallthru
    _
  // Predicated region
  $region10: #{memformer_forward.33} parent=0 // pred_check
    _
  $region11: #{memformer_forward.33} parent=0 // pred_check_branch
    %15 = sbr.rel (0) target = $region13
  $region12: #{memformer_forward.33} parent=0 // pred_region
    _
  $region13: #{memformer_forward.33} parent=0 // pred_fallthru
    _
  // Predicated region
  $region14: #{memformer_forward.33} parent=0 // pred_check
    _
  $region15: #{memformer_forward.33} parent=0 // pred_check_branch
    %17 = sbr.rel (0) target = $region17
  $region16: #{memformer_forward.33} parent=0 // pred_region
    _
  $region17: #{memformer_forward.33} parent=0 // pred_fallthru
    _
  // Predicated region
  $region18: #{memformer_forward.33} parent=0 // pred_check
    _
  $region19: #{memformer_forward.33} parent=0 // pred_check_branch
    %19 = sbr.rel (0) target = $region21
  $region20: #{memformer_forward.33} parent=0 // pred_region
    _
  $region21: #{memformer_forward.33} parent=0 // pred_fallthru
    _
  %v21 = vld [vmem:[%s0] sm:$0xff]
  %v22 = vld [vmem:[%s0 + $0x8] sm:$0xff]
  %vm23 = vcmask 261120
  %v24 = vsel %vm23, %v21, 0.0
  %25 = vadd.xlane.f32.xlu0 %v24
  %v26 = vpop.xlane.xlu0 %25
  %v27 = vsel %vm23, %v22, 0.0
  %28 = vadd.xlane.f32.xlu0 %v27
  %v29 = vpop.xlane.xlu0 %28
  %v30 = vrcp.pop 32.0
  %v31 = vmul.f32 32.0, %v30
  %v32 = vsub.f32 1.0, %v31
  %v33 = vmul.f32 %v30, %v32
  %v34 = vadd.f32 %v30, %v33
  %vm35 = vweird.f32 %v30
  %v36 = vsel %vm35, %v30, %v34
  %v37 = vmul.f32 %v26, %v36
  %v38 = vmul.f32 %v29, %v36
  %v39 = vsub.f32 %v21, %v37
  %v40 = vsub.f32 %v22, %v38
  %v41 = vmul.f32 %v39, %v39
  %v42 = vmul.f32 %v40, %v40
  %v43 = vsel %vm23, %v41, 0.0
  %44 = vadd.xlane.f32.xlu0 %v43
  %v45 = vpop.xlane.xlu0 %44
  %v46 = vsel %vm23, %v42, 0.0
  %47 = vadd.xlane.f32.xlu0 %v46
  %v48 = vpop.xlane.xlu0 %47
  %v49 = vmul.f32 %v45, %v36
  %v50 = vmul.f32 %v48, %v36
  %v51 = vadd.f32 %v49, 1e-05
  %v52 = vadd.f32 %v50, 1e-05
  %v53 = vrsqrt.pop %v51
  %v54 = vmul.f32 %v53, %v51
  %v55 = vmul.f32 %v54, %v53
  %v56 = vmul.f32 0.5, %v55
  %v57 = vsub.f32 1.5, %v56
  %v58 = vmul.f32 %v53, %v57
  %vm59 = vweird.f32 %v51
  %vm60 = vweird.f32 %v53
  %vm61 = vmor %vm59, %vm60
  %v62 = vsel %vm61, %v53, %v58
  %v63 = vrsqrt.pop %v52
  %v64 = vmul.f32 %v63, %v52
  %v65 = vmul.f32 %v64, %v63
  %v66 = vmul.f32 0.5, %v65
  %v67 = vsub.f32 1.5, %v66
  %v68 = vmul.f32 %v63, %v67
  %vm69 = vweird.f32 %v52
  %vm70 = vweird.f32 %v63
  %vm71 = vmor %vm69, %vm70
  %v72 = vsel %vm71, %v63, %v68
  %v73 = vmul.f32 %v39, %v62
  %v74 = vmul.f32 %v40, %v72
  %v75 = vld [vmem:[%s1] sm:$0x1]
  %v77 = vperm.slane %v75, 0
  %v79 = vmul.f32 %v73, %v77
  %v80 = vmul.f32 %v74, %v77
  %v81 = vld [vmem:[%s2] sm:$0x1]
  %v83 = vperm.slane %v81, 0
  %v85 = vadd.f32 %v79, %v83
  %v86 = vadd.f32 %v80, %v83
  %v87 = vpack.c.bf16 %v86, %v85
  %v88 = vld [vmem:[%s3] sm:$0xf]
  %v89 = vld [vmem:[%s3 + $0x4] sm:$0xf]
  %v90 = vld [vmem:[%s3 + $0x8] sm:$0xf]
  %v91 = vld [vmem:[%s3 + $0xc] sm:$0xf]
  %v92 = vld [vmem:[%s4] sm:$0x1]
  %v94 = vperm.slane %v92, 0
  %v100 = vunpack.c.l.b16 %v88
  %v101 = vunpack.c.l.b16 %v89
  %v102 = vunpack.c.l.b16 %v90
  %v103 = vunpack.c.l.b16 %v91
  %v104 = vpack.c.b16 %v101, %v100
  %v105 = vpack.c.b16 %v103, %v102
  %v109 = vsel %vm23, %v87, 0
  %111 = vmatpush.bf16.msra.mxu0 0
  %112 = vmatpush.bf16.msra.mxu0 0
  %113 = vmatpush.bf16.msra.mxu0 0
  %114 = vmatpush.bf16.msra.mxu0 0
  %115 = vmatpush.bf16.msra.mxu0 0
  %116 = vmatpush.bf16.msra.mxu0 0
  %117 = vmatpush.bf16.msra.mxu0 %v105
  %118 = vmatpush.bf16.msra.mxu0 %v104
  %119 = vmatmul.bf16.gmra.mxu0 %v109
  %v120 = vpop.f32.mrf.mxu0
  %v121 = vadd.f32 %v94, %v120
  %v122 = vpop.f32.mrf.mxu0
  %v123 = vadd.f32 %v94, %v122
  %124 = vdwg.mxu0
  %v125 = vmul.f32 %v121, 0.5
  %v126 = vmul.f32 %v123, 0.5
  %v127 = vmul.f32 %v121, 0.70710677
  %v128 = vmul.f32 %v123, 0.70710677
  %v129 = vmul.f32 %v127, %v127
  %v130 = vmin.f32 16.0, %v129
  %v131 = vmul.f32 %v130, 2.1237322e-06
  %v132 = vadd.f32 %v131, 0.00028619796
  %v133 = vmul.f32 %v130, %v132
  %v134 = vadd.f32 %v133, 0.0036580483
  %v135 = vmul.f32 %v130, %v134
  %v136 = vadd.f32 %v135, 0.05243302
  %v137 = vmul.f32 %v130, %v136
  %v138 = vadd.f32 %v137, 0.18741608
  %v139 = vmul.f32 %v130, %v138
  %v140 = vadd.f32 %v139, 1.1283791
  %v141 = vmul.f32 %v127, %v140
  %v142 = vmul.f32 %v130, 3.8918573e-05
  %v143 = vadd.f32 %v142, 0.001143296
  %v144 = vmul.f32 %v130, %v143
  %v145 = vadd.f32 %v144, 0.014752088
  %v146 = vmul.f32 %v130, %v145
  %v147 = vadd.f32 %v146, 0.112945676
  %v148 = vmul.f32 %v130, %v147
  %v149 = vadd.f32 %v148, 0.4994258
  %v150 = vmul.f32 %v130, %v149
  %v151 = vadd.f32 %v150, 1.0
  %v152 = vrcp.pop %v151
  %v153 = vmul.f32 %v151, %v152
  %v154 = vsub.f32 1.0, %v153
  %v155 = vmul.f32 %v152, %v154
  %v156 = vadd.f32 %v152, %v155
  %vm157 = vweird.f32 %v151
  %vm158 = vweird.f32 %v152
  %vm159 = vmor %vm157, %vm158
  %v160 = vsel %vm159, %v152, %v156
  %v161 = vand.u32 2147483647, %v151
  %vm162 = vcmp.eq.f32.partialorder %v161, 8.507059e+37
  %v163 = vand.u32 %v151, 2147483648
  %v164 = vor.u32 1.1754944e-38, %v163
  %v165 = vsel %vm162, %v164, %v160
  %v166 = vmul.f32 %v141, %v165
  %v167 = vmin.f32 %v166, 1.0
  %v168 = vmax.f32 %v167, -1.0
  %v169 = vmul.f32 %v128, %v128
  %v170 = vmin.f32 16.0, %v169
  %v171 = vmul.f32 %v170, 2.1237322e-06
  %v172 = vadd.f32 %v171, 0.00028619796
  %v173 = vmul.f32 %v170, %v172
  %v174 = vadd.f32 %v173, 0.0036580483
  %v175 = vmul.f32 %v170, %v174
  %v176 = vadd.f32 %v175, 0.05243302
  %v177 = vmul.f32 %v170, %v176
  %v178 = vadd.f32 %v177, 0.18741608
  %v179 = vmul.f32 %v170, %v178
  %v180 = vadd.f32 %v179, 1.1283791
  %v181 = vmul.f32 %v128, %v180
  %v182 = vmul.f32 %v170, 3.8918573e-05
  %v183 = vadd.f32 %v182, 0.001143296
  %v184 = vmul.f32 %v170, %v183
  %v185 = vadd.f32 %v184, 0.014752088
  %v186 = vmul.f32 %v170, %v185
  %v187 = vadd.f32 %v186, 0.112945676
  %v188 = vmul.f32 %v170, %v187
  %v189 = vadd.f32 %v188, 0.4994258
  %v190 = vmul.f32 %v170, %v189
  %v191 = vadd.f32 %v190, 1.0
  %v192 = vrcp.pop %v191
  %v193 = vmul.f32 %v191, %v192
  %v194 = vsub.f32 1.0, %v193
  %v195 = vmul.f32 %v192, %v194
  %v196 = vadd.f32 %v192, %v195
  %vm197 = vweird.f32 %v191
  %vm198 = vweird.f32 %v192
  %vm199 = vmor %vm197, %vm198
  %v200 = vsel %vm199, %v192, %v196
  %v201 = vand.u32 2147483647, %v191
  %vm202 = vcmp.eq.f32.partialorder %v201, 8.507059e+37
  %v203 = vand.u32 %v191, 2147483648
  %v204 = vor.u32 1.1754944e-38, %v203
  %v205 = vsel %vm202, %v204, %v200
  %v206 = vmul.f32 %v181, %v205
  %v207 = vmin.f32 %v206, 1.0
  %v208 = vmax.f32 %v207, -1.0
  %v209 = vadd.f32 %v168, 1.0
  %v210 = vadd.f32 %v208, 1.0
  %v211 = vmul.f32 %v125, %v209
  %v212 = vmul.f32 %v126, %v210
  %213 = vst [vmem:[%s5] sm:$0xff] %v211
  %214 = vst [vmem:[%s5 + $0x8] sm:$0xff] %v212
  // Predicated region
  $region22: #{memformer_forward.33} parent=0 // pred_check
    _
  $region23: #{memformer_forward.33} parent=0 // pred_check_branch
    %216 = sbr.rel (0) target = $region25
  $region24: #{memformer_forward.33} parent=0 // pred_region
    _
  $region25: #{memformer_forward.33} parent=0 // pred_fallthru
    _
  // Predicated region
  $region26: #{memformer_forward.33} parent=0 // pred_check
    _
  $region27: #{memformer_forward.33} parent=0 // pred_check_branch
    %218 = sbr.rel (0) target = $region29
  $region28: #{memformer_forward.33} parent=0 // pred_region
    _
  $region29: #{memformer_forward.33} parent=0 // pred_fallthru
    _

// kernel: memformer_forward.44
$region0: #{memformer_forward.44}
  #allocation0 [shape = 'u32[]', space=smem, size = 0x4, offset = 0x4, fixed_abs, tag = 'smem constant byte address 0x4 - core index']
  #allocation1 [shape = 'u32[72,128]{1,0:T(1,128)}', space=vmem, size = 0x9000, scoped, tag = 'internal scratch']
  %s0 = inlined_call_operand.vmem [shape: f32[16,32], index: 0, kind: input, shape index: {}]
  %s1 = inlined_call_operand.vmem [shape: f32[1,32], index: 1, kind: input, shape index: {}]
  %s2 = inlined_call_operand.vmem [shape: f32[1,32], index: 2, kind: input, shape index: {}]
  %s3 = inlined_call_operand.vmem [shape: f32[16,32], index: 3, kind: output, shape index: {}]
  %s4 = sld [smem:[#allocation0]]
  $region22: #{memformer_forward.44} parent=0
    _
  %s6 = ssub.s32 1, %s4
  %s7 = scalar_select 0, %s6, %s4
  // Predicated region
  $region2: #{memformer_forward.44} parent=0 // pred_check
    _
  $region3: #{memformer_forward.44} parent=0 // pred_check_branch
    %9 = sbr.rel (0) target = $region5
  $region4: #{memformer_forward.44} parent=0 // pred_region
    _
  $region5: #{memformer_forward.44} parent=0 // pred_fallthru
    _
  // Predicated region
  $region6: #{memformer_forward.44} parent=0 // pred_check
    _
  $region7: #{memformer_forward.44} parent=0 // pred_check_branch
    %11 = sbr.rel (0) target = $region9
  $region8: #{memformer_forward.44} parent=0 // pred_region
    _
  $region9: #{memformer_forward.44} parent=0 // pred_fallthru
    _
  // Predicated region
  $region10: #{memformer_forward.44} parent=0 // pred_check
    _
  $region11: #{memformer_forward.44} parent=0 // pred_check_branch
    %13 = sbr.rel (0) target = $region13
  $region12: #{memformer_forward.44} parent=0 // pred_region
    _
  $region13: #{memformer_forward.44} parent=0 // pred_fallthru
    _
  %v14 = vld [vmem:[%s0] sm:$0xff]
  %v15 = vld [vmem:[%s0 + $0x8] sm:$0xff]
  %vm16 = vcmask 261120
  %v17 = vsel %vm16, %v14, 0.0
  %18 = vadd.xlane.f32.xlu0 %v17
  %v19 = vpop.xlane.xlu0 %18
  %v20 = vsel %vm16, %v15, 0.0
  %21 = vadd.xlane.f32.xlu0 %v20
  %v22 = vpop.xlane.xlu0 %21
  %v23 = vrcp.pop 32.0
  %v24 = vmul.f32 32.0, %v23
  %v25 = vsub.f32 1.0, %v24
  %v26 = vmul.f32 %v23, %v25
  %v27 = vadd.f32 %v23, %v26
  %vm28 = vweird.f32 %v23
  %v29 = vsel %vm28, %v23, %v27
  %v30 = vmul.f32 %v19, %v29
  %v31 = vmul.f32 %v22, %v29
  %v32 = vsub.f32 %v14, %v30
  %v33 = vsub.f32 %v15, %v31
  %v34 = vmul.f32 %v32, %v32
  %v35 = vmul.f32 %v33, %v33
  %v36 = vsel %vm16, %v34, 0.0
  %37 = vadd.xlane.f32.xlu0 %v36
  %v38 = vpop.xlane.xlu0 %37
  %v39 = vsel %vm16, %v35, 0.0
  %40 = vadd.xlane.f32.xlu0 %v39
  %v41 = vpop.xlane.xlu0 %40
  %v42 = vmul.f32 %v38, %v29
  %v43 = vmul.f32 %v41, %v29
  %v44 = vadd.f32 %v42, 1e-05
  %v45 = vadd.f32 %v43, 1e-05
  %v46 = vrsqrt.pop %v44
  %v47 = vmul.f32 %v46, %v44
  %v48 = vmul.f32 %v47, %v46
  %v49 = vmul.f32 0.5, %v48
  %v50 = vsub.f32 1.5, %v49
  %v51 = vmul.f32 %v46, %v50
  %vm52 = vweird.f32 %v44
  %vm53 = vweird.f32 %v46
  %vm54 = vmor %vm52, %vm53
  %v55 = vsel %vm54, %v46, %v51
  %v56 = vrsqrt.pop %v45
  %v57 = vmul.f32 %v56, %v45
  %v58 = vmul.f32 %v57, %v56
  %v59 = vmul.f32 0.5, %v58
  %v60 = vsub.f32 1.5, %v59
  %v61 = vmul.f32 %v56, %v60
  %vm62 = vweird.f32 %v45
  %vm63 = vweird.f32 %v56
  %vm64 = vmor %vm62, %vm63
  %v65 = vsel %vm64, %v56, %v61
  %v66 = vmul.f32 %v32, %v55
  %v67 = vmul.f32 %v33, %v65
  %v68 = vld [vmem:[%s1] sm:$0x1]
  %v70 = vperm.slane %v68, 0
  %v72 = vmul.f32 %v66, %v70
  %v73 = vmul.f32 %v67, %v70
  %v74 = vld [vmem:[%s2] sm:$0x1]
  %v76 = vperm.slane %v74, 0
  %v78 = vadd.f32 %v72, %v76
  %v79 = vadd.f32 %v73, %v76
  %80 = vst.msk [vmem:[%s3] sm:$0xff] %vm16, %v78
  %81 = vst.msk [vmem:[%s3 + $0x8] sm:$0xff] %vm16, %v79
  // Predicated region
  $region14: #{memformer_forward.44} parent=0 // pred_check
    _
  $region15: #{memformer_forward.44} parent=0 // pred_check_branch
    %83 = sbr.rel (0) target = $region17
  $region16: #{memformer_forward.44} parent=0 // pred_region
    _
  $region17: #{memformer_forward.44} parent=0 // pred_fallthru
    _
  // Predicated region
  $region18: #{memformer_forward.44} parent=0 // pred_check
    _
  $region19: #{memformer_forward.44} parent=0 // pred_check_branch
    %85 = sbr.rel (0) target = $region21
  $region20: #{memformer_forward.44} parent=0 // pred_region
    _
  $region21: #{memformer_forward.44} parent=0 // pred_fallthru
    _

// kernel: memformer_forward.46
$region0: #{memformer_forward.46}
  #allocation0 [shape = 'u32[]', space=smem, size = 0x4, offset = 0x4, fixed_abs, tag = 'smem constant byte address 0x4 - core index']
  #allocation1 [shape = 'u32[72,128]{1,0:T(1,128)}', space=vmem, size = 0x9000, scoped, tag = 'internal scratch']
  #allocation2 [shape = 'f32[24,64]{1,0:T(8,128)}', space=vmem, size = 0x3000, scoped, tag = 'scratch operand']
  %s0 = inlined_call_operand.vmem [shape: f32[24,32], index: 0, kind: input, shape index: {}]
  %s1 = inlined_call_operand.vmem [shape: bf16[32,64], index: 1, kind: input, shape index: {}]
  %s2 = inlined_call_operand.vmem [shape: f32[1,64], index: 2, kind: input, shape index: {}]
  %s3 = inlined_call_operand.vmem [shape: f32[24,64], index: 3, kind: output, shape index: {}]
  %s4 = sld [smem:[#allocation0]]
  $region30: #{memformer_forward.46} parent=0
    _
  %s6 = ssub.s32 1, %s4
  %s7 = scalar_select 0, %s6, %s4
  // Predicated region
  $region2: #{memformer_forward.46} parent=0 // pred_check
    _
  $region3: #{memformer_forward.46} parent=0 // pred_check_branch
    %9 = sbr.rel (0) target = $region5
  $region4: #{memformer_forward.46} parent=0 // pred_region
    _
  $region5: #{memformer_forward.46} parent=0 // pred_fallthru
    _
  // Predicated region
  $region6: #{memformer_forward.46} parent=0 // pred_check
    _
  $region7: #{memformer_forward.46} parent=0 // pred_check_branch
    %11 = sbr.rel (0) target = $region9
  $region8: #{memformer_forward.46} parent=0 // pred_region
    _
  $region9: #{memformer_forward.46} parent=0 // pred_fallthru
    _
  // Predicated region
  $region10: #{memformer_forward.46} parent=0 // pred_check
    _
  $region11: #{memformer_forward.46} parent=0 // pred_check_branch
    %13 = sbr.rel (0) target = $region13
  $region12: #{memformer_forward.46} parent=0 // pred_region
    _
  $region13: #{memformer_forward.46} parent=0 // pred_fallthru
    _
  %p15 = scmp.eq.s32.totalorder 0, 0
  // Predicated region
  $region14: #{memformer_forward.46} parent=0 // pred_check
    %p16 = pneg %p15
  $region15: #{memformer_forward.46} parent=0 // pred_check_branch
    %18 = sbr.rel (%p16) target = $region17
  $region16: #{memformer_forward.46} parent=0 // pred_region
    %vm19 = vcmask 523264
    %20 = vst.msk [vmem:[#allocation2] sm:$0xff] %vm19, 0.0
    %21 = vst.msk [vmem:[#allocation2 + $0x8] sm:$0xff] %vm19, 0.0
    %22 = vst.msk [vmem:[#allocation2 + $0x10] sm:$0xff] %vm19, 0.0
  $region17: #{memformer_forward.46} parent=0 // pred_fallthru
    _
  %v23 = vld [vmem:[#allocation2] sm:$0xff]
  %v24 = vld [vmem:[#allocation2 + $0x8] sm:$0xff]
  %v25 = vld [vmem:[#allocation2 + $0x10] sm:$0xff]
  %v26 = vld [vmem:[%s0] sm:$0xff]
  %v27 = vld [vmem:[%s0 + $0x8] sm:$0xff]
  %v28 = vld [vmem:[%s0 + $0x10] sm:$0xff]
  %v29 = vpack.c.bf16 %v27, %v26
  %v30 = vpack.c.bf16 %v28, %v28
  %v31 = vld [vmem:[%s1] sm:$0xf]
  %v32 = vld [vmem:[%s1 + $0x4] sm:$0xf]
  %v33 = vld [vmem:[%s1 + $0x8] sm:$0xf]
  %v34 = vld [vmem:[%s1 + $0xc] sm:$0xf]
  %v39 = vunpack.c.l.b16 %v31
  %v40 = vunpack.c.l.b16 %v32
  %v41 = vunpack.c.l.b16 %v33
  %v42 = vunpack.c.l.b16 %v34
  %v43 = vpack.c.b16 %v40, %v39
  %v44 = vpack.c.b16 %v42, %v41
  %vm47 = vcmask 261120
  %v49 = vsel %vm47, %v29, 0
  %v52 = vsel %vm47, %v30, 0
  %54 = vmatpush.bf16.msra.mxu0 0
  %55 = vmatpush.bf16.msra.mxu0 0
  %56 = vmatpush.bf16.msra.mxu0 0
  %57 = vmatpush.bf16.msra.mxu0 0
  %58 = vmatpush.bf16.msra.mxu0 0
  %59 = vmatpush.bf16.msra.mxu0 0
  %60 = vmatpush.bf16.msra.mxu0 %v44
  %61 = vmatpush.bf16.msra.mxu0 %v43
  %62 = vmatmul.bf16.gmra.mxu0 %v49
  %v63 = vpop.f32.mrf.mxu0
  %v64 = vadd.f32 0.0, %v63
  %v65 = vpop.f32.mrf.mxu0
  %v66 = vadd.f32 0.0, %v65
  %67 = vmatmul.bf16.gmra.mxu0 %v52
  %v68 = vpop.f32.mrf.mxu0
  %v69 = vadd.f32 0.0, %v68
  %v70 = vpop.f32.mrf.mxu0
  %71 = vdwg.mxu0
  %v72 = vadd.f32 %v23, %v64
  %v73 = vadd.f32 %v24, %v66
  %v74 = vadd.f32 %v25, %v69
  %vm75 = vcmask 523264
  %76 = vst.msk [vmem:[#allocation2] sm:$0xff] %vm75, %v72
  %77 = vst.msk [vmem:[#allocation2 + $0x8] sm:$0xff] %vm75, %v73
  %78 = vst.msk [vmem:[#allocation2 + $0x10] sm:$0xff] %vm75, %v74
  // Predicated region
  $region18: #{memformer_forward.46} parent=0 // pred_check
    %p79 = pneg %p15
  $region19: #{memformer_forward.46} parent=0 // pred_check_branch
    %81 = sbr.rel (%p79) target = $region21
  $region20: #{memformer_forward.46} parent=0 // pred_region
    %v82 = vld [vmem:[#allocation2] sm:$0xff]
    %v83 = vld [vmem:[#allocation2 + $0x8] sm:$0xff]
    %v84 = vld [vmem:[#allocation2 + $0x10] sm:$0xff]
    %v85 = vld [vmem:[%s2] sm:$0x1]
    %v87 = vperm.slane %v85, 0
    %v89 = vadd.f32 %v82, %v87
    %v90 = vadd.f32 %v83, %v87
    %v91 = vadd.f32 %v84, %v87
    %92 = vst.msk [vmem:[%s3] sm:$0xff] %vm75, %v89
    %93 = vst.msk [vmem:[%s3 + $0x8] sm:$0xff] %vm75, %v90
    %94 = vst.msk [vmem:[%s3 + $0x10] sm:$0xff] %vm75, %v91
  $region21: #{memformer_forward.46} parent=0 // pred_fallthru
    _
  // Predicated region
  $region22: #{memformer_forward.46} parent=0 // pred_check
    _
  $region23: #{memformer_forward.46} parent=0 // pred_check_branch
    %96 = sbr.rel (0) target = $region25
  $region24: #{memformer_forward.46} parent=0 // pred_region
    _
  $region25: #{memformer_forward.46} parent=0 // pred_fallthru
    _
  // Predicated region
  $region26: #{memformer_forward.46} parent=0 // pred_check
    _
  $region27: #{memformer_forward.46} parent=0 // pred_check_branch
    %98 = sbr.rel (0) target = $region29
  $region28: #{memformer_forward.46} parent=0 // pred_region
    _
  $region29: #{memformer_forward.46} parent=0 // pred_fallthru
    _

// kernel: memformer_forward.45
$region0: #{memformer_forward.45}
  #allocation0 [shape = 'u32[]', space=smem, size = 0x4, offset = 0x4, fixed_abs, tag = 'smem constant byte address 0x4 - core index']
  #allocation1 [shape = 'u32[72,128]{1,0:T(1,128)}', space=vmem, size = 0x9000, scoped, tag = 'internal scratch']
  #allocation2 [shape = 'f32[8,32]{1,0:T(8,128)}', space=vmem, size = 0x1000, scoped, tag = 'scratch operand']
  %s0 = inlined_call_operand.vmem [shape: f32[8,32], index: 0, kind: input, shape index: {}]
  %s1 = inlined_call_operand.vmem [shape: bf16[32,32], index: 1, kind: input, shape index: {}]
  %s2 = inlined_call_operand.vmem [shape: f32[1,32], index: 2, kind: input, shape index: {}]
  %s3 = inlined_call_operand.vmem [shape: f32[8,32], index: 3, kind: output, shape index: {}]
  %s4 = sld [smem:[#allocation0]]
  $region30: #{memformer_forward.45} parent=0
    _
  %s6 = ssub.s32 1, %s4
  %s7 = scalar_select 0, %s6, %s4
  // Predicated region
  $region2: #{memformer_forward.45} parent=0 // pred_check
    _
  $region3: #{memformer_forward.45} parent=0 // pred_check_branch
    %9 = sbr.rel (0) target = $region5
  $region4: #{memformer_forward.45} parent=0 // pred_region
    _
  $region5: #{memformer_forward.45} parent=0 // pred_fallthru
    _
  // Predicated region
  $region6: #{memformer_forward.45} parent=0 // pred_check
    _
  $region7: #{memformer_forward.45} parent=0 // pred_check_branch
    %11 = sbr.rel (0) target = $region9
  $region8: #{memformer_forward.45} parent=0 // pred_region
    _
  $region9: #{memformer_forward.45} parent=0 // pred_fallthru
    _
  // Predicated region
  $region10: #{memformer_forward.45} parent=0 // pred_check
    _
  $region11: #{memformer_forward.45} parent=0 // pred_check_branch
    %13 = sbr.rel (0) target = $region13
  $region12: #{memformer_forward.45} parent=0 // pred_region
    _
  $region13: #{memformer_forward.45} parent=0 // pred_fallthru
    _
  %p15 = scmp.eq.s32.totalorder 0, 0
  // Predicated region
  $region14: #{memformer_forward.45} parent=0 // pred_check
    %p16 = pneg %p15
  $region15: #{memformer_forward.45} parent=0 // pred_check_branch
    %18 = sbr.rel (%p16) target = $region17
  $region16: #{memformer_forward.45} parent=0 // pred_region
    %vm19 = vcmask 261120
    %20 = vst.msk [vmem:[#allocation2] sm:$0xff] %vm19, 0.0
  $region17: #{memformer_forward.45} parent=0 // pred_fallthru
    _
  %v21 = vld [vmem:[#allocation2] sm:$0xff]
  %v22 = vld [vmem:[%s0] sm:$0xff]
  %v23 = vpack.c.bf16 %v22, %v22
  %v24 = vld [vmem:[%s1] sm:$0xf]
  %v25 = vld [vmem:[%s1 + $0x4] sm:$0xf]
  %v26 = vld [vmem:[%s1 + $0x8] sm:$0xf]
  %v27 = vld [vmem:[%s1 + $0xc] sm:$0xf]
  %v32 = vunpack.c.l.b16 %v24
  %v33 = vunpack.c.l.b16 %v25
  %v34 = vunpack.c.l.b16 %v26
  %v35 = vunpack.c.l.b16 %v27
  %v36 = vpack.c.b16 %v33, %v32
  %v37 = vpack.c.b16 %v35, %v34
  %vm40 = vcmask 261120
  %v42 = vsel %vm40, %v23, 0
  %44 = vmatpush.bf16.msra.mxu0 0
  %45 = vmatpush.bf16.msra.mxu0 0
  %46 = vmatpush.bf16.msra.mxu0 0
  %47 = vmatpush.bf16.msra.mxu0 0
  %48 = vmatpush.bf16.msra.mxu0 0
  %49 = vmatpush.bf16.msra.mxu0 0
  %50 = vmatpush.bf16.msra.mxu0 %v37
  %51 = vmatpush.bf16.msra.mxu0 %v36
  %52 = vmatmul.bf16.gmra.mxu0 %v42
  %v53 = vpop.f32.mrf.mxu0
  %v54 = vadd.f32 0.0, %v53
  %v55 = vpop.f32.mrf.mxu0
  %56 = vdwg.mxu0
  %v57 = vadd.f32 %v21, %v54
  %58 = vst.msk [vmem:[#allocation2] sm:$0xff] %vm40, %v57
  // Predicated region
  $region18: #{memformer_forward.45} parent=0 // pred_check
    %p59 = pneg %p15
  $region19: #{memformer_forward.45} parent=0 // pred_check_branch
    %61 = sbr.rel (%p59) target = $region21
  $region20: #{memformer_forward.45} parent=0 // pred_region
    %v62 = vld [vmem:[#allocation2] sm:$0xff]
    %v63 = vld [vmem:[%s2] sm:$0x1]
    %v65 = vperm.slane %v63, 0
    %v67 = vadd.f32 %v62, %v65
    %68 = vst.msk [vmem:[%s3] sm:$0xff] %vm40, %v67
  $region21: #{memformer_forward.45} parent=0 // pred_fallthru
    _
  // Predicated region
  $region22: #{memformer_forward.45} parent=0 // pred_check
    _
  $region23: #{memformer_forward.45} parent=0 // pred_check_branch
    %70 = sbr.rel (0) target = $region25
  $region24: #{memformer_forward.45} parent=0 // pred_region
    _
  $region25: #{memformer_forward.45} parent=0 // pred_fallthru
    _
  // Predicated region
  $region26: #{memformer_forward.45} parent=0 // pred_check
    _
  $region27: #{memformer_forward.45} parent=0 // pred_check_branch
    %72 = sbr.rel (0) target = $region29
  $region28: #{memformer_forward.45} parent=0 // pred_region
    _
  $region29: #{memformer_forward.45} parent=0 // pred_fallthru
    _

// kernel: memformer_forward.49
$region0: #{memformer_forward.49}
  #allocation0 [shape = 'u32[]', space=smem, size = 0x4, offset = 0x4, fixed_abs, tag = 'smem constant byte address 0x4 - core index']
  #allocation1 [shape = 'u32[72,128]{1,0:T(1,128)}', space=vmem, size = 0x9000, scoped, tag = 'internal scratch']
  %s0 = inlined_call_operand.vmem [shape: f32[8,32], index: 0, kind: input, shape index: {}]
  %s1 = inlined_call_operand.vmem [shape: f32[8,32], index: 1, kind: input, shape index: {}]
  %s2 = inlined_call_operand.vmem [shape: bf16[32,96], index: 2, kind: input, shape index: {}]
  %s3 = inlined_call_operand.vmem [shape: bf16[32,96], index: 3, kind: input, shape index: {}]
  %s4 = inlined_call_operand.vmem [shape: f32[1,96], index: 4, kind: input, shape index: {}]
  %s5 = inlined_call_operand.vmem [shape: f32[1,96], index: 5, kind: input, shape index: {}]
  %s6 = inlined_call_operand.vmem [shape: f32[8,32], index: 6, kind: output, shape index: {}]
  %s7 = sld [smem:[#allocation0]]
  $region34: #{memformer_forward.49} parent=0
    _
  %s9 = ssub.s32 1, %s7
  %s10 = scalar_select 0, %s9, %s7
  // Predicated region
  $region2: #{memformer_forward.49} parent=0 // pred_check
    _
  $region3: #{memformer_forward.49} parent=0 // pred_check_branch
    %12 = sbr.rel (0) target = $region5
  $region4: #{memformer_forward.49} parent=0 // pred_region
    _
  $region5: #{memformer_forward.49} parent=0 // pred_fallthru
    _
  // Predicated region
  $region6: #{memformer_forward.49} parent=0 // pred_check
    _
  $region7: #{memformer_forward.49} parent=0 // pred_check_branch
    %14 = sbr.rel (0) target = $region9
  $region8: #{memformer_forward.49} parent=0 // pred_region
    _
  $region9: #{memformer_forward.49} parent=0 // pred_fallthru
    _
  // Predicated region
  $region10: #{memformer_forward.49} parent=0 // pred_check
    _
  $region11: #{memformer_forward.49} parent=0 // pred_check_branch
    %16 = sbr.rel (0) target = $region13
  $region12: #{memformer_forward.49} parent=0 // pred_region
    _
  $region13: #{memformer_forward.49} parent=0 // pred_fallthru
    _
  // Predicated region
  $region14: #{memformer_forward.49} parent=0 // pred_check
    _
  $region15: #{memformer_forward.49} parent=0 // pred_check_branch
    %18 = sbr.rel (0) target = $region17
  $region16: #{memformer_forward.49} parent=0 // pred_region
    _
  $region17: #{memformer_forward.49} parent=0 // pred_fallthru
    _
  // Predicated region
  $region18: #{memformer_forward.49} parent=0 // pred_check
    _
  $region19: #{memformer_forward.49} parent=0 // pred_check_branch
    %20 = sbr.rel (0) target = $region21
  $region20: #{memformer_forward.49} parent=0 // pred_region
    _
  $region21: #{memformer_forward.49} parent=0 // pred_fallthru
    _
  // Predicated region
  $region22: #{memformer_forward.49} parent=0 // pred_check
    _
  $region23: #{memformer_forward.49} parent=0 // pred_check_branch
    %22 = sbr.rel (0) target = $region25
  $region24: #{memformer_forward.49} parent=0 // pred_region
    _
  $region25: #{memformer_forward.49} parent=0 // pred_fallthru
    _
  %v24 = vld [vmem:[%s0] sm:$0xff]
  %v25 = vld [vmem:[%s1] sm:$0xff]
  %v26 = vpack.c.bf16 %v24, %v24
  %v27 = vld [vmem:[%s2] sm:$0xf]
  %v28 = vld [vmem:[%s2 + $0x4] sm:$0xf]
  %v29 = vld [vmem:[%s2 + $0x8] sm:$0xf]
  %v30 = vld [vmem:[%s2 + $0xc] sm:$0xf]
  %v31 = vld [vmem:[%s4] sm:$0x1]
  %v33 = vperm.slane %v31, 0
  %v39 = vunpack.c.l.b16 %v27
  %v40 = vunpack.c.l.b16 %v28
  %v41 = vunpack.c.l.b16 %v29
  %v42 = vunpack.c.l.b16 %v30
  %v43 = vpack.c.b16 %v40, %v39
  %v44 = vpack.c.b16 %v42, %v41
  %vm47 = vcmask 261120
  %v49 = vsel %vm47, %v26, 0
  %51 = vmatpush.bf16.msra.mxu0 0
  %52 = vmatpush.bf16.msra.mxu0 0
  %53 = vmatpush.bf16.msra.mxu0 0
  %54 = vmatpush.bf16.msra.mxu0 0
  %55 = vmatpush.bf16.msra.mxu0 0
  %56 = vmatpush.bf16.msra.mxu0 0
  %57 = vmatpush.bf16.msra.mxu0 %v44
  %58 = vmatpush.bf16.msra.mxu0 %v43
  %59 = vmatmul.bf16.gmra.mxu0 %v49
  %v60 = vpop.f32.mrf.mxu0
  %v61 = vadd.f32 %v33, %v60
  %v62 = vpop.f32.mrf.mxu0
  %63 = vdwg.mxu0
  %v64 = vpack.c.bf16 %v25, %v25
  %v65 = vld [vmem:[%s3] sm:$0xf]
  %v66 = vld [vmem:[%s3 + $0x4] sm:$0xf]
  %v67 = vld [vmem:[%s3 + $0x8] sm:$0xf]
  %v68 = vld [vmem:[%s3 + $0xc] sm:$0xf]
  %v69 = vld [vmem:[%s5] sm:$0x1]
  %v71 = vperm.slane %v69, 0
  %v77 = vunpack.c.l.b16 %v65
  %v78 = vunpack.c.l.b16 %v66
  %v79 = vunpack.c.l.b16 %v67
  %v80 = vunpack.c.l.b16 %v68
  %v81 = vpack.c.b16 %v78, %v77
  %v82 = vpack.c.b16 %v80, %v79
  %v86 = vsel %vm47, %v64, 0
  %88 = vmatpush.bf16.msra.mxu0 0
  %89 = vmatpush.bf16.msra.mxu0 0
  %90 = vmatpush.bf16.msra.mxu0 0
  %91 = vmatpush.bf16.msra.mxu0 0
  %92 = vmatpush.bf16.msra.mxu0 0
  %93 = vmatpush.bf16.msra.mxu0 0
  %94 = vmatpush.bf16.msra.mxu0 %v82
  %95 = vmatpush.bf16.msra.mxu0 %v81
  %96 = vmatmul.bf16.gmra.mxu0 %v86
  %v97 = vpop.f32.mrf.mxu0
  %v98 = vadd.f32 %v71, %v97
  %v99 = vpop.f32.mrf.mxu0
  %100 = vdwg.mxu0
  %v101 = vadd.f32 %v61, %v98
  %v102 = vxor.u32 %v101, 2147483648
  %v103 = vmul.f32 %v102, 1.442695
  %v104 = vpow.pop %v103
  %v105 = vadd.f32 %v104, 1.0
  %v106 = vrcp.pop %v105
  %v107 = vmul.f32 %v105, %v106
  %v108 = vsub.f32 1.0, %v107
  %v109 = vmul.f32 %v106, %v108
  %v110 = vadd.f32 %v106, %v109
  %vm111 = vweird.f32 %v105
  %vm112 = vweird.f32 %v106
  %vm113 = vmor %vm111, %vm112
  %v114 = vsel %vm113, %v106, %v110
  %v115 = vand.u32 2147483647, %v105
  %vm116 = vcmp.eq.f32.partialorder %v115, 8.507059e+37
  %v117 = vand.u32 %v105, 2147483648
  %v118 = vor.u32 1.1754944e-38, %v117
  %v119 = vsel %vm116, %v118, %v114
  %v120 = vmul.f32 1.0, %v119
  %122 = vrot.lane.b32.xlu0 %v98, 64
  %v123 = vpop.permute.xlu0 %122
  %v125 = vmul.f32 %v120, %v123
  %127 = vrot.lane.b32.xlu0 %v125, 64
  %v128 = vpop.permute.xlu0 %127
  %v130 = vadd.f32 %v61, %v128
  %v131 = vtanh.pop %v130
  %v132 = vsub.f32 1.0, %v120
  %134 = vrot.lane.b32.xlu0 %v131, 96
  %v135 = vpop.permute.xlu0 %134
  %v137 = vmul.f32 %v132, %v135
  %139 = vrot.lane.b32.xlu0 %v25, 32
  %v140 = vpop.permute.xlu0 %139
  %v142 = vmul.f32 %v120, %v140
  %v143 = vadd.f32 %v137, %v142
  %145 = vrot.lane.b32.xlu0 %v143, 96
  %v146 = vpop.permute.xlu0 %145
  %148 = vst.msk [vmem:[%s6] sm:$0xff] %vm47, %v146
  // Predicated region
  $region26: #{memformer_forward.49} parent=0 // pred_check
    _
  $region27: #{memformer_forward.49} parent=0 // pred_check_branch
    %150 = sbr.rel (0) target = $region29
  $region28: #{memformer_forward.49} parent=0 // pred_region
    _
  $region29: #{memformer_forward.49} parent=0 // pred_fallthru
    _
  // Predicated region
  $region30: #{memformer_forward.49} parent=0 // pred_check
    _
  $region31: #{memformer_forward.49} parent=0 // pred_check_branch
    %152 = sbr.rel (0) target = $region33
  $region32: #{memformer_forward.49} parent=0 // pred_region
    _
  $region33: #{memformer_forward.49} parent=0 // pred_fallthru
    _

// kernel: memformer_forward.47
$region0: #{memformer_forward.47}
  #allocation0 [shape = 'u32[]', space=smem, size = 0x4, offset = 0x4, fixed_abs, tag = 'smem constant byte address 0x4 - core index']
  #allocation1 [shape = 'u32[72,128]{1,0:T(1,128)}', space=vmem, size = 0x9000, scoped, tag = 'internal scratch']
  %s0 = inlined_call_operand.vmem [shape: f32[2,4,32], index: 0, kind: input, shape index: {}]
  %s1 = inlined_call_operand.vmem [shape: f32[2,12,32], index: 1, kind: input, shape index: {}]
  %s2 = inlined_call_operand.vmem [shape: f32[2,12,32], index: 2, kind: input, shape index: {}]
  %s3 = inlined_call_operand.vmem [shape: f32[2,4,12], index: 3, kind: input, shape index: {}]
  %s4 = inlined_call_operand.vmem [shape: f32[2,4,32], index: 4, kind: output, shape index: {}]
  %s5 = sld [smem:[#allocation0]]
  $region49: #{memformer_forward.47} parent=0
    _
  %s7 = ssub.s32 1, %s5
  %s8 = scalar_select 0, %s7, %s5
  loop: start=0, step=1, limit=4
  $region2: #{memformer_forward.47} parent=0 // loop_pre_header
    _
  $region3: #{memformer_forward.47} parent=0 // loop_header
    %s10 = sphi 0, %s14
    %p11 = scmp.ge.s32.totalorder %s10, 4
    %s17 = sphi 0, %s29
    %s18 = sphi 0, %s25
    %s19 = sphi 0, %s17
    %s20 = sphi 0, %s18
    %s21 = sphi 0, %s19
    %s22 = sphi 0, %s20
    %s34 = sphi 0, %s36
    %s37 = sphi 0, %s34
    %s38 = sphi 0, %s37
    %s54 = sphi 0, %s38
    %s60 = sphi 0, %s62
    %s63 = sphi 0, %s60
    %s64 = sphi 0, %s63
    %s80 = sphi 0, %s64
    %s86 = sphi 0, %s88
    %s89 = sphi 0, %s86
    %s90 = sphi 0, %s89
    %s106 = sphi 0, %s90
    %s114 = sphi 0, %s116
    %s117 = sphi 0, %s114
    %s118 = sphi 0, %s117
    %s134 = sphi 0, %s118
    %s142 = sphi 0, %s144
    %s145 = sphi 0, %s142
    %s146 = sphi 0, %s145
    %s162 = sphi 0, %s146
  $region4: #{memformer_forward.47} parent=0 // loop_header_branch
    %13 = sbr.rel (%p11) target = $region8
  $region5: #{memformer_forward.47} parent=0 // loop_body
    %s15 = ssub.s32 %s10, 1
    %s16 = ssub.s32 %s10, 2
    %s23 = sadd.s32 1, %s18
    %p24 = scmp.ge.s32.totalorder %s23, 1
    %s25 = scalar_select %p24, 0, %s23
    %s26 = sadd.s32 1, %s17
    %s27 = scalar_select %p24, %s26, %s17
    %p28 = scmp.ge.s32.totalorder %s27, 2
    %s29 = scalar_select %p28, 0, %s27
    %s30 = ssub.s32 %s17, %s29
    %s31 = ssub.s32 %s18, %s25
    %s32 = sor.u32 %s30, %s31
    %p33 = scmp.eq.s32.totalorder %s32, 0
    %s35 = sadd.s32 %s34, 1
    %s36 = scalar_select %p33, %s34, %s35
    %p39 = pneg %p33
    %p40 = scmp.eq.s32.totalorder %s10, 1
    %p41 = por %p39, %p40
    %p42 = scmp.ne.s32.totalorder %s34, %s37
    %p43 = scmp.eq.s32.totalorder %s10, 0
    %p44 = por %p42, %p43
    %p45 = scmp.ne.s32.totalorder %s34, %s37
    %p46 = scmp.eq.s32.totalorder %s15, 1
    %p47 = por %p45, %p46
    %p48 = scmp.ne.s32.totalorder %s37, %s38
    %p49 = scmp.eq.s32.totalorder %s15, 0
    %p50 = por %p48, %p49
    %p51 = scmp.ne.s32.totalorder %s37, %s38
    %p52 = scmp.eq.s32.totalorder %s16, 1
    %p53 = por %p51, %p52
    %p55 = scmp.ne.s32.totalorder %s38, %s54
    %p56 = scmp.eq.s32.totalorder %s16, 0
    %p57 = por %p55, %p56
    %s58 = ssub.s32 %s17, %s29
    %p59 = scmp.eq.s32.totalorder %s58, 0
    %s61 = sadd.s32 %s60, 1
    %s62 = scalar_select %p59, %s60, %s61
    %p65 = pneg %p59
    %p66 = scmp.eq.s32.totalorder %s10, 1
    %p67 = por %p65, %p66
    %p68 = scmp.ne.s32.totalorder %s60, %s63
    %p69 = scmp.eq.s32.totalorder %s10, 0
    %p70 = por %p68, %p69
    %p71 = scmp.ne.s32.totalorder %s60, %s63
    %p72 = scmp.eq.s32.totalorder %s15, 1
    %p73 = por %p71, %p72
    %p74 = scmp.ne.s32.totalorder %s63, %s64
    %p75 = scmp.eq.s32.totalorder %s15, 0
    %p76 = por %p74, %p75
    %p77 = scmp.ne.s32.totalorder %s63, %s64
    %p78 = scmp.eq.s32.totalorder %s16, 1
    %p79 = por %p77, %p78
    %p81 = scmp.ne.s32.totalorder %s64, %s80
    %p82 = scmp.eq.s32.totalorder %s16, 0
    %p83 = por %p81, %p82
    %s84 = ssub.s32 %s17, %s29
    %p85 = scmp.eq.s32.totalorder %s84, 0
    %s87 = sadd.s32 %s86, 1
    %s88 = scalar_select %p85, %s86, %s87
    %p91 = pneg %p85
    %p92 = scmp.eq.s32.totalorder %s10, 1
    %p93 = por %p91, %p92
    %p94 = scmp.ne.s32.totalorder %s86, %s89
    %p95 = scmp.eq.s32.totalorder %s10, 0
    %p96 = por %p94, %p95
    %p97 = scmp.ne.s32.totalorder %s86, %s89
    %p98 = scmp.eq.s32.totalorder %s15, 1
    %p99 = por %p97, %p98
    %p100 = scmp.ne.s32.totalorder %s89, %s90
    %p101 = scmp.eq.s32.totalorder %s15, 0
    %p102 = por %p100, %p101
    %p103 = scmp.ne.s32.totalorder %s89, %s90
    %p104 = scmp.eq.s32.totalorder %s16, 1
    %p105 = por %p103, %p104
    %p107 = scmp.ne.s32.totalorder %s90, %s106
    %p108 = scmp.eq.s32.totalorder %s16, 0
    %p109 = por %p107, %p108
    %s110 = ssub.s32 %s17, %s29
    %s111 = ssub.s32 %s18, %s25
    %s112 = sor.u32 %s110, %s111
    %p113 = scmp.eq.s32.totalorder %s112, 0
    %s115 = sadd.s32 %s114, 1
    %s116 = scalar_select %p113, %s114, %s115
    %p119 = pneg %p113
    %p120 = scmp.eq.s32.totalorder %s10, 1
    %p121 = por %p119, %p120
    %p122 = scmp.ne.s32.totalorder %s114, %s117
    %p123 = scmp.eq.s32.totalorder %s10, 0
    %p124 = por %p122, %p123
    %p125 = scmp.ne.s32.totalorder %s114, %s117
    %p126 = scmp.eq.s32.totalorder %s15, 1
    %p127 = por %p125, %p126
    %p128 = scmp.ne.s32.totalorder %s117, %s118
    %p129 = scmp.eq.s32.totalorder %s15, 0
    %p130 = por %p128, %p129
    %p131 = scmp.ne.s32.totalorder %s117, %s118
    %p132 = scmp.eq.s32.totalorder %s16, 1
    %p133 = por %p131, %p132
    %p135 = scmp.ne.s32.totalorder %s118, %s134
    %p136 = scmp.eq.s32.totalorder %s16, 0
    %p137 = por %p135, %p136
    %s138 = ssub.s32 %s17, %s29
    %s139 = ssub.s32 %s18, %s25
    %s140 = sor.u32 %s138, %s139
    %p141 = scmp.eq.s32.totalorder %s140, 0
    %s143 = sadd.s32 %s142, 1
    %s144 = scalar_select %p141, %s142, %s143
    %p147 = pneg %p141
    %p148 = scmp.eq.s32.totalorder %s10, 1
    %p149 = por %p147, %p148
    %p150 = scmp.ne.s32.totalorder %s142, %s145
    %p151 = scmp.eq.s32.totalorder %s10, 0
    %p152 = por %p150, %p151
    %p153 = scmp.ne.s32.totalorder %s142, %s145
    %p154 = scmp.eq.s32.totalorder %s15, 1
    %p155 = por %p153, %p154
    %p156 = scmp.ne.s32.totalorder %s145, %s146
    %p157 = scmp.eq.s32.totalorder %s15, 0
    %p158 = por %p156, %p157
    %p159 = scmp.ne.s32.totalorder %s145, %s146
    %p160 = scmp.eq.s32.totalorder %s16, 1
    %p161 = por %p159, %p160
    %p163 = scmp.ne.s32.totalorder %s146, %s162
    %p164 = scmp.eq.s32.totalorder %s16, 0
    %p165 = por %p163, %p164
    %p166 = scmp.le.s32.totalorder 1, %s10
    %p167 = scmp.lt.s32.totalorder %s10, 3
    %p168 = pnand %p166, %p167
    %p169 = pneg %p168
    // Predicated region
    $region9: #{memformer_forward.47} parent=5 // pred_check
      _
    $region10: #{memformer_forward.47} parent=5 // pred_check_branch
      %171 = sbr.rel (%p168) target = $region12
    $region11: #{memformer_forward.47} parent=5 // pred_region
      %s172 = ssub.s32 %s10, 1
    $region12: #{memformer_forward.47} parent=5 // pred_fallthru
      _
    %p173 = scmp.lt.s32.totalorder %s10, 2
    // Predicated region
    $region13: #{memformer_forward.47} parent=5 // pred_check
      %p174 = pneg %p173
    $region14: #{memformer_forward.47} parent=5 // pred_check_branch
      %176 = sbr.rel (%p174) target = $region16
    $region15: #{memformer_forward.47} parent=5 // pred_region
      // Predicated region
      $region17: #{memformer_forward.47} parent=15 // pred_check
        %p177 = pneg %p44
      $region18: #{memformer_forward.47} parent=15 // pred_check_branch
        %179 = sbr.rel (%p177) target = $region20
      $region19: #{memformer_forward.47} parent=15 // pred_region
        %p180 = scmp.lt.s32.totalorder %s17, 1
        %s181 = scalar_select %p180, %s17, 1
        %p182 = scmp.lt.s32.totalorder %s18, 0
        %s183 = scalar_select %p182, %s18, 0
        %s184 = sadd.s32 %s183, %s181
        %s185 = smul.addr %s184, 4
        %s186 = scalar_lea.vmem %s0, %s185
      $region20: #{memformer_forward.47} parent=15 // pred_fallthru
        _
      // Predicated region
      $region21: #{memformer_forward.47} parent=15 // pred_check
        %p187 = pneg %p70
      $region22: #{memformer_forward.47} parent=15 // pred_check_branch
        %189 = sbr.rel (%p187) target = $region24
      $region23: #{memformer_forward.47} parent=15 // pred_region
        %p190 = scmp.lt.s32.totalorder %s17, 1
        %s191 = scalar_select %p190, %s17, 1
        %s192 = smul.addr %s191, 2
        %s193 = smul.addr %s192, 8
        %s194 = scalar_lea.vmem %s1, %s193
      $region24: #{memformer_forward.47} parent=15 // pred_fallthru
        _
      // Predicated region
      $region25: #{memformer_forward.47} parent=15 // pred_check
        %p195 = pneg %p96
      $region26: #{memformer_forward.47} parent=15 // pred_check_branch
        %197 = sbr.rel (%p195) target = $region28
      $region27: #{memformer_forward.47} parent=15 // pred_region
        %p198 = scmp.lt.s32.totalorder %s17, 1
        %s199 = scalar_select %p198, %s17, 1
        %s200 = smul.addr %s199, 2
        %s201 = smul.addr %s200, 8
        %s202 = scalar_lea.vmem %s2, %s201
      $region28: #{memformer_forward.47} parent=15 // pred_fallthru
        _
      // Predicated region
      $region29: #{memformer_forward.47} parent=15 // pred_check
        %p203 = pneg %p124
      $region30: #{memformer_forward.47} parent=15 // pred_check_branch
        %205 = sbr.rel (%p203) target = $region32
      $region31: #{memformer_forward.47} parent=15 // pred_region
        %p206 = scmp.lt.s32.totalorder %s17, 1
        %s207 = scalar_select %p206, %s17, 1
        %p208 = scmp.lt.s32.totalorder %s18, 0
        %s209 = scalar_select %p208, %s18, 0
        %s210 = sadd.s32 %s209, %s207
        %s211 = smul.addr %s210, 4
        %s212 = scalar_lea.vmem %s3, %s211
      $region32: #{memformer_forward.47} parent=15 // pred_fallthru
        _
    $region16: #{memformer_forward.47} parent=5 // pred_fallthru
      _
    %p213 = scmp.le.s32.totalorder 1, %s10
    %p214 = scmp.lt.s32.totalorder %s10, 3
    %p215 = pnand %p213, %p214
    %p216 = pneg %p215
    // Predicated region
    $region33: #{memformer_forward.47} parent=5 // pred_check
      _
    $region34: #{memformer_forward.47} parent=5 // pred_check_branch
      %218 = sbr.rel (%p215) target = $region36
    $region35: #{memformer_forward.47} parent=5 // pred_region
      %s219 = ssub.s32 %s10, 1
      %p220 = scmp.lt.s32.totalorder %s19, 1
      %s221 = scalar_select %p220, %s19, 1
      %p222 = scmp.lt.s32.totalorder %s20, 0
      %s223 = scalar_select %p222, %s20, 0
      %s224 = sadd.s32 %s223, %s221
      %s225 = smul.addr %s224, 4
      %s226 = scalar_lea.vmem %s0, %s225
      %p227 = pneg %p50
      %p228 = pneg %p47
      %p229 = scmp.lt.s32.totalorder %s19, 1
      %s230 = scalar_select %p229, %s19, 1
      %s231 = smul.addr %s230, 2
      %s232 = smul.addr %s231, 8
      %s233 = scalar_lea.vmem %s1, %s232
      %p234 = pneg %p76
      %p235 = pneg %p73
      %p236 = scmp.lt.s32.totalorder %s19, 1
      %s237 = scalar_select %p236, %s19, 1
      %s238 = smul.addr %s237, 2
      %s239 = smul.addr %s238, 8
      %s240 = scalar_lea.vmem %s2, %s239
      %p241 = pneg %p102
      %p242 = pneg %p99
      %p243 = scmp.lt.s32.totalorder %s19, 1
      %s244 = scalar_select %p243, %s19, 1
      %p245 = scmp.lt.s32.totalorder %s20, 0
      %s246 = scalar_select %p245, %s20, 0
      %s247 = sadd.s32 %s246, %s244
      %s248 = smul.addr %s247, 4
      %s249 = scalar_lea.vmem %s3, %s248
      %p250 = pneg %p130
      %p251 = pneg %p127
      %p252 = pneg %p158
      %p253 = pneg %p155
      %p254 = scmp.lt.s32.totalorder %s19, 1
      %s255 = scalar_select %p254, %s19, 1
      %p256 = scmp.lt.s32.totalorder %s20, 0
      %s257 = scalar_select %p256, %s20, 0
      %s258 = sadd.s32 %s257, %s255
      %s259 = smul.addr %s258, 4
      %s260 = scalar_lea.vmem %s4, %s259
      %p261 = scmp.lt.s32.totalorder %s19, 1
      %s262 = scalar_select %p261, %s19, 1
      %p263 = scmp.lt.s32.totalorder %s20, 0
      %s264 = scalar_select %p263, %s20, 0
      %s265 = sadd.s32 %s264, %s262
      %s266 = smul.addr %s265, 4
      %s267 = scalar_lea.vmem %s0, %s266
      %p268 = scmp.lt.s32.totalorder %s19, 1
      %s269 = scalar_select %p268, %s19, 1
      %s270 = smul.addr %s269, 2
      %s271 = smul.addr %s270, 8
      %s272 = scalar_lea.vmem %s1, %s271
      %p273 = scmp.lt.s32.totalorder %s19, 1
      %s274 = scalar_select %p273, %s19, 1
      %s275 = smul.addr %s274, 2
      %s276 = smul.addr %s275, 8
      %s277 = scalar_lea.vmem %s2, %s276
      %p278 = scmp.lt.s32.totalorder %s19, 1
      %s279 = scalar_select %p278, %s19, 1
      %p280 = scmp.lt.s32.totalorder %s20, 0
      %s281 = scalar_select %p280, %s20, 0
      %s282 = sadd.s32 %s281, %s279
      %s283 = smul.addr %s282, 4
      %s284 = scalar_lea.vmem %s3, %s283
      %p285 = scmp.lt.s32.totalorder %s19, 1
      %s286 = scalar_select %p285, %s19, 1
      %p287 = scmp.lt.s32.totalorder %s20, 0
      %s288 = scalar_select %p287, %s20, 0
      %s289 = sadd.s32 %s288, %s286
      %s290 = smul.addr %s289, 4
      %s291 = scalar_lea.vmem %s4, %s290
      %v293 = vld [vmem:[%s267] sm:$0xf]
      %v294 = vld [vmem:[%s272] sm:$0xff]
      %v295 = vld [vmem:[%s272 + $0x8] sm:$0xf]
      %v296 = vld [vmem:[%s277] sm:$0xff]
      %v297 = vld [vmem:[%s277 + $0x8] sm:$0xf]
      %v298 = vld [vmem:[%s284] sm:$0xf]
      %vm299 = vcmp.gt.f32.partialorder %v298, 0.5
      %v300 = vpack.c.bf16 %v293, %v293
      %v301 = vpack.c.bf16 %v295, %v294
      %v302 = vpack.c.bf16 %v297, %v296
      %vm303 = vcmask 64512
      %v305 = vsel %vm303, %v300, 0
      %v308 = vsel %vm303, %v301, 0
      %310 = vmatpush.bf16.xpose.msra.mxu0 0
      %311 = vmatpush.bf16.xpose.msra.mxu0 0
      %312 = vmatpush.bf16.xpose.msra.mxu0 0
      %313 = vmatpush.bf16.xpose.msra.mxu0 0
      %314 = vmatpush.bf16.xpose.msra.mxu0 0
      %315 = vmatpush.bf16.xpose.msra.mxu0 0
      %316 = vmatpush.bf16.xpose.msra.mxu0 0
      %317 = vmatpush.bf16.xpose.msra.mxu0 %v308
      %318 = vmatmul.bf16.gmra.mxu0 %v305
      %v319 = vpop.f32.mrf.mxu0
      %v320 = vadd.f32 0.0, %v319
      %v321 = vpop.f32.mrf.mxu0
      %322 = vdwg.mxu0
      %v323 = vmul.f32 %v320, 0.35355338
      %v324 = vsel %vm299, %v323, -3.4028235e+38
      %vm325 = vcmask 93184
      %v326 = vsel %vm325, %v324, -inf
      %327 = vmax.xlane.f32.xlu0 %v326
      %v328 = vpop.xlane.xlu0 %327
      %v329 = vsub.f32 %v324, %v328
      %v330 = vmul.f32 %v329, 1.442695
      %v331 = vpow.pop %v330
      %v332 = vsel %vm325, %v331, 0.0
      %333 = vadd.xlane.f32.xlu0 %v332
      %v334 = vpop.xlane.xlu0 %333
      %v335 = vrcp.pop %v334
      %v336 = vmul.f32 %v331, %v335
      %v337 = vpack.c.bf16 %v336, %v336
      %vm338 = vcmask 97280
      %v340 = vsel %vm338, %v337, 0
      %vm342 = vcmask 1045504
      %v344 = vsel %vm342, %v302, 0
      %346 = vmatpush.bf16.msra.mxu0 0
      %347 = vmatpush.bf16.msra.mxu0 0
      %348 = vmatpush.bf16.msra.mxu0 0
      %349 = vmatpush.bf16.msra.mxu0 0
      %350 = vmatpush.bf16.msra.mxu0 0
      %351 = vmatpush.bf16.msra.mxu0 0
      %352 = vmatpush.bf16.msra.mxu0 0
      %353 = vmatpush.bf16.msra.mxu0 %v344
      %354 = vmatmul.bf16.gmra.mxu0 %v340
      %v355 = vpop.f32.mrf.mxu0
      %v356 = vadd.f32 0.0, %v355
      %v357 = vpop.f32.mrf.mxu0
      %358 = vdwg.mxu0
      %360 = vrot.lane.b32.xlu0 %v300, 120
      %v361 = vpop.permute.xlu0 %360
      %363 = vrot.lane.b32.xlu0 %v301, 120
      %v364 = vpop.permute.xlu0 %363
      %v366 = vsel %vm303, %v361, 0
      %v369 = vsel %vm303, %v364, 0
      %371 = vmatpush.bf16.xpose.msra.mxu0 0
      %372 = vmatpush.bf16.xpose.msra.mxu0 0
      %373 = vmatpush.bf16.xpose.msra.mxu0 0
      %374 = vmatpush.bf16.xpose.msra.mxu0 0
      %375 = vmatpush.bf16.xpose.msra.mxu0 0
      %376 = vmatpush.bf16.xpose.msra.mxu0 0
      %377 = vmatpush.bf16.xpose.msra.mxu0 0
      %378 = vmatpush.bf16.xpose.msra.mxu0 %v369
      %379 = vmatmul.bf16.gmra.mxu0 %v366
      %v380 = vpop.f32.mrf.mxu0
      %v381 = vadd.f32 0.0, %v380
      %v382 = vpop.f32.mrf.mxu0
      %383 = vdwg.mxu0
      %v384 = vmul.f32 %v381, 0.35355338
      %v385 = vsel %vm299, %v384, -3.4028235e+38
      %v386 = vsel %vm325, %v385, -inf
      %387 = vmax.xlane.f32.xlu0 %v386
      %v388 = vpop.xlane.xlu0 %387
      %v389 = vsub.f32 %v385, %v388
      %v390 = vmul.f32 %v389, 1.442695
      %v391 = vpow.pop %v390
      %v392 = vsel %vm325, %v391, 0.0
      %393 = vadd.xlane.f32.xlu0 %v392
      %v394 = vpop.xlane.xlu0 %393
      %v395 = vrcp.pop %v394
      %v396 = vmul.f32 %v391, %v395
      %v397 = vpack.c.bf16 %v396, %v396
      %399 = vrot.lane.b32.xlu0 %v302, 120
      %v400 = vpop.permute.xlu0 %399
      %v402 = vsel %vm338, %v397, 0
      %v405 = vsel %vm342, %v400, 0
      %407 = vmatpush.bf16.msra.mxu0 0
      %408 = vmatpush.bf16.msra.mxu0 0
      %409 = vmatpush.bf16.msra.mxu0 0
      %410 = vmatpush.bf16.msra.mxu0 0
      %411 = vmatpush.bf16.msra.mxu0 0
      %412 = vmatpush.bf16.msra.mxu0 0
      %413 = vmatpush.bf16.msra.mxu0 0
      %414 = vmatpush.bf16.msra.mxu0 %v405
      %415 = vmatmul.bf16.gmra.mxu0 %v402
      %v416 = vpop.f32.mrf.mxu0
      %v417 = vadd.f32 0.0, %v416
      %v418 = vpop.f32.mrf.mxu0
      %419 = vdwg.mxu0
      %420 = vrot.lane.b32.xlu0 %v300, 112
      %v421 = vpop.permute.xlu0 %420
      %422 = vrot.lane.b32.xlu0 %v301, 112
      %v423 = vpop.permute.xlu0 %422
      %v425 = vsel %vm303, %v421, 0
      %v428 = vsel %vm303, %v423, 0
      %430 = vmatpush.bf16.xpose.msra.mxu0 0
      %431 = vmatpush.bf16.xpose.msra.mxu0 0
      %432 = vmatpush.bf16.xpose.msra.mxu0 0
      %433 = vmatpush.bf16.xpose.msra.mxu0 0
      %434 = vmatpush.bf16.xpose.msra.mxu0 0
      %435 = vmatpush.bf16.xpose.msra.mxu0 0
      %436 = vmatpush.bf16.xpose.msra.mxu0 0
      %437 = vmatpush.bf16.xpose.msra.mxu0 %v428
      %438 = vmatmul.bf16.gmra.mxu0 %v425
      %v439 = vpop.f32.mrf.mxu0
      %v440 = vadd.f32 0.0, %v439
      %v441 = vpop.f32.mrf.mxu0
      %442 = vdwg.mxu0
      %v443 = vmul.f32 %v440, 0.35355338
      %v444 = vsel %vm299, %v443, -3.4028235e+38
      %v445 = vsel %vm325, %v444, -inf
      %446 = vmax.xlane.f32.xlu0 %v445
      %v447 = vpop.xlane.xlu0 %446
      %v448 = vsub.f32 %v444, %v447
      %v449 = vmul.f32 %v448, 1.442695
      %v450 = vpow.pop %v449
      %v451 = vsel %vm325, %v450, 0.0
      %452 = vadd.xlane.f32.xlu0 %v451
      %v453 = vpop.xlane.xlu0 %452
      %v454 = vrcp.pop %v453
      %v455 = vmul.f32 %v450, %v454
      %v456 = vpack.c.bf16 %v455, %v455
      %457 = vrot.lane.b32.xlu0 %v302, 112
      %v458 = vpop.permute.xlu0 %457
      %v460 = vsel %vm338, %v456, 0
      %v463 = vsel %vm342, %v458, 0
      %465 = vmatpush.bf16.msra.mxu0 0
      %466 = vmatpush.bf16.msra.mxu0 0
      %467 = vmatpush.bf16.msra.mxu0 0
      %468 = vmatpush.bf16.msra.mxu0 0
      %469 = vmatpush.bf16.msra.mxu0 0
      %470 = vmatpush.bf16.msra.mxu0 0
      %471 = vmatpush.bf16.msra.mxu0 0
      %472 = vmatpush.bf16.msra.mxu0 %v463
      %473 = vmatmul.bf16.gmra.mxu0 %v460
      %v474 = vpop.f32.mrf.mxu0
      %v475 = vadd.f32 0.0, %v474
      %v476 = vpop.f32.mrf.mxu0
      %477 = vdwg.mxu0
      %478 = vrot.lane.b32.xlu0 %v300, 104
      %v479 = vpop.permute.xlu0 %478
      %480 = vrot.lane.b32.xlu0 %v301, 104
      %v481 = vpop.permute.xlu0 %480
      %v483 = vsel %vm303, %v479, 0
      %v486 = vsel %vm303, %v481, 0
      %488 = vmatpush.bf16.xpose.msra.mxu0 0
      %489 = vmatpush.bf16.xpose.msra.mxu0 0
      %490 = vmatpush.bf16.xpose.msra.mxu0 0
      %491 = vmatpush.bf16.xpose.msra.mxu0 0
      %492 = vmatpush.bf16.xpose.msra.mxu0 0
      %493 = vmatpush.bf16.xpose.msra.mxu0 0
      %494 = vmatpush.bf16.xpose.msra.mxu0 0
      %495 = vmatpush.bf16.xpose.msra.mxu0 %v486
      %496 = vmatmul.bf16.gmra.mxu0 %v483
      %v497 = vpop.f32.mrf.mxu0
      %v498 = vadd.f32 0.0, %v497
      %v499 = vpop.f32.mrf.mxu0
      %500 = vdwg.mxu0
      %v501 = vmul.f32 %v498, 0.35355338
      %v502 = vsel %vm299, %v501, -3.4028235e+38
      %v503 = vsel %vm325, %v502, -inf
      %504 = vmax.xlane.f32.xlu0 %v503
      %v505 = vpop.xlane.xlu0 %504
      %v506 = vsub.f32 %v502, %v505
      %v507 = vmul.f32 %v506, 1.442695
      %v508 = vpow.pop %v507
      %v509 = vsel %vm325, %v508, 0.0
      %510 = vadd.xlane.f32.xlu0 %v509
      %v511 = vpop.xlane.xlu0 %510
      %v512 = vrcp.pop %v511
      %v513 = vmul.f32 %v508, %v512
      %v514 = vpack.c.bf16 %v513, %v513
      %515 = vrot.lane.b32.xlu0 %v302, 104
      %v516 = vpop.permute.xlu0 %515
      %v518 = vsel %vm338, %v514, 0
      %v521 = vsel %vm342, %v516, 0
      %523 = vmatpush.bf16.msra.mxu0 0
      %524 = vmatpush.bf16.msra.mxu0 0
      %525 = vmatpush.bf16.msra.mxu0 0
      %526 = vmatpush.bf16.msra.mxu0 0
      %527 = vmatpush.bf16.msra.mxu0 0
      %528 = vmatpush.bf16.msra.mxu0 0
      %529 = vmatpush.bf16.msra.mxu0 0
      %530 = vmatpush.bf16.msra.mxu0 %v521
      %531 = vmatmul.bf16.gmra.mxu0 %v518
      %v532 = vpop.f32.mrf.mxu0
      %v533 = vadd.f32 0.0, %v532
      %v534 = vpop.f32.mrf.mxu0
      %535 = vdwg.mxu0
      %537 = vrot.lane.b32.xlu0 %v417, 8
      %v538 = vpop.permute.xlu0 %537
      %541 = vrot.lane.b32.xlu0 %v475, 16
      %v542 = vpop.permute.xlu0 %541
      %545 = vrot.lane.b32.xlu0 %v533, 24
      %v546 = vpop.permute.xlu0 %545
      %v548 = vsel %vm303, %v356, %v538
      %vm549 = vcmask 130048
      %v550 = vsel %vm549, %v548, %v542
      %vm551 = vcmask 195584
      %v552 = vsel %vm551, %v550, %v546
      %vm553 = vcmask 257024
      %554 = vst.msk [vmem:[%s291] sm:$0xf] %vm553, %v552
      %p555 = scmp.lt.s32.totalorder %s19, 1
      %s556 = scalar_select %p555, %s19, 1
      %p557 = scmp.lt.s32.totalorder %s20, 0
      %s558 = scalar_select %p557, %s20, 0
      %s559 = sadd.s32 %s558, %s556
      %s560 = smul.addr %s559, 4
      %s561 = scalar_lea.vmem %s4, %s560
      // Predicated region
      $region37: #{memformer_forward.47} parent=35 // pred_check
        %p562 = pneg %p155
      $region38: #{memformer_forward.47} parent=35 // pred_check_branch
        %564 = sbr.rel (%p562) target = $region40
      $region39: #{memformer_forward.47} parent=35 // pred_region
        _
      $region40: #{memformer_forward.47} parent=35 // pred_fallthru
        _
    $region36: #{memformer_forward.47} parent=5 // pred_fallthru
      _
    %p565 = scmp.le.s32.totalorder 2, %s10
    // Predicated region
    $region41: #{memformer_forward.47} parent=5 // pred_check
      %p566 = pneg %p565
    $region42: #{memformer_forward.47} parent=5 // pred_check_branch
      %568 = sbr.rel (%p566) target = $region44
    $region43: #{memformer_forward.47} parent=5 // pred_region
      %s569 = ssub.s32 %s10, 2
      // Predicated region
      $region45: #{memformer_forward.47} parent=43 // pred_check
        %p570 = pneg %p161
      $region46: #{memformer_forward.47} parent=43 // pred_check_branch
        %572 = sbr.rel (%p570) target = $region48
      $region47: #{memformer_forward.47} parent=43 // pred_region
        %p573 = scmp.lt.s32.totalorder %s21, 1
        %s574 = scalar_select %p573, %s21, 1
        %p575 = scmp.lt.s32.totalorder %s22, 0
        %s576 = scalar_select %p575, %s22, 0
        %s577 = sadd.s32 %s576, %s574
        %s578 = smul.addr %s577, 4
        %s579 = scalar_lea.vmem %s4, %s578
      $region48: #{memformer_forward.47} parent=43 // pred_fallthru
        _
    $region44: #{memformer_forward.47} parent=5 // pred_fallthru
      _
  $region6: #{memformer_forward.47} parent=0 // loop_footer
    %s14 = sadd.s32 1, %s10
  $region7: #{memformer_forward.47} parent=0 // loop_footer_branch
    %9 = sbr.rel target = $region3
  $region8: #{memformer_forward.47} parent=0 // loop_exit
    _

// kernel: memformer_forward.51
$region0: #{memformer_forward.51}
  #allocation0 [shape = 'u32[]', space=smem, size = 0x4, offset = 0x4, fixed_abs, tag = 'smem constant byte address 0x4 - core index']
  #allocation1 [shape = 'u32[72,128]{1,0:T(1,128)}', space=vmem, size = 0x9000, scoped, tag = 'internal scratch']
  #allocation2 [shape = 'f32[8,32]{1,0:T(8,128)}', space=vmem, size = 0x1000, scoped, tag = 'scratch operand']
  %s0 = inlined_call_operand.vmem [shape: f32[8,128], index: 0, kind: input, shape index: {}]
  %s1 = inlined_call_operand.vmem [shape: bf16[128,32], index: 1, kind: input, shape index: {}]
  %s2 = inlined_call_operand.vmem [shape: f32[1,32], index: 2, kind: input, shape index: {}]
  %s3 = inlined_call_operand.vmem [shape: f32[8,32], index: 3, kind: output, shape index: {}]
  %s4 = sld [smem:[#allocation0]]
  $region30: #{memformer_forward.51} parent=0
    _
  %s6 = ssub.s32 1, %s4
  %s7 = scalar_select 0, %s6, %s4
  // Predicated region
  $region2: #{memformer_forward.51} parent=0 // pred_check
    _
  $region3: #{memformer_forward.51} parent=0 // pred_check_branch
    %9 = sbr.rel (0) target = $region5
  $region4: #{memformer_forward.51} parent=0 // pred_region
    _
  $region5: #{memformer_forward.51} parent=0 // pred_fallthru
    _
  // Predicated region
  $region6: #{memformer_forward.51} parent=0 // pred_check
    _
  $region7: #{memformer_forward.51} parent=0 // pred_check_branch
    %11 = sbr.rel (0) target = $region9
  $region8: #{memformer_forward.51} parent=0 // pred_region
    _
  $region9: #{memformer_forward.51} parent=0 // pred_fallthru
    _
  // Predicated region
  $region10: #{memformer_forward.51} parent=0 // pred_check
    _
  $region11: #{memformer_forward.51} parent=0 // pred_check_branch
    %13 = sbr.rel (0) target = $region13
  $region12: #{memformer_forward.51} parent=0 // pred_region
    _
  $region13: #{memformer_forward.51} parent=0 // pred_fallthru
    _
  %p14 = scmp.eq.s32.totalorder 0, 0
  // Predicated region
  $region14: #{memformer_forward.51} parent=0 // pred_check
    %p15 = pneg %p14
  $region15: #{memformer_forward.51} parent=0 // pred_check_branch
    %17 = sbr.rel (%p15) target = $region17
  $region16: #{memformer_forward.51} parent=0 // pred_region
    %vm18 = vcmask 261120
    %19 = vst.msk [vmem:[#allocation2] sm:$0xff] %vm18, 0.0
  $region17: #{memformer_forward.51} parent=0 // pred_fallthru
    _
  %v20 = vld [vmem:[#allocation2] sm:$0xff]
  %v21 = vld [vmem:[%s0] sm:$0xff]
  %v22 = vpack.c.bf16 %v21, %v21
  %v23 = vld [vmem:[%s1] sm:$0xf]
  %v24 = vld [vmem:[%s1 + $0x4] sm:$0xf]
  %v25 = vld [vmem:[%s1 + $0x8] sm:$0xf]
  %v26 = vld [vmem:[%s1 + $0xc] sm:$0xf]
  %v27 = vld [vmem:[%s1 + $0x10] sm:$0xf]
  %v28 = vld [vmem:[%s1 + $0x14] sm:$0xf]
  %v29 = vld [vmem:[%s1 + $0x18] sm:$0xf]
  %v30 = vld [vmem:[%s1 + $0x1c] sm:$0xf]
  %v31 = vld [vmem:[%s1 + $0x20] sm:$0xf]
  %v32 = vld [vmem:[%s1 + $0x24] sm:$0xf]
  %v33 = vld [vmem:[%s1 + $0x28] sm:$0xf]
  %v34 = vld [vmem:[%s1 + $0x2c] sm:$0xf]
  %v35 = vld [vmem:[%s1 + $0x30] sm:$0xf]
  %v36 = vld [vmem:[%s1 + $0x34] sm:$0xf]
  %v37 = vld [vmem:[%s1 + $0x38] sm:$0xf]
  %v38 = vld [vmem:[%s1 + $0x3c] sm:$0xf]
  %v55 = vunpack.c.l.b16 %v23
  %v56 = vunpack.c.l.b16 %v24
  %v57 = vunpack.c.l.b16 %v25
  %v58 = vunpack.c.l.b16 %v26
  %v59 = vunpack.c.l.b16 %v27
  %v60 = vunpack.c.l.b16 %v28
  %v61 = vunpack.c.l.b16 %v29
  %v62 = vunpack.c.l.b16 %v30
  %v63 = vunpack.c.l.b16 %v31
  %v64 = vunpack.c.l.b16 %v32
  %v65 = vunpack.c.l.b16 %v33
  %v66 = vunpack.c.l.b16 %v34
  %v67 = vunpack.c.l.b16 %v35
  %v68 = vunpack.c.l.b16 %v36
  %v69 = vunpack.c.l.b16 %v37
  %v70 = vunpack.c.l.b16 %v38
  %v71 = vpack.c.b16 %v56, %v55
  %v72 = vpack.c.b16 %v58, %v57
  %v73 = vpack.c.b16 %v60, %v59
  %v74 = vpack.c.b16 %v62, %v61
  %v75 = vpack.c.b16 %v64, %v63
  %v76 = vpack.c.b16 %v66, %v65
  %v77 = vpack.c.b16 %v68, %v67
  %v78 = vpack.c.b16 %v70, %v69
  %87 = vmatpush.bf16.msra.mxu0 %v78
  %88 = vmatpush.bf16.msra.mxu0 %v77
  %89 = vmatpush.bf16.msra.mxu0 %v76
  %90 = vmatpush.bf16.msra.mxu0 %v75
  %91 = vmatpush.bf16.msra.mxu0 %v74
  %92 = vmatpush.bf16.msra.mxu0 %v73
  %93 = vmatpush.bf16.msra.mxu0 %v72
  %94 = vmatpush.bf16.msra.mxu0 %v71
  %95 = vmatmul.bf16.gmra.mxu0 %v22
  %v96 = vpop.f32.mrf.mxu0
  %v97 = vadd.f32 0.0, %v96
  %v98 = vpop.f32.mrf.mxu0
  %99 = vdwg.mxu0
  %v100 = vadd.f32 %v20, %v97
  %vm101 = vcmask 261120
  %102 = vst.msk [vmem:[#allocation2] sm:$0xff] %vm101, %v100
  // Predicated region
  $region18: #{memformer_forward.51} parent=0 // pred_check
    %p103 = pneg %p14
  $region19: #{memformer_forward.51} parent=0 // pred_check_branch
    %105 = sbr.rel (%p103) target = $region21
  $region20: #{memformer_forward.51} parent=0 // pred_region
    %v106 = vld [vmem:[#allocation2] sm:$0xff]
    %v107 = vld [vmem:[%s2] sm:$0x1]
    %v109 = vperm.slane %v107, 0
    %v111 = vadd.f32 %v106, %v109
    %112 = vst.msk [vmem:[%s3] sm:$0xff] %vm101, %v111
  $region21: #{memformer_forward.51} parent=0 // pred_fallthru
    _
  // Predicated region
  $region22: #{memformer_forward.51} parent=0 // pred_check
    _
  $region23: #{memformer_forward.51} parent=0 // pred_check_branch
    %114 = sbr.rel (0) target = $region25
  $region24: #{memformer_forward.51} parent=0 // pred_region
    _
  $region25: #{memformer_forward.51} parent=0 // pred_fallthru
    _
  // Predicated region
  $region26: #{memformer_forward.51} parent=0 // pred_check
    _
  $region27: #{memformer_forward.51} parent=0 // pred_check_branch
    %116 = sbr.rel (0) target = $region29
  $region28: #{memformer_forward.51} parent=0 // pred_region
    _
  $region29: #{memformer_forward.51} parent=0 // pred_fallthru
    _

// kernel: memformer_forward.50
$region0: #{memformer_forward.50}
  #allocation0 [shape = 'u32[]', space=smem, size = 0x4, offset = 0x4, fixed_abs, tag = 'smem constant byte address 0x4 - core index']
  #allocation1 [shape = 'u32[72,128]{1,0:T(1,128)}', space=vmem, size = 0x9000, scoped, tag = 'internal scratch']
  %s0 = inlined_call_operand.vmem [shape: f32[8,32], index: 0, kind: input, shape index: {}]
  %s1 = inlined_call_operand.vmem [shape: f32[1,32], index: 1, kind: input, shape index: {}]
  %s2 = inlined_call_operand.vmem [shape: f32[1,32], index: 2, kind: input, shape index: {}]
  %s3 = inlined_call_operand.vmem [shape: bf16[32,128], index: 3, kind: input, shape index: {}]
  %s4 = inlined_call_operand.vmem [shape: f32[1,128], index: 4, kind: input, shape index: {}]
  %s5 = inlined_call_operand.vmem [shape: f32[8,128], index: 5, kind: output, shape index: {}]
  %s6 = sld [smem:[#allocation0]]
  $region30: #{memformer_forward.50} parent=0
    _
  %s8 = ssub.s32 1, %s6
  %s9 = scalar_select 0, %s8, %s6
  // Predicated region
  $region2: #{memformer_forward.50} parent=0 // pred_check
    _
  $region3: #{memformer_forward.50} parent=0 // pred_check_branch
    %11 = sbr.rel (0) target = $region5
  $region4: #{memformer_forward.50} parent=0 // pred_region
    _
  $region5: #{memformer_forward.50} parent=0 // pred_fallthru
    _
  // Predicated region
  $region6: #{memformer_forward.50} parent=0 // pred_check
    _
  $region7: #{memformer_forward.50} parent=0 // pred_check_branch
    %13 = sbr.rel (0) target = $region9
  $region8: #{memformer_forward.50} parent=0 // pred_region
    _
  $region9: #{memformer_forward.50} parent=0 // pred_fallthru
    _
  // Predicated region
  $region10: #{memformer_forward.50} parent=0 // pred_check
    _
  $region11: #{memformer_forward.50} parent=0 // pred_check_branch
    %15 = sbr.rel (0) target = $region13
  $region12: #{memformer_forward.50} parent=0 // pred_region
    _
  $region13: #{memformer_forward.50} parent=0 // pred_fallthru
    _
  // Predicated region
  $region14: #{memformer_forward.50} parent=0 // pred_check
    _
  $region15: #{memformer_forward.50} parent=0 // pred_check_branch
    %17 = sbr.rel (0) target = $region17
  $region16: #{memformer_forward.50} parent=0 // pred_region
    _
  $region17: #{memformer_forward.50} parent=0 // pred_fallthru
    _
  // Predicated region
  $region18: #{memformer_forward.50} parent=0 // pred_check
    _
  $region19: #{memformer_forward.50} parent=0 // pred_check_branch
    %19 = sbr.rel (0) target = $region21
  $region20: #{memformer_forward.50} parent=0 // pred_region
    _
  $region21: #{memformer_forward.50} parent=0 // pred_fallthru
    _
  %v21 = vld [vmem:[%s0] sm:$0xff]
  %vm22 = vcmask 261120
  %v23 = vsel %vm22, %v21, 0.0
  %24 = vadd.xlane.f32.xlu0 %v23
  %v25 = vpop.xlane.xlu0 %24
  %v26 = vrcp.pop 32.0
  %v27 = vmul.f32 32.0, %v26
  %v28 = vsub.f32 1.0, %v27
  %v29 = vmul.f32 %v26, %v28
  %v30 = vadd.f32 %v26, %v29
  %vm31 = vweird.f32 %v26
  %v32 = vsel %vm31, %v26, %v30
  %v33 = vmul.f32 %v25, %v32
  %v34 = vsub.f32 %v21, %v33
  %v35 = vmul.f32 %v34, %v34
  %v36 = vsel %vm22, %v35, 0.0
  %37 = vadd.xlane.f32.xlu0 %v36
  %v38 = vpop.xlane.xlu0 %37
  %v39 = vmul.f32 %v38, %v32
  %v40 = vadd.f32 %v39, 1e-05
  %v41 = vrsqrt.pop %v40
  %v42 = vmul.f32 %v41, %v40
  %v43 = vmul.f32 %v42, %v41
  %v44 = vmul.f32 0.5, %v43
  %v45 = vsub.f32 1.5, %v44
  %v46 = vmul.f32 %v41, %v45
  %vm47 = vweird.f32 %v40
  %vm48 = vweird.f32 %v41
  %vm49 = vmor %vm47, %vm48
  %v50 = vsel %vm49, %v41, %v46
  %v51 = vmul.f32 %v34, %v50
  %v52 = vld [vmem:[%s1] sm:$0x1]
  %v54 = vperm.slane %v52, 0
  %v56 = vmul.f32 %v51, %v54
  %v57 = vld [vmem:[%s2] sm:$0x1]
  %v59 = vperm.slane %v57, 0
  %v61 = vadd.f32 %v56, %v59
  %v62 = vpack.c.bf16 %v61, %v61
  %v63 = vld [vmem:[%s3] sm:$0xf]
  %v64 = vld [vmem:[%s3 + $0x4] sm:$0xf]
  %v65 = vld [vmem:[%s3 + $0x8] sm:$0xf]
  %v66 = vld [vmem:[%s3 + $0xc] sm:$0xf]
  %v67 = vld [vmem:[%s4] sm:$0x1]
  %v69 = vperm.slane %v67, 0
  %v75 = vunpack.c.l.b16 %v63
  %v76 = vunpack.c.l.b16 %v64
  %v77 = vunpack.c.l.b16 %v65
  %v78 = vunpack.c.l.b16 %v66
  %v79 = vpack.c.b16 %v76, %v75
  %v80 = vpack.c.b16 %v78, %v77
  %v84 = vsel %vm22, %v62, 0
  %86 = vmatpush.bf16.msra.mxu0 0
  %87 = vmatpush.bf16.msra.mxu0 0
  %88 = vmatpush.bf16.msra.mxu0 0
  %89 = vmatpush.bf16.msra.mxu0 0
  %90 = vmatpush.bf16.msra.mxu0 0
  %91 = vmatpush.bf16.msra.mxu0 0
  %92 = vmatpush.bf16.msra.mxu0 %v80
  %93 = vmatpush.bf16.msra.mxu0 %v79
  %94 = vmatmul.bf16.gmra.mxu0 %v84
  %v95 = vpop.f32.mrf.mxu0
  %v96 = vadd.f32 %v69, %v95
  %v97 = vpop.f32.mrf.mxu0
  %98 = vdwg.mxu0
  %v99 = vmul.f32 %v96, 0.5
  %v100 = vmul.f32 %v96, 0.70710677
  %v101 = vmul.f32 %v100, %v100
  %v102 = vmin.f32 16.0, %v101
  %v103 = vmul.f32 %v102, 2.1237322e-06
  %v104 = vadd.f32 %v103, 0.00028619796
  %v105 = vmul.f32 %v102, %v104
  %v106 = vadd.f32 %v105, 0.0036580483
  %v107 = vmul.f32 %v102, %v106
  %v108 = vadd.f32 %v107, 0.05243302
  %v109 = vmul.f32 %v102, %v108
  %v110 = vadd.f32 %v109, 0.18741608
  %v111 = vmul.f32 %v102, %v110
  %v112 = vadd.f32 %v111, 1.1283791
  %v113 = vmul.f32 %v100, %v112
  %v114 = vmul.f32 %v102, 3.8918573e-05
  %v115 = vadd.f32 %v114, 0.001143296
  %v116 = vmul.f32 %v102, %v115
  %v117 = vadd.f32 %v116, 0.014752088
  %v118 = vmul.f32 %v102, %v117
  %v119 = vadd.f32 %v118, 0.112945676
  %v120 = vmul.f32 %v102, %v119
  %v121 = vadd.f32 %v120, 0.4994258
  %v122 = vmul.f32 %v102, %v121
  %v123 = vadd.f32 %v122, 1.0
  %v124 = vrcp.pop %v123
  %v125 = vmul.f32 %v123, %v124
  %v126 = vsub.f32 1.0, %v125
  %v127 = vmul.f32 %v124, %v126
  %v128 = vadd.f32 %v124, %v127
  %vm129 = vweird.f32 %v123
  %vm130 = vweird.f32 %v124
  %vm131 = vmor %vm129, %vm130
  %v132 = vsel %vm131, %v124, %v128
  %v133 = vand.u32 2147483647, %v123
  %vm134 = vcmp.eq.f32.partialorder %v133, 8.507059e+37
  %v135 = vand.u32 %v123, 2147483648
  %v136 = vor.u32 1.1754944e-38, %v135
  %v137 = vsel %vm134, %v136, %v132
  %v138 = vmul.f32 %v113, %v137
  %v139 = vmin.f32 %v138, 1.0
  %v140 = vmax.f32 %v139, -1.0
  %v141 = vadd.f32 %v140, 1.0
  %v142 = vmul.f32 %v99, %v141
  %143 = vst [vmem:[%s5] sm:$0xff] %v142
  // Predicated region
  $region22: #{memformer_forward.50} parent=0 // pred_check
    _
  $region23: #{memformer_forward.50} parent=0 // pred_check_branch
    %145 = sbr.rel (0) target = $region25
  $region24: #{memformer_forward.50} parent=0 // pred_region
    _
  $region25: #{memformer_forward.50} parent=0 // pred_fallthru
    _
  // Predicated region
  $region26: #{memformer_forward.50} parent=0 // pred_check
    _
  $region27: #{memformer_forward.50} parent=0 // pred_check_branch
    %147 = sbr.rel (0) target = $region29
  $region28: #{memformer_forward.50} parent=0 // pred_region
    _
  $region29: #{memformer_forward.50} parent=0 // pred_fallthru
    _

</llo_original>
